<compile_context>
chip_gen: v7x
topology: tpu7x:2x2x1
jax: 0.10.0
libtpu: 0.0.40
codegen_flags: <defaults>
</compile_context>

<pallas_src>
import jax
import jax.numpy as jnp
import numpy as np
from jax.experimental import pallas as pl
from jax.experimental.pallas import tpu as pltpu

DIM1 = 2       # mslocal dim1 (input channels)
DIM2 = 3       # mslocal dim2 (output channels)
POOL_W = 20    # AdaptiveMaxPool2d target width
EPS = 1e-5     # BatchNorm eps (PyTorch default)
PAD = 3        # max dilation / padding across the three branches


def _choose_fold(H, W, BN, C1, dsize, per_buf, max_row=4096):
    """Pick r | H merging r H-rows into one lane-dense row of r*W.

    Prefers minimal lane padding (r*W close to a multiple of 128), then longer
    rows; keeps an 8-row streaming block within the per-buffer VMEM budget.
    """
    best_r, best_key = 1, None
    for r in range(1, H + 1):
        if H % r:
            continue
        row = r * W
        lanes = -(-row // 128) * 128
        if best_key is not None and (row > max_row or
                                     BN * C1 * 8 * lanes * dsize > per_buf):
            break                                   # rows only grow with r
        waste = float(lanes - row) / float(lanes)
        key = (round(waste, 3), -row)               # low waste, then long rows
        if best_key is None or key < best_key:
            best_r, best_key = r, key
    return best_r


def _make_kernel(H2, Hc, W2, W, BN, r, k, stream_dtype):
    """Kernel factory for static shapes.

    Grid: (num_batch_blocks, num_h_chunks); h is the inner ("arbitrary")
    reduction axis.  Per step we stream one (BN, C1, Hc, W2) block (W2 = r*W,
    lane-dense) and fold it into an A-sublane running max with pure
    elementwise maxes; the last h step collapses sublanes / segments / width
    bins and runs the conv/BN/ReLU epilogue, storing the (BN, C2, 20) tile.
    """
    C1, C2 = DIM1, DIM2
    mask_h = (H2 % Hc) != 0                # partial last H chunk?
    A = 8 if Hc % 8 == 0 else Hc           # accumulator sublane depth
    n_groups = Hc // A
    assert (not mask_h) or A == 8          # chunked Hc is always a multiple of 8

    def kernel(x_ref, bw_ref, bscale_ref, bshift_ref, fw_ref, fshift_ref,
               out_ref, ymax_ref):
        h = pl.program_id(1)
        nh = pl.num_programs(1)

        xb = x_ref[...]                    # (BN, C1, Hc, W2), streaming dtype

        def fold(blk):                     # -> (BN, C1, A, W2); VALU only
            acc = blk[:, :, 0:A, :]
            for g in range(1, n_groups):
                acc = jnp.maximum(acc, blk[:, :, g * A:(g + 1) * A, :])
            return acc

        if not mask_h:
            folded = fold(xb)

            @pl.when(h == 0)
            def _first():                  # direct write (no -inf init + max)
                ymax_ref[...] = folded

            @pl.when(h > 0)
            def _steady():
                ymax_ref[...] = jnp.maximum(ymax_ref[...], folded)
        else:
            # H2 % Hc != 0  =>  nh >= 2; -inf masking only on the last chunk,
            # steady-state steps stay mask-free.
            @pl.when(h == 0)
            def _first():
                ymax_ref[...] = fold(xb)

            @pl.when(jnp.logical_and(h > 0, h < nh - 1))
            def _steady():
                ymax_ref[...] = jnp.maximum(ymax_ref[...], fold(xb))

            @pl.when(h == nh - 1)
            def _tail():
                row = jax.lax.broadcasted_iota(jnp.int32, xb.shape, 2)
                neg = jnp.array(-jnp.inf, dtype=xb.dtype)
                xv = jnp.where(h * Hc + row < H2, xb, neg)
                ymax_ref[...] = jnp.maximum(ymax_ref[...], fold(xv))

        # ---- epilogue: once per batch block, at the last H chunk ----
        @pl.when(h == nh - 1)
        def _finalize():
            m = ymax_ref[...]                              # (BN, C1, A, W2)
            yrow = jnp.max(m, axis=2)                      # collapse sublanes once
            # un-fold the r merged H rows (contiguous lane slices, elementwise max)
            y_seg = yrow[:, :, 0:W]
            for s in range(1, r):
                y_seg = jnp.maximum(y_seg, yrow[:, :, s * W:(s + 1) * W])
            # contiguous k-wide width bins of AdaptiveMaxPool2d((1, 20))
            if k == 1:
                y = y_seg
            else:
                y = jnp.concatenate(
                    [jnp.max(y_seg[:, :, j * k:(j + 1) * k], axis=-1,
                             keepdims=True) for j in range(POOL_W)],
                    axis=-1)                               # (BN, C1, POOL_W)
            y = y.astype(jnp.float32)

            # 7 distinct shifted windows (offsets -3..3), hoisted out of the
            # branch/channel/tap loops.
            zeros = jnp.zeros((BN, C1, PAD), jnp.float32)
            y_pad = jnp.concatenate([zeros, y, zeros], axis=-1)
            sh = [y_pad[:, :, s:s + POOL_W] for s in range(2 * PAD + 1)]

            # three dilated (1,3) conv branches + residual, folded BN, ReLU
            branch = []                                    # 6 x (BN, POOL_W)
            for b in range(3):
                d = b + 1                                  # dilation == padding
                for co in range(C1):
                    acc = y[:, co, :]                      # residual (bias folded into shift)
                    for ci in range(C1):
                        for t in range(3):
                            w = bw_ref[b, (co * C1 + ci) * 3 + t]
                            acc = acc + w * sh[PAD + (t - 1) * d][:, ci, :]
                    z = acc * bscale_ref[b, co] + bshift_ref[b, co]
                    branch.append(jnp.maximum(z, 0.0))

            # 1x1 full_conv (BN scale pre-folded into the weights) + shift + ReLU
            rows = []
            for co in range(C2):
                acc = fw_ref[co, 0] * branch[0]
                for j in range(1, 3 * C1):
                    acc = acc + fw_ref[co, j] * branch[j]
                rows.append(jnp.maximum(acc + fshift_ref[co], 0.0))

            # single full-tile store (output is tiny vs. streamed x)
            out_ref[...] = jnp.stack(rows, axis=1).astype(out_ref.dtype)

    return kernel, A


def mslocal_forward(x, params, *, n_block=None, h_block=None, fold=None):
    """x: (N, DIM1, H, W) float, W % 20 == 0.  Returns (N, DIM2, 1, 20).

    `fold`: optional explicit H-fold factor (must divide H); `h_block`: chunk
    size (in folded-H rows) of the streaming/reduction axis.
    """
    N, C1, H, Win = x.shape
    assert C1 == DIM1, f"expected {DIM1} input channels, got {C1}"
    assert Win % POOL_W == 0, "AdaptiveMaxPool width bins only exact if W % 20 == 0"
    assert H >= 1
    k = Win // POOL_W

    # --- parameter glue: fold eval-mode BN and the conv bias into scale/shift ---
    bscale = params["b_gamma"] / jnp.sqrt(params["b_var"] + EPS)           # (3, C1)
    bshift = (params["b_beta"] - params["b_mean"] * bscale
              + bscale * params["b_b"])                                    # conv bias folded
    fscale = params["f_gamma"] / jnp.sqrt(params["f_var"] + EPS)           # (C2,)
    fshift = params["f_beta"] - params["f_mean"] * fscale
    fw = params["f_w"] * fscale[:, None]                                   # BN scale folded
    bw = params["b_w"].reshape(3, DIM1 * DIM1 * 3)

    # --- streaming dtype: max is exact in bf16, cast to f32 only in epilogue ---
    if x.dtype == jnp.float32 or x.dtype == jnp.bfloat16:
        stream_dtype = x.dtype
    else:
        stream_dtype = jnp.float32
        x = x.astype(stream_dtype)
    dsize = jnp.dtype(stream_dtype).itemsize

    # --- batch block: keep >= 2 parallel batch blocks whenever N >= 2 so both
    # v7x TensorCores get work (no-op on single-TC v5e/v6e) ---
    if n_block is None:
        BN = max(1, min(8, -(-N // 2)))
    else:
        BN = max(1, min(N, int(n_block)))

    # --- generation-aware VMEM budget (128 MiB v5e/v6e, 64 MiB per TC on v7x) ---
    vmem_cap = 128 << 20
    try:
        vmem_cap = int(getattr(pltpu.get_tpu_info(), "vmem_capacity_bytes", vmem_cap))
    except Exception:
        pass
    per_buf = min(8 << 20, vmem_cap // 8)                  # per double-buffered x block
    vmem_limit = int(min(vmem_cap // 2, 2 * per_buf + (16 << 20)))

    # --- lane-dense fold: merge r adjacent H rows into one row of r*W (free reshape) ---
    if fold is None:
        r = _choose_fold(H, Win, BN, DIM1, dsize, per_buf)
    else:
        r = int(fold) if (int(fold) >= 1 and H % int(fold) == 0) else 1
    H2, W2 = H // r, r * Win
    x2 = x.reshape(N, C1, H2, W2)                          # contiguous -> no HBM copy

    # --- H-chunk of the streaming/reduction axis (multiple of 8, or all of H2) ---
    lanes = -(-W2 // 128) * 128
    row_bytes = BN * C1 * lanes * dsize
    if h_block is None:
        hc = max(8, (per_buf // max(row_bytes, 1)) // 8 * 8)
    else:
        hc = max(8, (int(h_block) // 8) * 8)
    Hc = H2 if hc >= H2 else hc
    grid = (pl.cdiv(N, BN), pl.cdiv(H2, Hc))

    kernel, A = _make_kernel(H2, Hc, W2, Win, BN, r, k, stream_dtype)
    smem = pl.BlockSpec(memory_space=pltpu.MemorySpace.SMEM)

    cost = pl.CostEstimate(
        flops=int(N * C1 * H * Win) + int(N * 80 * POOL_W),
        transcendentals=0,
        bytes_accessed=int(x2.size * dsize + N * DIM2 * POOL_W * 4 + 1024),
    )

    # NOTE: if N % BN != 0 the trailing batch block computes on padded rows; any
    # garbage there only lands in dropped output rows (per-sample independent).
    out3 = pl.pallas_call(
        kernel,
        out_shape=jax.ShapeDtypeStruct((N, DIM2, POOL_W), jnp.float32),
        grid=grid,
        in_specs=[pl.BlockSpec((BN, DIM1, Hc, W2), lambda n, h: (n, 0, h, 0)),
                  smem, smem, smem, smem, smem],
        # output block is resident across the h (reduction) axis; written once
        # at the last h step for each batch block.
        out_specs=pl.BlockSpec((BN, DIM2, POOL_W), lambda n, h: (n, 0, 0)),
        scratch_shapes=[pltpu.VMEM((BN, DIM1, A, W2), stream_dtype)],
        compiler_params=pltpu.CompilerParams(
            dimension_semantics=("parallel", "arbitrary"),
            vmem_limit_bytes=vmem_limit),
        cost_estimate=cost,
    )(x2, bw, bscale, bshift, fw, fshift)

    return out3.reshape(N, DIM2, 1, POOL_W)                # NCHW output


def init_params(key):
    """Deterministic synthetic parameters matching the module's shapes."""
    ks = jax.random.split(key, 11)
    p = {}
    # local branches: Conv2d(DIM1, DIM1, (1,3), bias=True), one per dilation 1..3
    p["b_w"] = 0.3 * jax.random.normal(ks[0], (3, DIM1, DIM1, 3), jnp.float32)
    p["b_b"] = 0.1 * jax.random.normal(ks[1], (3, DIM1), jnp.float32)
    # per-branch BatchNorm2d(DIM1) (eval-mode stats)
    p["b_gamma"] = 1.0 + 0.1 * jax.random.normal(ks[2], (3, DIM1), jnp.float32)
    p["b_beta"] = 0.1 * jax.random.normal(ks[3], (3, DIM1), jnp.float32)
    p["b_mean"] = 0.1 * jax.random.normal(ks[4], (3, DIM1), jnp.float32)
    p["b_var"] = 0.5 + jax.random.uniform(ks[5], (3, DIM1), jnp.float32)
    # full_conv: Conv2d(3*DIM1, DIM2, 1, bias=False)
    p["f_w"] = 0.3 * jax.random.normal(ks[6], (DIM2, 3 * DIM1), jnp.float32)
    # final BatchNorm2d(DIM2)
    p["f_gamma"] = 1.0 + 0.1 * jax.random.normal(ks[7], (DIM2,), jnp.float32)
    p["f_beta"] = 0.1 * jax.random.normal(ks[8], (DIM2,), jnp.float32)
    p["f_mean"] = 0.1 * jax.random.normal(ks[9], (DIM2,), jnp.float32)
    p["f_var"] = 0.5 + jax.random.uniform(ks[10], (DIM2,), jnp.float32)
    return p


def reference_forward(x, params):
    """Pure-JAX reference mirroring the PyTorch eval-mode forward."""
    N, C1, H, Win = x.shape
    k = Win // POOL_W
    y = jnp.max(x.reshape(N, C1, H, POOL_W, k), axis=(2, 4))      # (N, C1, 20)

    def bn(v, gamma, beta, mean, var):
        return ((v - mean[None, :, None]) / jnp.sqrt(var[None, :, None] + EPS)
                * gamma[None, :, None] + beta[None, :, None])

    outs = []
    for b in range(3):
        d = b + 1
        yp = jnp.pad(y, ((0, 0), (0, 0), (d, d)))
        conv = jnp.zeros_like(y)
        for t in range(3):
            shifted = yp[:, :, t * d: t * d + POOL_W]
            conv = conv + jnp.einsum("oc,ncw->now", params["b_w"][b, :, :, t], shifted)
        conv = conv + params["b_b"][b][None, :, None] + y          # +bias, +residual
        z = bn(conv, params["b_gamma"][b], params["b_beta"][b],
               params["b_mean"][b], params["b_var"][b])
        outs.append(jnp.maximum(z, 0.0))
    z = jnp.concatenate(outs, axis=1)                              # (N, 6, 20)
    full = jnp.einsum("oc,ncw->now", params["f_w"], z)
    z = bn(full, params["f_gamma"], params["f_beta"], params["f_mean"], params["f_var"])
    return jnp.maximum(z, 0.0).reshape(N, DIM2, 1, POOL_W)
    # TODO(synk): train-mode Dropout2d / BN batch-stat updates are out of scope
    # (eval-mode forward only), matching the fused kernel.


if __name__ == "__main__":
    key = jax.random.PRNGKey(0)
    kx, kp = jax.random.split(key)

    # Small but non-trivial: W=40 exercises the fused width-bin pooling (k=2),
    # H=48 gives several fold/chunk choices.
    N, H, Win = 4, 48, 40
    x = jax.random.normal(kx, (N, DIM1, H, Win), jnp.float32)
    params = init_params(kp)
    ref = reference_forward(x, params)

    # 1) auto config: lane-dense fold (r*W multiple of 128), auto block sizes.
    out = jax.block_until_ready(mslocal_forward(x, params))
    assert out.shape == (N, DIM2, 1, POOL_W)
    np.testing.assert_allclose(np.asarray(out), np.asarray(ref), rtol=1e-4, atol=1e-4)

    # 2) stress config: multi-chunk H reduction with a masked partial tail and a
    #    partial trailing batch block (fold=4 -> H2=12, Hc=8, grid=(2,2)).
    out2 = jax.block_until_ready(
        mslocal_forward(x, params, n_block=3, h_block=8, fold=4))
    np.testing.assert_allclose(np.asarray(out2), np.asarray(ref), rtol=1e-4, atol=1e-4)

    # 3) single-chunk config whose chunk is not a multiple of 8 (A == Hc path).
    out3 = jax.block_until_ready(mslocal_forward(x, params, n_block=3, fold=4))
    np.testing.assert_allclose(np.asarray(out3), np.asarray(ref), rtol=1e-4, atol=1e-4)

    print("KERNEL_OK")
</pallas_src>

<mosaic_0001>
module attributes {stable_mosaic.version = 11 : i64} {
  func.func @kernel(%arg0: i32, %arg1: i32, %arg2: memref<2x2x1x1920xf32, #tpu.memory_space<vmem>>, %arg3: memref<3x12xf32, #tpu.memory_space<smem>>, %arg4: memref<3x2xf32, #tpu.memory_space<smem>>, %arg5: memref<3x2xf32, #tpu.memory_space<smem>>, %arg6: memref<3x6xf32, #tpu.memory_space<smem>>, %arg7: memref<3xf32, #tpu.memory_space<smem>>, %arg8: memref<2x3x20xf32, #tpu.memory_space<vmem>>, %arg9: memref<2x2x1x1920xf32, #tpu.memory_space<vmem>>) attributes {dimension_semantics = [#tpu.dimension_semantics<parallel>, #tpu.dimension_semantics<arbitrary>], iteration_bounds = array<i64: 2, 1>, scalar_prefetch = 0 : i64, scratch_operands = 1 : i64, tpu.core_type = #tpu.core_type<tc>, window_params = [{transform_indices = @transform_0, window_bounds = array<i64: 2, 2, 1, 1920>}, {transform_indices = @transform_1, window_bounds = array<i64: 3, 12>}, {transform_indices = @transform_2, window_bounds = array<i64: 3, 2>}, {transform_indices = @transform_3, window_bounds = array<i64: 3, 2>}, {transform_indices = @transform_4, window_bounds = array<i64: 3, 6>}, {transform_indices = @transform_5, window_bounds = array<i64: 3>}, {transform_indices = @transform_6, window_bounds = array<i64: 2, 3, 20>}]} {
    %c0 = arith.constant 0 : index
    %c0_0 = arith.constant 0 : index
    %c0_1 = arith.constant 0 : index
    %c0_2 = arith.constant 0 : index
    %0 = vector.load %arg2[%c0, %c0_0, %c0_1, %c0_2] : memref<2x2x1x1920xf32, #tpu.memory_space<vmem>>, vector<2x2x1x1920xf32>
    %c0_i32 = arith.constant 0 : i32
    %1 = arith.cmpi eq, %arg1, %c0_i32 : i32
    %2 = arith.extui %1 : i1 to i32
    %c0_i32_3 = arith.constant 0 : i32
    %3 = arith.cmpi ne, %2, %c0_i32_3 : i32
    scf.if %3 {
      %c0_8 = arith.constant 0 : index
      %c0_9 = arith.constant 0 : index
      %c0_10 = arith.constant 0 : index
      %c0_11 = arith.constant 0 : index
      %10 = vector.load %arg9[%c0_8, %c0_9, %c0_10, %c0_11] : memref<2x2x1x1920xf32, #tpu.memory_space<vmem>>, vector<2x2x1x1920xf32>
      tpu.vector_store %arg9[%c0_8, %c0_9, %c0_10, %c0_11], %0 {strides = array<i32>} : memref<2x2x1x1920xf32, #tpu.memory_space<vmem>>, vector<2x2x1x1920xf32>,
    } else {
    }
    %c0_i32_4 = arith.constant 0 : i32
    %4 = arith.cmpi sgt, %arg1, %c0_i32_4 : i32
    %5 = arith.extui %4 : i1 to i32
    %c0_i32_5 = arith.constant 0 : i32
    %6 = arith.cmpi ne, %5, %c0_i32_5 : i32
    scf.if %6 {
      %c0_8 = arith.constant 0 : index
      %c0_9 = arith.constant 0 : index
      %c0_10 = arith.constant 0 : index
      %c0_11 = arith.constant 0 : index
      %10 = vector.load %arg9[%c0_8, %c0_9, %c0_10, %c0_11] : memref<2x2x1x1920xf32, #tpu.memory_space<vmem>>, vector<2x2x1x1920xf32>
      %11 = arith.maximumf %10, %0 : vector<2x2x1x1920xf32>
      %c0_12 = arith.constant 0 : index
      %c0_13 = arith.constant 0 : index
      %c0_14 = arith.constant 0 : index
      %c0_15 = arith.constant 0 : index
      %12 = vector.load %arg9[%c0_12, %c0_13, %c0_14, %c0_15] : memref<2x2x1x1920xf32, #tpu.memory_space<vmem>>, vector<2x2x1x1920xf32>
      tpu.vector_store %arg9[%c0_12, %c0_13, %c0_14, %c0_15], %11 {strides = array<i32>} : memref<2x2x1x1920xf32, #tpu.memory_space<vmem>>, vector<2x2x1x1920xf32>,
    } else {
    }
    %c0_i32_6 = arith.constant 0 : i32
    %7 = arith.cmpi eq, %arg1, %c0_i32_6 : i32
    %8 = arith.extui %7 : i1 to i32
    %c0_i32_7 = arith.constant 0 : i32
    %9 = arith.cmpi ne, %8, %c0_i32_7 : i32
    scf.if %9 {
      %c0_8 = arith.constant 0 : index
      %c0_9 = arith.constant 0 : index
      %c0_10 = arith.constant 0 : index
      %c0_11 = arith.constant 0 : index
      %10 = vector.load %arg9[%c0_8, %c0_9, %c0_10, %c0_11] : memref<2x2x1x1920xf32, #tpu.memory_space<vmem>>, vector<2x2x1x1920xf32>
      %cst = arith.constant dense<0xFF800000> : vector<2x2x1920xf32>
      %11 = vector.multi_reduction <maximumf>, %10, %cst [2] : vector<2x2x1x1920xf32> to vector<2x2x1920xf32>
      %12 = vector.extract_strided_slice %11 {offsets = [0, 0, 0], sizes = [2, 2, 40], strides = [1, 1, 1]} : vector<2x2x1920xf32> to vector<2x2x40xf32>
      %13 = vector.extract_strided_slice %11 {offsets = [0, 0, 40], sizes = [2, 2, 40], strides = [1, 1, 1]} : vector<2x2x1920xf32> to vector<2x2x40xf32>
      %14 = arith.maximumf %12, %13 : vector<2x2x40xf32>
      %15 = vector.extract_strided_slice %11 {offsets = [0, 0, 80], sizes = [2, 2, 40], strides = [1, 1, 1]} : vector<2x2x1920xf32> to vector<2x2x40xf32>
      %16 = arith.maximumf %14, %15 : vector<2x2x40xf32>
      %17 = vector.extract_strided_slice %11 {offsets = [0, 0, 120], sizes = [2, 2, 40], strides = [1, 1, 1]} : vector<2x2x1920xf32> to vector<2x2x40xf32>
      %18 = arith.maximumf %16, %17 : vector<2x2x40xf32>
      %19 = vector.extract_strided_slice %11 {offsets = [0, 0, 160], sizes = [2, 2, 40], strides = [1, 1, 1]} : vector<2x2x1920xf32> to vector<2x2x40xf32>
      %20 = arith.maximumf %18, %19 : vector<2x2x40xf32>
      %21 = vector.extract_strided_slice %11 {offsets = [0, 0, 200], sizes = [2, 2, 40], strides = [1, 1, 1]} : vector<2x2x1920xf32> to vector<2x2x40xf32>
      %22 = arith.maximumf %20, %21 : vector<2x2x40xf32>
      %23 = vector.extract_strided_slice %11 {offsets = [0, 0, 240], sizes = [2, 2, 40], strides = [1, 1, 1]} : vector<2x2x1920xf32> to vector<2x2x40xf32>
      %24 = arith.maximumf %22, %23 : vector<2x2x40xf32>
      %25 = vector.extract_strided_slice %11 {offsets = [0, 0, 280], sizes = [2, 2, 40], strides = [1, 1, 1]} : vector<2x2x1920xf32> to vector<2x2x40xf32>
      %26 = arith.maximumf %24, %25 : vector<2x2x40xf32>
      %27 = vector.extract_strided_slice %11 {offsets = [0, 0, 320], sizes = [2, 2, 40], strides = [1, 1, 1]} : vector<2x2x1920xf32> to vector<2x2x40xf32>
      %28 = arith.maximumf %26, %27 : vector<2x2x40xf32>
      %29 = vector.extract_strided_slice %11 {offsets = [0, 0, 360], sizes = [2, 2, 40], strides = [1, 1, 1]} : vector<2x2x1920xf32> to vector<2x2x40xf32>
      %30 = arith.maximumf %28, %29 : vector<2x2x40xf32>
      %31 = vector.extract_strided_slice %11 {offsets = [0, 0, 400], sizes = [2, 2, 40], strides = [1, 1, 1]} : vector<2x2x1920xf32> to vector<2x2x40xf32>
      %32 = arith.maximumf %30, %31 : vector<2x2x40xf32>
      %33 = vector.extract_strided_slice %11 {offsets = [0, 0, 440], sizes = [2, 2, 40], strides = [1, 1, 1]} : vector<2x2x1920xf32> to vector<2x2x40xf32>
      %34 = arith.maximumf %32, %33 : vector<2x2x40xf32>
      %35 = vector.extract_strided_slice %11 {offsets = [0, 0, 480], sizes = [2, 2, 40], strides = [1, 1, 1]} : vector<2x2x1920xf32> to vector<2x2x40xf32>
      %36 = arith.maximumf %34, %35 : vector<2x2x40xf32>
      %37 = vector.extract_strided_slice %11 {offsets = [0, 0, 520], sizes = [2, 2, 40], strides = [1, 1, 1]} : vector<2x2x1920xf32> to vector<2x2x40xf32>
      %38 = arith.maximumf %36, %37 : vector<2x2x40xf32>
      %39 = vector.extract_strided_slice %11 {offsets = [0, 0, 560], sizes = [2, 2, 40], strides = [1, 1, 1]} : vector<2x2x1920xf32> to vector<2x2x40xf32>
      %40 = arith.maximumf %38, %39 : vector<2x2x40xf32>
      %41 = vector.extract_strided_slice %11 {offsets = [0, 0, 600], sizes = [2, 2, 40], strides = [1, 1, 1]} : vector<2x2x1920xf32> to vector<2x2x40xf32>
      %42 = arith.maximumf %40, %41 : vector<2x2x40xf32>
      %43 = vector.extract_strided_slice %11 {offsets = [0, 0, 640], sizes = [2, 2, 40], strides = [1, 1, 1]} : vector<2x2x1920xf32> to vector<2x2x40xf32>
      %44 = arith.maximumf %42, %43 : vector<2x2x40xf32>
      %45 = vector.extract_strided_slice %11 {offsets = [0, 0, 680], sizes = [2, 2, 40], strides = [1, 1, 1]} : vector<2x2x1920xf32> to vector<2x2x40xf32>
      %46 = arith.maximumf %44, %45 : vector<2x2x40xf32>
      %47 = vector.extract_strided_slice %11 {offsets = [0, 0, 720], sizes = [2, 2, 40], strides = [1, 1, 1]} : vector<2x2x1920xf32> to vector<2x2x40xf32>
      %48 = arith.maximumf %46, %47 : vector<2x2x40xf32>
      %49 = vector.extract_strided_slice %11 {offsets = [0, 0, 760], sizes = [2, 2, 40], strides = [1, 1, 1]} : vector<2x2x1920xf32> to vector<2x2x40xf32>
      %50 = arith.maximumf %48, %49 : vector<2x2x40xf32>
      %51 = vector.extract_strided_slice %11 {offsets = [0, 0, 800], sizes = [2, 2, 40], strides = [1, 1, 1]} : vector<2x2x1920xf32> to vector<2x2x40xf32>
      %52 = arith.maximumf %50, %51 : vector<2x2x40xf32>
      %53 = vector.extract_strided_slice %11 {offsets = [0, 0, 840], sizes = [2, 2, 40], strides = [1, 1, 1]} : vector<2x2x1920xf32> to vector<2x2x40xf32>
      %54 = arith.maximumf %52, %53 : vector<2x2x40xf32>
      %55 = vector.extract_strided_slice %11 {offsets = [0, 0, 880], sizes = [2, 2, 40], strides = [1, 1, 1]} : vector<2x2x1920xf32> to vector<2x2x40xf32>
      %56 = arith.maximumf %54, %55 : vector<2x2x40xf32>
      %57 = vector.extract_strided_slice %11 {offsets = [0, 0, 920], sizes = [2, 2, 40], strides = [1, 1, 1]} : vector<2x2x1920xf32> to vector<2x2x40xf32>
      %58 = arith.maximumf %56, %57 : vector<2x2x40xf32>
      %59 = vector.extract_strided_slice %11 {offsets = [0, 0, 960], sizes = [2, 2, 40], strides = [1, 1, 1]} : vector<2x2x1920xf32> to vector<2x2x40xf32>
      %60 = arith.maximumf %58, %59 : vector<2x2x40xf32>
      %61 = vector.extract_strided_slice %11 {offsets = [0, 0, 1000], sizes = [2, 2, 40], strides = [1, 1, 1]} : vector<2x2x1920xf32> to vector<2x2x40xf32>
      %62 = arith.maximumf %60, %61 : vector<2x2x40xf32>
      %63 = vector.extract_strided_slice %11 {offsets = [0, 0, 1040], sizes = [2, 2, 40], strides = [1, 1, 1]} : vector<2x2x1920xf32> to vector<2x2x40xf32>
      %64 = arith.maximumf %62, %63 : vector<2x2x40xf32>
      %65 = vector.extract_strided_slice %11 {offsets = [0, 0, 1080], sizes = [2, 2, 40], strides = [1, 1, 1]} : vector<2x2x1920xf32> to vector<2x2x40xf32>
      %66 = arith.maximumf %64, %65 : vector<2x2x40xf32>
      %67 = vector.extract_strided_slice %11 {offsets = [0, 0, 1120], sizes = [2, 2, 40], strides = [1, 1, 1]} : vector<2x2x1920xf32> to vector<2x2x40xf32>
      %68 = arith.maximumf %66, %67 : vector<2x2x40xf32>
      %69 = vector.extract_strided_slice %11 {offsets = [0, 0, 1160], sizes = [2, 2, 40], strides = [1, 1, 1]} : vector<2x2x1920xf32> to vector<2x2x40xf32>
      %70 = arith.maximumf %68, %69 : vector<2x2x40xf32>
      %71 = vector.extract_strided_slice %11 {offsets = [0, 0, 1200], sizes = [2, 2, 40], strides = [1, 1, 1]} : vector<2x2x1920xf32> to vector<2x2x40xf32>
      %72 = arith.maximumf %70, %71 : vector<2x2x40xf32>
      %73 = vector.extract_strided_slice %11 {offsets = [0, 0, 1240], sizes = [2, 2, 40], strides = [1, 1, 1]} : vector<2x2x1920xf32> to vector<2x2x40xf32>
      %74 = arith.maximumf %72, %73 : vector<2x2x40xf32>
      %75 = vector.extract_strided_slice %11 {offsets = [0, 0, 1280], sizes = [2, 2, 40], strides = [1, 1, 1]} : vector<2x2x1920xf32> to vector<2x2x40xf32>
      %76 = arith.maximumf %74, %75 : vector<2x2x40xf32>
      %77 = vector.extract_strided_slice %11 {offsets = [0, 0, 1320], sizes = [2, 2, 40], strides = [1, 1, 1]} : vector<2x2x1920xf32> to vector<2x2x40xf32>
      %78 = arith.maximumf %76, %77 : vector<2x2x40xf32>
      %79 = vector.extract_strided_slice %11 {offsets = [0, 0, 1360], sizes = [2, 2, 40], strides = [1, 1, 1]} : vector<2x2x1920xf32> to vector<2x2x40xf32>
      %80 = arith.maximumf %78, %79 : vector<2x2x40xf32>
      %81 = vector.extract_strided_slice %11 {offsets = [0, 0, 1400], sizes = [2, 2, 40], strides = [1, 1, 1]} : vector<2x2x1920xf32> to vector<2x2x40xf32>
      %82 = arith.maximumf %80, %81 : vector<2x2x40xf32>
      %83 = vector.extract_strided_slice %11 {offsets = [0, 0, 1440], sizes = [2, 2, 40], strides = [1, 1, 1]} : vector<2x2x1920xf32> to vector<2x2x40xf32>
      %84 = arith.maximumf %82, %83 : vector<2x2x40xf32>
      %85 = vector.extract_strided_slice %11 {offsets = [0, 0, 1480], sizes = [2, 2, 40], strides = [1, 1, 1]} : vector<2x2x1920xf32> to vector<2x2x40xf32>
      %86 = arith.maximumf %84, %85 : vector<2x2x40xf32>
      %87 = vector.extract_strided_slice %11 {offsets = [0, 0, 1520], sizes = [2, 2, 40], strides = [1, 1, 1]} : vector<2x2x1920xf32> to vector<2x2x40xf32>
      %88 = arith.maximumf %86, %87 : vector<2x2x40xf32>
      %89 = vector.extract_strided_slice %11 {offsets = [0, 0, 1560], sizes = [2, 2, 40], strides = [1, 1, 1]} : vector<2x2x1920xf32> to vector<2x2x40xf32>
      %90 = arith.maximumf %88, %89 : vector<2x2x40xf32>
      %91 = vector.extract_strided_slice %11 {offsets = [0, 0, 1600], sizes = [2, 2, 40], strides = [1, 1, 1]} : vector<2x2x1920xf32> to vector<2x2x40xf32>
      %92 = arith.maximumf %90, %91 : vector<2x2x40xf32>
      %93 = vector.extract_strided_slice %11 {offsets = [0, 0, 1640], sizes = [2, 2, 40], strides = [1, 1, 1]} : vector<2x2x1920xf32> to vector<2x2x40xf32>
      %94 = arith.maximumf %92, %93 : vector<2x2x40xf32>
      %95 = vector.extract_strided_slice %11 {offsets = [0, 0, 1680], sizes = [2, 2, 40], strides = [1, 1, 1]} : vector<2x2x1920xf32> to vector<2x2x40xf32>
      %96 = arith.maximumf %94, %95 : vector<2x2x40xf32>
      %97 = vector.extract_strided_slice %11 {offsets = [0, 0, 1720], sizes = [2, 2, 40], strides = [1, 1, 1]} : vector<2x2x1920xf32> to vector<2x2x40xf32>
      %98 = arith.maximumf %96, %97 : vector<2x2x40xf32>
      %99 = vector.extract_strided_slice %11 {offsets = [0, 0, 1760], sizes = [2, 2, 40], strides = [1, 1, 1]} : vector<2x2x1920xf32> to vector<2x2x40xf32>
      %100 = arith.maximumf %98, %99 : vector<2x2x40xf32>
      %101 = vector.extract_strided_slice %11 {offsets = [0, 0, 1800], sizes = [2, 2, 40], strides = [1, 1, 1]} : vector<2x2x1920xf32> to vector<2x2x40xf32>
      %102 = arith.maximumf %100, %101 : vector<2x2x40xf32>
      %103 = vector.extract_strided_slice %11 {offsets = [0, 0, 1840], sizes = [2, 2, 40], strides = [1, 1, 1]} : vector<2x2x1920xf32> to vector<2x2x40xf32>
      %104 = arith.maximumf %102, %103 : vector<2x2x40xf32>
      %105 = vector.extract_strided_slice %11 {offsets = [0, 0, 1880], sizes = [2, 2, 40], strides = [1, 1, 1]} : vector<2x2x1920xf32> to vector<2x2x40xf32>
      %106 = arith.maximumf %104, %105 : vector<2x2x40xf32>
      %107 = vector.extract_strided_slice %106 {offsets = [0, 0, 0], sizes = [2, 2, 2], strides = [1, 1, 1]} : vector<2x2x40xf32> to vector<2x2x2xf32>
      %cst_12 = arith.constant dense<0xFF800000> : vector<2x2xf32>
      %108 = vector.multi_reduction <maximumf>, %107, %cst_12 [2] : vector<2x2x2xf32> to vector<2x2xf32>
      %109 = vector.shape_cast %108 : vector<2x2xf32> to vector<2x2x1xf32>
      %110 = vector.extract_strided_slice %106 {offsets = [0, 0, 2], sizes = [2, 2, 2], strides = [1, 1, 1]} : vector<2x2x40xf32> to vector<2x2x2xf32>
      %cst_13 = arith.constant dense<0xFF800000> : vector<2x2xf32>
      %111 = vector.multi_reduction <maximumf>, %110, %cst_13 [2] : vector<2x2x2xf32> to vector<2x2xf32>
      %112 = vector.shape_cast %111 : vector<2x2xf32> to vector<2x2x1xf32>
      %113 = vector.extract_strided_slice %106 {offsets = [0, 0, 4], sizes = [2, 2, 2], strides = [1, 1, 1]} : vector<2x2x40xf32> to vector<2x2x2xf32>
      %cst_14 = arith.constant dense<0xFF800000> : vector<2x2xf32>
      %114 = vector.multi_reduction <maximumf>, %113, %cst_14 [2] : vector<2x2x2xf32> to vector<2x2xf32>
      %115 = vector.shape_cast %114 : vector<2x2xf32> to vector<2x2x1xf32>
      %116 = vector.extract_strided_slice %106 {offsets = [0, 0, 6], sizes = [2, 2, 2], strides = [1, 1, 1]} : vector<2x2x40xf32> to vector<2x2x2xf32>
      %cst_15 = arith.constant dense<0xFF800000> : vector<2x2xf32>
      %117 = vector.multi_reduction <maximumf>, %116, %cst_15 [2] : vector<2x2x2xf32> to vector<2x2xf32>
      %118 = vector.shape_cast %117 : vector<2x2xf32> to vector<2x2x1xf32>
      %119 = vector.extract_strided_slice %106 {offsets = [0, 0, 8], sizes = [2, 2, 2], strides = [1, 1, 1]} : vector<2x2x40xf32> to vector<2x2x2xf32>
      %cst_16 = arith.constant dense<0xFF800000> : vector<2x2xf32>
      %120 = vector.multi_reduction <maximumf>, %119, %cst_16 [2] : vector<2x2x2xf32> to vector<2x2xf32>
      %121 = vector.shape_cast %120 : vector<2x2xf32> to vector<2x2x1xf32>
      %122 = vector.extract_strided_slice %106 {offsets = [0, 0, 10], sizes = [2, 2, 2], strides = [1, 1, 1]} : vector<2x2x40xf32> to vector<2x2x2xf32>
      %cst_17 = arith.constant dense<0xFF800000> : vector<2x2xf32>
      %123 = vector.multi_reduction <maximumf>, %122, %cst_17 [2] : vector<2x2x2xf32> to vector<2x2xf32>
      %124 = vector.shape_cast %123 : vector<2x2xf32> to vector<2x2x1xf32>
      %125 = vector.extract_strided_slice %106 {offsets = [0, 0, 12], sizes = [2, 2, 2], strides = [1, 1, 1]} : vector<2x2x40xf32> to vector<2x2x2xf32>
      %cst_18 = arith.constant dense<0xFF800000> : vector<2x2xf32>
      %126 = vector.multi_reduction <maximumf>, %125, %cst_18 [2] : vector<2x2x2xf32> to vector<2x2xf32>
      %127 = vector.shape_cast %126 : vector<2x2xf32> to vector<2x2x1xf32>
      %128 = vector.extract_strided_slice %106 {offsets = [0, 0, 14], sizes = [2, 2, 2], strides = [1, 1, 1]} : vector<2x2x40xf32> to vector<2x2x2xf32>
      %cst_19 = arith.constant dense<0xFF800000> : vector<2x2xf32>
      %129 = vector.multi_reduction <maximumf>, %128, %cst_19 [2] : vector<2x2x2xf32> to vector<2x2xf32>
      %130 = vector.shape_cast %129 : vector<2x2xf32> to vector<2x2x1xf32>
      %131 = vector.extract_strided_slice %106 {offsets = [0, 0, 16], sizes = [2, 2, 2], strides = [1, 1, 1]} : vector<2x2x40xf32> to vector<2x2x2xf32>
      %cst_20 = arith.constant dense<0xFF800000> : vector<2x2xf32>
      %132 = vector.multi_reduction <maximumf>, %131, %cst_20 [2] : vector<2x2x2xf32> to vector<2x2xf32>
      %133 = vector.shape_cast %132 : vector<2x2xf32> to vector<2x2x1xf32>
      %134 = vector.extract_strided_slice %106 {offsets = [0, 0, 18], sizes = [2, 2, 2], strides = [1, 1, 1]} : vector<2x2x40xf32> to vector<2x2x2xf32>
      %cst_21 = arith.constant dense<0xFF800000> : vector<2x2xf32>
      %135 = vector.multi_reduction <maximumf>, %134, %cst_21 [2] : vector<2x2x2xf32> to vector<2x2xf32>
      %136 = vector.shape_cast %135 : vector<2x2xf32> to vector<2x2x1xf32>
      %137 = vector.extract_strided_slice %106 {offsets = [0, 0, 20], sizes = [2, 2, 2], strides = [1, 1, 1]} : vector<2x2x40xf32> to vector<2x2x2xf32>
      %cst_22 = arith.constant dense<0xFF800000> : vector<2x2xf32>
      %138 = vector.multi_reduction <maximumf>, %137, %cst_22 [2] : vector<2x2x2xf32> to vector<2x2xf32>
      %139 = vector.shape_cast %138 : vector<2x2xf32> to vector<2x2x1xf32>
      %140 = vector.extract_strided_slice %106 {offsets = [0, 0, 22], sizes = [2, 2, 2], strides = [1, 1, 1]} : vector<2x2x40xf32> to vector<2x2x2xf32>
      %cst_23 = arith.constant dense<0xFF800000> : vector<2x2xf32>
      %141 = vector.multi_reduction <maximumf>, %140, %cst_23 [2] : vector<2x2x2xf32> to vector<2x2xf32>
      %142 = vector.shape_cast %141 : vector<2x2xf32> to vector<2x2x1xf32>
      %143 = vector.extract_strided_slice %106 {offsets = [0, 0, 24], sizes = [2, 2, 2], strides = [1, 1, 1]} : vector<2x2x40xf32> to vector<2x2x2xf32>
      %cst_24 = arith.constant dense<0xFF800000> : vector<2x2xf32>
      %144 = vector.multi_reduction <maximumf>, %143, %cst_24 [2] : vector<2x2x2xf32> to vector<2x2xf32>
      %145 = vector.shape_cast %144 : vector<2x2xf32> to vector<2x2x1xf32>
      %146 = vector.extract_strided_slice %106 {offsets = [0, 0, 26], sizes = [2, 2, 2], strides = [1, 1, 1]} : vector<2x2x40xf32> to vector<2x2x2xf32>
      %cst_25 = arith.constant dense<0xFF800000> : vector<2x2xf32>
      %147 = vector.multi_reduction <maximumf>, %146, %cst_25 [2] : vector<2x2x2xf32> to vector<2x2xf32>
      %148 = vector.shape_cast %147 : vector<2x2xf32> to vector<2x2x1xf32>
      %149 = vector.extract_strided_slice %106 {offsets = [0, 0, 28], sizes = [2, 2, 2], strides = [1, 1, 1]} : vector<2x2x40xf32> to vector<2x2x2xf32>
      %cst_26 = arith.constant dense<0xFF800000> : vector<2x2xf32>
      %150 = vector.multi_reduction <maximumf>, %149, %cst_26 [2] : vector<2x2x2xf32> to vector<2x2xf32>
      %151 = vector.shape_cast %150 : vector<2x2xf32> to vector<2x2x1xf32>
      %152 = vector.extract_strided_slice %106 {offsets = [0, 0, 30], sizes = [2, 2, 2], strides = [1, 1, 1]} : vector<2x2x40xf32> to vector<2x2x2xf32>
      %cst_27 = arith.constant dense<0xFF800000> : vector<2x2xf32>
      %153 = vector.multi_reduction <maximumf>, %152, %cst_27 [2] : vector<2x2x2xf32> to vector<2x2xf32>
      %154 = vector.shape_cast %153 : vector<2x2xf32> to vector<2x2x1xf32>
      %155 = vector.extract_strided_slice %106 {offsets = [0, 0, 32], sizes = [2, 2, 2], strides = [1, 1, 1]} : vector<2x2x40xf32> to vector<2x2x2xf32>
      %cst_28 = arith.constant dense<0xFF800000> : vector<2x2xf32>
      %156 = vector.multi_reduction <maximumf>, %155, %cst_28 [2] : vector<2x2x2xf32> to vector<2x2xf32>
      %157 = vector.shape_cast %156 : vector<2x2xf32> to vector<2x2x1xf32>
      %158 = vector.extract_strided_slice %106 {offsets = [0, 0, 34], sizes = [2, 2, 2], strides = [1, 1, 1]} : vector<2x2x40xf32> to vector<2x2x2xf32>
      %cst_29 = arith.constant dense<0xFF800000> : vector<2x2xf32>
      %159 = vector.multi_reduction <maximumf>, %158, %cst_29 [2] : vector<2x2x2xf32> to vector<2x2xf32>
      %160 = vector.shape_cast %159 : vector<2x2xf32> to vector<2x2x1xf32>
      %161 = vector.extract_strided_slice %106 {offsets = [0, 0, 36], sizes = [2, 2, 2], strides = [1, 1, 1]} : vector<2x2x40xf32> to vector<2x2x2xf32>
      %cst_30 = arith.constant dense<0xFF800000> : vector<2x2xf32>
      %162 = vector.multi_reduction <maximumf>, %161, %cst_30 [2] : vector<2x2x2xf32> to vector<2x2xf32>
      %163 = vector.shape_cast %162 : vector<2x2xf32> to vector<2x2x1xf32>
      %164 = vector.extract_strided_slice %106 {offsets = [0, 0, 38], sizes = [2, 2, 2], strides = [1, 1, 1]} : vector<2x2x40xf32> to vector<2x2x2xf32>
      %cst_31 = arith.constant dense<0xFF800000> : vector<2x2xf32>
      %165 = vector.multi_reduction <maximumf>, %164, %cst_31 [2] : vector<2x2x2xf32> to vector<2x2xf32>
      %166 = vector.shape_cast %165 : vector<2x2xf32> to vector<2x2x1xf32>
      %167 = tpu.concatenate %109, %112, %115, %118, %121, %124, %127, %130, %133, %136, %139, %142, %145, %148, %151, %154 in 2 : vector<2x2x1xf32>, vector<2x2x1xf32>, vector<2x2x1xf32>, vector<2x2x1xf32>, vector<2x2x1xf32>, vector<2x2x1xf32>, vector<2x2x1xf32>, vector<2x2x1xf32>, vector<2x2x1xf32>, vector<2x2x1xf32>, vector<2x2x1xf32>, vector<2x2x1xf32>, vector<2x2x1xf32>, vector<2x2x1xf32>, vector<2x2x1xf32>, vector<2x2x1xf32> -> vector<2x2x16xf32>
      %168 = tpu.concatenate %157, %160, %163, %166 in 2 : vector<2x2x1xf32>, vector<2x2x1xf32>, vector<2x2x1xf32>, vector<2x2x1xf32> -> vector<2x2x4xf32>
      %169 = tpu.concatenate %167, %168 in 2 : vector<2x2x16xf32>, vector<2x2x4xf32> -> vector<2x2x20xf32>
      %cst_32 = arith.constant 0.000000e+00 : f32
      %170 = vector.broadcast %cst_32 : f32 to vector<2x2x3xf32>
      %171 = tpu.concatenate %170, %169, %170 in 2 : vector<2x2x3xf32>, vector<2x2x20xf32>, vector<2x2x3xf32> -> vector<2x2x26xf32>
      %172 = vector.extract_strided_slice %171 {offsets = [0, 0, 0], sizes = [2, 2, 20], strides = [1, 1, 1]} : vector<2x2x26xf32> to vector<2x2x20xf32>
      %173 = vector.extract_strided_slice %171 {offsets = [0, 0, 1], sizes = [2, 2, 20], strides = [1, 1, 1]} : vector<2x2x26xf32> to vector<2x2x20xf32>
      %174 = vector.extract_strided_slice %171 {offsets = [0, 0, 2], sizes = [2, 2, 20], strides = [1, 1, 1]} : vector<2x2x26xf32> to vector<2x2x20xf32>
      %175 = vector.extract_strided_slice %171 {offsets = [0, 0, 3], sizes = [2, 2, 20], strides = [1, 1, 1]} : vector<2x2x26xf32> to vector<2x2x20xf32>
      %176 = vector.extract_strided_slice %171 {offsets = [0, 0, 4], sizes = [2, 2, 20], strides = [1, 1, 1]} : vector<2x2x26xf32> to vector<2x2x20xf32>
      %177 = vector.extract_strided_slice %171 {offsets = [0, 0, 5], sizes = [2, 2, 20], strides = [1, 1, 1]} : vector<2x2x26xf32> to vector<2x2x20xf32>
      %178 = vector.extract_strided_slice %171 {offsets = [0, 0, 6], sizes = [2, 2, 20], strides = [1, 1, 1]} : vector<2x2x26xf32> to vector<2x2x20xf32>
      %179 = vector.extract_strided_slice %169 {offsets = [0, 0, 0], sizes = [2, 1, 20], strides = [1, 1, 1]} : vector<2x2x20xf32> to vector<2x1x20xf32>
      %180 = vector.shape_cast %179 : vector<2x1x20xf32> to vector<2x20xf32>
      %c0_33 = arith.constant 0 : index
      %c0_34 = arith.constant 0 : index
      %181 = memref.load %arg3[%c0_33, %c0_34] : memref<3x12xf32, #tpu.memory_space<smem>>
      %182 = vector.extract_strided_slice %174 {offsets = [0, 0, 0], sizes = [2, 1, 20], strides = [1, 1, 1]} : vector<2x2x20xf32> to vector<2x1x20xf32>
      %183 = vector.shape_cast %182 : vector<2x1x20xf32> to vector<2x20xf32>
      %184 = vector.broadcast %181 : f32 to vector<2x20xf32>
      %185 = arith.mulf %184, %183 : vector<2x20xf32>
      %186 = arith.addf %180, %185 : vector<2x20xf32>
      %c0_35 = arith.constant 0 : index
      %c1 = arith.constant 1 : index
      %187 = memref.load %arg3[%c0_35, %c1] : memref<3x12xf32, #tpu.memory_space<smem>>
      %188 = vector.extract_strided_slice %175 {offsets = [0, 0, 0], sizes = [2, 1, 20], strides = [1, 1, 1]} : vector<2x2x20xf32> to vector<2x1x20xf32>
      %189 = vector.shape_cast %188 : vector<2x1x20xf32> to vector<2x20xf32>
      %190 = vector.broadcast %187 : f32 to vector<2x20xf32>
      %191 = arith.mulf %190, %189 : vector<2x20xf32>
      %192 = arith.addf %186, %191 : vector<2x20xf32>
      %c0_36 = arith.constant 0 : index
      %c2 = arith.constant 2 : index
      %193 = memref.load %arg3[%c0_36, %c2] : memref<3x12xf32, #tpu.memory_space<smem>>
      %194 = vector.extract_strided_slice %176 {offsets = [0, 0, 0], sizes = [2, 1, 20], strides = [1, 1, 1]} : vector<2x2x20xf32> to vector<2x1x20xf32>
      %195 = vector.shape_cast %194 : vector<2x1x20xf32> to vector<2x20xf32>
      %196 = vector.broadcast %193 : f32 to vector<2x20xf32>
      %197 = arith.mulf %196, %195 : vector<2x20xf32>
      %198 = arith.addf %192, %197 : vector<2x20xf32>
      %c0_37 = arith.constant 0 : index
      %c3 = arith.constant 3 : index
      %199 = memref.load %arg3[%c0_37, %c3] : memref<3x12xf32, #tpu.memory_space<smem>>
      %200 = vector.extract_strided_slice %174 {offsets = [0, 1, 0], sizes = [2, 1, 20], strides = [1, 1, 1]} : vector<2x2x20xf32> to vector<2x1x20xf32>
      %201 = vector.shape_cast %200 : vector<2x1x20xf32> to vector<2x20xf32>
      %202 = vector.broadcast %199 : f32 to vector<2x20xf32>
      %203 = arith.mulf %202, %201 : vector<2x20xf32>
      %204 = arith.addf %198, %203 : vector<2x20xf32>
      %c0_38 = arith.constant 0 : index
      %c4 = arith.constant 4 : index
      %205 = memref.load %arg3[%c0_38, %c4] : memref<3x12xf32, #tpu.memory_space<smem>>
      %206 = vector.extract_strided_slice %175 {offsets = [0, 1, 0], sizes = [2, 1, 20], strides = [1, 1, 1]} : vector<2x2x20xf32> to vector<2x1x20xf32>
      %207 = vector.shape_cast %206 : vector<2x1x20xf32> to vector<2x20xf32>
      %208 = vector.broadcast %205 : f32 to vector<2x20xf32>
      %209 = arith.mulf %208, %207 : vector<2x20xf32>
      %210 = arith.addf %204, %209 : vector<2x20xf32>
      %c0_39 = arith.constant 0 : index
      %c5 = arith.constant 5 : index
      %211 = memref.load %arg3[%c0_39, %c5] : memref<3x12xf32, #tpu.memory_space<smem>>
      %212 = vector.extract_strided_slice %176 {offsets = [0, 1, 0], sizes = [2, 1, 20], strides = [1, 1, 1]} : vector<2x2x20xf32> to vector<2x1x20xf32>
      %213 = vector.shape_cast %212 : vector<2x1x20xf32> to vector<2x20xf32>
      %214 = vector.broadcast %211 : f32 to vector<2x20xf32>
      %215 = arith.mulf %214, %213 : vector<2x20xf32>
      %216 = arith.addf %210, %215 : vector<2x20xf32>
      %c0_40 = arith.constant 0 : index
      %c0_41 = arith.constant 0 : index
      %217 = memref.load %arg4[%c0_40, %c0_41] : memref<3x2xf32, #tpu.memory_space<smem>>
      %218 = vector.broadcast %217 : f32 to vector<2x20xf32>
      %219 = arith.mulf %216, %218 : vector<2x20xf32>
      %c0_42 = arith.constant 0 : index
      %c0_43 = arith.constant 0 : index
      %220 = memref.load %arg5[%c0_42, %c0_43] : memref<3x2xf32, #tpu.memory_space<smem>>
      %221 = vector.broadcast %220 : f32 to vector<2x20xf32>
      %222 = arith.addf %219, %221 : vector<2x20xf32>
      %cst_44 = arith.constant 0.000000e+00 : f32
      %223 = vector.broadcast %cst_44 : f32 to vector<2x20xf32>
      %224 = arith.maximumf %222, %223 : vector<2x20xf32>
      %225 = vector.extract_strided_slice %169 {offsets = [0, 1, 0], sizes = [2, 1, 20], strides = [1, 1, 1]} : vector<2x2x20xf32> to vector<2x1x20xf32>
      %226 = vector.shape_cast %225 : vector<2x1x20xf32> to vector<2x20xf32>
      %c0_45 = arith.constant 0 : index
      %c6 = arith.constant 6 : index
      %227 = memref.load %arg3[%c0_45, %c6] : memref<3x12xf32, #tpu.memory_space<smem>>
      %228 = vector.extract_strided_slice %174 {offsets = [0, 0, 0], sizes = [2, 1, 20], strides = [1, 1, 1]} : vector<2x2x20xf32> to vector<2x1x20xf32>
      %229 = vector.shape_cast %228 : vector<2x1x20xf32> to vector<2x20xf32>
      %230 = vector.broadcast %227 : f32 to vector<2x20xf32>
      %231 = arith.mulf %230, %229 : vector<2x20xf32>
      %232 = arith.addf %226, %231 : vector<2x20xf32>
      %c0_46 = arith.constant 0 : index
      %c7 = arith.constant 7 : index
      %233 = memref.load %arg3[%c0_46, %c7] : memref<3x12xf32, #tpu.memory_space<smem>>
      %234 = vector.extract_strided_slice %175 {offsets = [0, 0, 0], sizes = [2, 1, 20], strides = [1, 1, 1]} : vector<2x2x20xf32> to vector<2x1x20xf32>
      %235 = vector.shape_cast %234 : vector<2x1x20xf32> to vector<2x20xf32>
      %236 = vector.broadcast %233 : f32 to vector<2x20xf32>
      %237 = arith.mulf %236, %235 : vector<2x20xf32>
      %238 = arith.addf %232, %237 : vector<2x20xf32>
      %c0_47 = arith.constant 0 : index
      %c8 = arith.constant 8 : index
      %239 = memref.load %arg3[%c0_47, %c8] : memref<3x12xf32, #tpu.memory_space<smem>>
      %240 = vector.extract_strided_slice %176 {offsets = [0, 0, 0], sizes = [2, 1, 20], strides = [1, 1, 1]} : vector<2x2x20xf32> to vector<2x1x20xf32>
      %241 = vector.shape_cast %240 : vector<2x1x20xf32> to vector<2x20xf32>
      %242 = vector.broadcast %239 : f32 to vector<2x20xf32>
      %243 = arith.mulf %242, %241 : vector<2x20xf32>
      %244 = arith.addf %238, %243 : vector<2x20xf32>
      %c0_48 = arith.constant 0 : index
      %c9 = arith.constant 9 : index
      %245 = memref.load %arg3[%c0_48, %c9] : memref<3x12xf32, #tpu.memory_space<smem>>
      %246 = vector.extract_strided_slice %174 {offsets = [0, 1, 0], sizes = [2, 1, 20], strides = [1, 1, 1]} : vector<2x2x20xf32> to vector<2x1x20xf32>
      %247 = vector.shape_cast %246 : vector<2x1x20xf32> to vector<2x20xf32>
      %248 = vector.broadcast %245 : f32 to vector<2x20xf32>
      %249 = arith.mulf %248, %247 : vector<2x20xf32>
      %250 = arith.addf %244, %249 : vector<2x20xf32>
      %c0_49 = arith.constant 0 : index
      %c10 = arith.constant 10 : index
      %251 = memref.load %arg3[%c0_49, %c10] : memref<3x12xf32, #tpu.memory_space<smem>>
      %252 = vector.extract_strided_slice %175 {offsets = [0, 1, 0], sizes = [2, 1, 20], strides = [1, 1, 1]} : vector<2x2x20xf32> to vector<2x1x20xf32>
      %253 = vector.shape_cast %252 : vector<2x1x20xf32> to vector<2x20xf32>
      %254 = vector.broadcast %251 : f32 to vector<2x20xf32>
      %255 = arith.mulf %254, %253 : vector<2x20xf32>
      %256 = arith.addf %250, %255 : vector<2x20xf32>
      %c0_50 = arith.constant 0 : index
      %c11 = arith.constant 11 : index
      %257 = memref.load %arg3[%c0_50, %c11] : memref<3x12xf32, #tpu.memory_space<smem>>
      %258 = vector.extract_strided_slice %176 {offsets = [0, 1, 0], sizes = [2, 1, 20], strides = [1, 1, 1]} : vector<2x2x20xf32> to vector<2x1x20xf32>
      %259 = vector.shape_cast %258 : vector<2x1x20xf32> to vector<2x20xf32>
      %260 = vector.broadcast %257 : f32 to vector<2x20xf32>
      %261 = arith.mulf %260, %259 : vector<2x20xf32>
      %262 = arith.addf %256, %261 : vector<2x20xf32>
      %c0_51 = arith.constant 0 : index
      %c1_52 = arith.constant 1 : index
      %263 = memref.load %arg4[%c0_51, %c1_52] : memref<3x2xf32, #tpu.memory_space<smem>>
      %264 = vector.broadcast %263 : f32 to vector<2x20xf32>
      %265 = arith.mulf %262, %264 : vector<2x20xf32>
      %c0_53 = arith.constant 0 : index
      %c1_54 = arith.constant 1 : index
      %266 = memref.load %arg5[%c0_53, %c1_54] : memref<3x2xf32, #tpu.memory_space<smem>>
      %267 = vector.broadcast %266 : f32 to vector<2x20xf32>
      %268 = arith.addf %265, %267 : vector<2x20xf32>
      %cst_55 = arith.constant 0.000000e+00 : f32
      %269 = vector.broadcast %cst_55 : f32 to vector<2x20xf32>
      %270 = arith.maximumf %268, %269 : vector<2x20xf32>
      %271 = vector.extract_strided_slice %169 {offsets = [0, 0, 0], sizes = [2, 1, 20], strides = [1, 1, 1]} : vector<2x2x20xf32> to vector<2x1x20xf32>
      %272 = vector.shape_cast %271 : vector<2x1x20xf32> to vector<2x20xf32>
      %c1_56 = arith.constant 1 : index
      %c0_57 = arith.constant 0 : index
      %273 = memref.load %arg3[%c1_56, %c0_57] : memref<3x12xf32, #tpu.memory_space<smem>>
      %274 = vector.extract_strided_slice %173 {offsets = [0, 0, 0], sizes = [2, 1, 20], strides = [1, 1, 1]} : vector<2x2x20xf32> to vector<2x1x20xf32>
      %275 = vector.shape_cast %274 : vector<2x1x20xf32> to vector<2x20xf32>
      %276 = vector.broadcast %273 : f32 to vector<2x20xf32>
      %277 = arith.mulf %276, %275 : vector<2x20xf32>
      %278 = arith.addf %272, %277 : vector<2x20xf32>
      %c1_58 = arith.constant 1 : index
      %c1_59 = arith.constant 1 : index
      %279 = memref.load %arg3[%c1_58, %c1_59] : memref<3x12xf32, #tpu.memory_space<smem>>
      %280 = vector.extract_strided_slice %175 {offsets = [0, 0, 0], sizes = [2, 1, 20], strides = [1, 1, 1]} : vector<2x2x20xf32> to vector<2x1x20xf32>
      %281 = vector.shape_cast %280 : vector<2x1x20xf32> to vector<2x20xf32>
      %282 = vector.broadcast %279 : f32 to vector<2x20xf32>
      %283 = arith.mulf %282, %281 : vector<2x20xf32>
      %284 = arith.addf %278, %283 : vector<2x20xf32>
      %c1_60 = arith.constant 1 : index
      %c2_61 = arith.constant 2 : index
      %285 = memref.load %arg3[%c1_60, %c2_61] : memref<3x12xf32, #tpu.memory_space<smem>>
      %286 = vector.extract_strided_slice %177 {offsets = [0, 0, 0], sizes = [2, 1, 20], strides = [1, 1, 1]} : vector<2x2x20xf32> to vector<2x1x20xf32>
      %287 = vector.shape_cast %286 : vector<2x1x20xf32> to vector<2x20xf32>
      %288 = vector.broadcast %285 : f32 to vector<2x20xf32>
      %289 = arith.mulf %288, %287 : vector<2x20xf32>
      %290 = arith.addf %284, %289 : vector<2x20xf32>
      %c1_62 = arith.constant 1 : index
      %c3_63 = arith.constant 3 : index
      %291 = memref.load %arg3[%c1_62, %c3_63] : memref<3x12xf32, #tpu.memory_space<smem>>
      %292 = vector.extract_strided_slice %173 {offsets = [0, 1, 0], sizes = [2, 1, 20], strides = [1, 1, 1]} : vector<2x2x20xf32> to vector<2x1x20xf32>
      %293 = vector.shape_cast %292 : vector<2x1x20xf32> to vector<2x20xf32>
      %294 = vector.broadcast %291 : f32 to vector<2x20xf32>
      %295 = arith.mulf %294, %293 : vector<2x20xf32>
      %296 = arith.addf %290, %295 : vector<2x20xf32>
      %c1_64 = arith.constant 1 : index
      %c4_65 = arith.constant 4 : index
      %297 = memref.load %arg3[%c1_64, %c4_65] : memref<3x12xf32, #tpu.memory_space<smem>>
      %298 = vector.extract_strided_slice %175 {offsets = [0, 1, 0], sizes = [2, 1, 20], strides = [1, 1, 1]} : vector<2x2x20xf32> to vector<2x1x20xf32>
      %299 = vector.shape_cast %298 : vector<2x1x20xf32> to vector<2x20xf32>
      %300 = vector.broadcast %297 : f32 to vector<2x20xf32>
      %301 = arith.mulf %300, %299 : vector<2x20xf32>
      %302 = arith.addf %296, %301 : vector<2x20xf32>
      %c1_66 = arith.constant 1 : index
      %c5_67 = arith.constant 5 : index
      %303 = memref.load %arg3[%c1_66, %c5_67] : memref<3x12xf32, #tpu.memory_space<smem>>
      %304 = vector.extract_strided_slice %177 {offsets = [0, 1, 0], sizes = [2, 1, 20], strides = [1, 1, 1]} : vector<2x2x20xf32> to vector<2x1x20xf32>
      %305 = vector.shape_cast %304 : vector<2x1x20xf32> to vector<2x20xf32>
      %306 = vector.broadcast %303 : f32 to vector<2x20xf32>
      %307 = arith.mulf %306, %305 : vector<2x20xf32>
      %308 = arith.addf %302, %307 : vector<2x20xf32>
      %c1_68 = arith.constant 1 : index
      %c0_69 = arith.constant 0 : index
      %309 = memref.load %arg4[%c1_68, %c0_69] : memref<3x2xf32, #tpu.memory_space<smem>>
      %310 = vector.broadcast %309 : f32 to vector<2x20xf32>
      %311 = arith.mulf %308, %310 : vector<2x20xf32>
      %c1_70 = arith.constant 1 : index
      %c0_71 = arith.constant 0 : index
      %312 = memref.load %arg5[%c1_70, %c0_71] : memref<3x2xf32, #tpu.memory_space<smem>>
      %313 = vector.broadcast %312 : f32 to vector<2x20xf32>
      %314 = arith.addf %311, %313 : vector<2x20xf32>
      %cst_72 = arith.constant 0.000000e+00 : f32
      %315 = vector.broadcast %cst_72 : f32 to vector<2x20xf32>
      %316 = arith.maximumf %314, %315 : vector<2x20xf32>
      %317 = vector.extract_strided_slice %169 {offsets = [0, 1, 0], sizes = [2, 1, 20], strides = [1, 1, 1]} : vector<2x2x20xf32> to vector<2x1x20xf32>
      %318 = vector.shape_cast %317 : vector<2x1x20xf32> to vector<2x20xf32>
      %c1_73 = arith.constant 1 : index
      %c6_74 = arith.constant 6 : index
      %319 = memref.load %arg3[%c1_73, %c6_74] : memref<3x12xf32, #tpu.memory_space<smem>>
      %320 = vector.extract_strided_slice %173 {offsets = [0, 0, 0], sizes = [2, 1, 20], strides = [1, 1, 1]} : vector<2x2x20xf32> to vector<2x1x20xf32>
      %321 = vector.shape_cast %320 : vector<2x1x20xf32> to vector<2x20xf32>
      %322 = vector.broadcast %319 : f32 to vector<2x20xf32>
      %323 = arith.mulf %322, %321 : vector<2x20xf32>
      %324 = arith.addf %318, %323 : vector<2x20xf32>
      %c1_75 = arith.constant 1 : index
      %c7_76 = arith.constant 7 : index
      %325 = memref.load %arg3[%c1_75, %c7_76] : memref<3x12xf32, #tpu.memory_space<smem>>
      %326 = vector.extract_strided_slice %175 {offsets = [0, 0, 0], sizes = [2, 1, 20], strides = [1, 1, 1]} : vector<2x2x20xf32> to vector<2x1x20xf32>
      %327 = vector.shape_cast %326 : vector<2x1x20xf32> to vector<2x20xf32>
      %328 = vector.broadcast %325 : f32 to vector<2x20xf32>
      %329 = arith.mulf %328, %327 : vector<2x20xf32>
      %330 = arith.addf %324, %329 : vector<2x20xf32>
      %c1_77 = arith.constant 1 : index
      %c8_78 = arith.constant 8 : index
      %331 = memref.load %arg3[%c1_77, %c8_78] : memref<3x12xf32, #tpu.memory_space<smem>>
      %332 = vector.extract_strided_slice %177 {offsets = [0, 0, 0], sizes = [2, 1, 20], strides = [1, 1, 1]} : vector<2x2x20xf32> to vector<2x1x20xf32>
      %333 = vector.shape_cast %332 : vector<2x1x20xf32> to vector<2x20xf32>
      %334 = vector.broadcast %331 : f32 to vector<2x20xf32>
      %335 = arith.mulf %334, %333 : vector<2x20xf32>
      %336 = arith.addf %330, %335 : vector<2x20xf32>
      %c1_79 = arith.constant 1 : index
      %c9_80 = arith.constant 9 : index
      %337 = memref.load %arg3[%c1_79, %c9_80] : memref<3x12xf32, #tpu.memory_space<smem>>
      %338 = vector.extract_strided_slice %173 {offsets = [0, 1, 0], sizes = [2, 1, 20], strides = [1, 1, 1]} : vector<2x2x20xf32> to vector<2x1x20xf32>
      %339 = vector.shape_cast %338 : vector<2x1x20xf32> to vector<2x20xf32>
      %340 = vector.broadcast %337 : f32 to vector<2x20xf32>
      %341 = arith.mulf %340, %339 : vector<2x20xf32>
      %342 = arith.addf %336, %341 : vector<2x20xf32>
      %c1_81 = arith.constant 1 : index
      %c10_82 = arith.constant 10 : index
      %343 = memref.load %arg3[%c1_81, %c10_82] : memref<3x12xf32, #tpu.memory_space<smem>>
      %344 = vector.extract_strided_slice %175 {offsets = [0, 1, 0], sizes = [2, 1, 20], strides = [1, 1, 1]} : vector<2x2x20xf32> to vector<2x1x20xf32>
      %345 = vector.shape_cast %344 : vector<2x1x20xf32> to vector<2x20xf32>
      %346 = vector.broadcast %343 : f32 to vector<2x20xf32>
      %347 = arith.mulf %346, %345 : vector<2x20xf32>
      %348 = arith.addf %342, %347 : vector<2x20xf32>
      %c1_83 = arith.constant 1 : index
      %c11_84 = arith.constant 11 : index
      %349 = memref.load %arg3[%c1_83, %c11_84] : memref<3x12xf32, #tpu.memory_space<smem>>
      %350 = vector.extract_strided_slice %177 {offsets = [0, 1, 0], sizes = [2, 1, 20], strides = [1, 1, 1]} : vector<2x2x20xf32> to vector<2x1x20xf32>
      %351 = vector.shape_cast %350 : vector<2x1x20xf32> to vector<2x20xf32>
      %352 = vector.broadcast %349 : f32 to vector<2x20xf32>
      %353 = arith.mulf %352, %351 : vector<2x20xf32>
      %354 = arith.addf %348, %353 : vector<2x20xf32>
      %c1_85 = arith.constant 1 : index
      %c1_86 = arith.constant 1 : index
      %355 = memref.load %arg4[%c1_85, %c1_86] : memref<3x2xf32, #tpu.memory_space<smem>>
      %356 = vector.broadcast %355 : f32 to vector<2x20xf32>
      %357 = arith.mulf %354, %356 : vector<2x20xf32>
      %c1_87 = arith.constant 1 : index
      %c1_88 = arith.constant 1 : index
      %358 = memref.load %arg5[%c1_87, %c1_88] : memref<3x2xf32, #tpu.memory_space<smem>>
      %359 = vector.broadcast %358 : f32 to vector<2x20xf32>
      %360 = arith.addf %357, %359 : vector<2x20xf32>
      %cst_89 = arith.constant 0.000000e+00 : f32
      %361 = vector.broadcast %cst_89 : f32 to vector<2x20xf32>
      %362 = arith.maximumf %360, %361 : vector<2x20xf32>
      %363 = vector.extract_strided_slice %169 {offsets = [0, 0, 0], sizes = [2, 1, 20], strides = [1, 1, 1]} : vector<2x2x20xf32> to vector<2x1x20xf32>
      %364 = vector.shape_cast %363 : vector<2x1x20xf32> to vector<2x20xf32>
      %c2_90 = arith.constant 2 : index
      %c0_91 = arith.constant 0 : index
      %365 = memref.load %arg3[%c2_90, %c0_91] : memref<3x12xf32, #tpu.memory_space<smem>>
      %366 = vector.extract_strided_slice %172 {offsets = [0, 0, 0], sizes = [2, 1, 20], strides = [1, 1, 1]} : vector<2x2x20xf32> to vector<2x1x20xf32>
      %367 = vector.shape_cast %366 : vector<2x1x20xf32> to vector<2x20xf32>
      %368 = vector.broadcast %365 : f32 to vector<2x20xf32>
      %369 = arith.mulf %368, %367 : vector<2x20xf32>
      %370 = arith.addf %364, %369 : vector<2x20xf32>
      %c2_92 = arith.constant 2 : index
      %c1_93 = arith.constant 1 : index
      %371 = memref.load %arg3[%c2_92, %c1_93] : memref<3x12xf32, #tpu.memory_space<smem>>
      %372 = vector.extract_strided_slice %175 {offsets = [0, 0, 0], sizes = [2, 1, 20], strides = [1, 1, 1]} : vector<2x2x20xf32> to vector<2x1x20xf32>
      %373 = vector.shape_cast %372 : vector<2x1x20xf32> to vector<2x20xf32>
      %374 = vector.broadcast %371 : f32 to vector<2x20xf32>
      %375 = arith.mulf %374, %373 : vector<2x20xf32>
      %376 = arith.addf %370, %375 : vector<2x20xf32>
      %c2_94 = arith.constant 2 : index
      %c2_95 = arith.constant 2 : index
      %377 = memref.load %arg3[%c2_94, %c2_95] : memref<3x12xf32, #tpu.memory_space<smem>>
      %378 = vector.extract_strided_slice %178 {offsets = [0, 0, 0], sizes = [2, 1, 20], strides = [1, 1, 1]} : vector<2x2x20xf32> to vector<2x1x20xf32>
      %379 = vector.shape_cast %378 : vector<2x1x20xf32> to vector<2x20xf32>
      %380 = vector.broadcast %377 : f32 to vector<2x20xf32>
      %381 = arith.mulf %380, %379 : vector<2x20xf32>
      %382 = arith.addf %376, %381 : vector<2x20xf32>
      %c2_96 = arith.constant 2 : index
      %c3_97 = arith.constant 3 : index
      %383 = memref.load %arg3[%c2_96, %c3_97] : memref<3x12xf32, #tpu.memory_space<smem>>
      %384 = vector.extract_strided_slice %172 {offsets = [0, 1, 0], sizes = [2, 1, 20], strides = [1, 1, 1]} : vector<2x2x20xf32> to vector<2x1x20xf32>
      %385 = vector.shape_cast %384 : vector<2x1x20xf32> to vector<2x20xf32>
      %386 = vector.broadcast %383 : f32 to vector<2x20xf32>
      %387 = arith.mulf %386, %385 : vector<2x20xf32>
      %388 = arith.addf %382, %387 : vector<2x20xf32>
      %c2_98 = arith.constant 2 : index
      %c4_99 = arith.constant 4 : index
      %389 = memref.load %arg3[%c2_98, %c4_99] : memref<3x12xf32, #tpu.memory_space<smem>>
      %390 = vector.extract_strided_slice %175 {offsets = [0, 1, 0], sizes = [2, 1, 20], strides = [1, 1, 1]} : vector<2x2x20xf32> to vector<2x1x20xf32>
      %391 = vector.shape_cast %390 : vector<2x1x20xf32> to vector<2x20xf32>
      %392 = vector.broadcast %389 : f32 to vector<2x20xf32>
      %393 = arith.mulf %392, %391 : vector<2x20xf32>
      %394 = arith.addf %388, %393 : vector<2x20xf32>
      %c2_100 = arith.constant 2 : index
      %c5_101 = arith.constant 5 : index
      %395 = memref.load %arg3[%c2_100, %c5_101] : memref<3x12xf32, #tpu.memory_space<smem>>
      %396 = vector.extract_strided_slice %178 {offsets = [0, 1, 0], sizes = [2, 1, 20], strides = [1, 1, 1]} : vector<2x2x20xf32> to vector<2x1x20xf32>
      %397 = vector.shape_cast %396 : vector<2x1x20xf32> to vector<2x20xf32>
      %398 = vector.broadcast %395 : f32 to vector<2x20xf32>
      %399 = arith.mulf %398, %397 : vector<2x20xf32>
      %400 = arith.addf %394, %399 : vector<2x20xf32>
      %c2_102 = arith.constant 2 : index
      %c0_103 = arith.constant 0 : index
      %401 = memref.load %arg4[%c2_102, %c0_103] : memref<3x2xf32, #tpu.memory_space<smem>>
      %402 = vector.broadcast %401 : f32 to vector<2x20xf32>
      %403 = arith.mulf %400, %402 : vector<2x20xf32>
      %c2_104 = arith.constant 2 : index
      %c0_105 = arith.constant 0 : index
      %404 = memref.load %arg5[%c2_104, %c0_105] : memref<3x2xf32, #tpu.memory_space<smem>>
      %405 = vector.broadcast %404 : f32 to vector<2x20xf32>
      %406 = arith.addf %403, %405 : vector<2x20xf32>
      %cst_106 = arith.constant 0.000000e+00 : f32
      %407 = vector.broadcast %cst_106 : f32 to vector<2x20xf32>
      %408 = arith.maximumf %406, %407 : vector<2x20xf32>
      %409 = vector.extract_strided_slice %169 {offsets = [0, 1, 0], sizes = [2, 1, 20], strides = [1, 1, 1]} : vector<2x2x20xf32> to vector<2x1x20xf32>
      %410 = vector.shape_cast %409 : vector<2x1x20xf32> to vector<2x20xf32>
      %c2_107 = arith.constant 2 : index
      %c6_108 = arith.constant 6 : index
      %411 = memref.load %arg3[%c2_107, %c6_108] : memref<3x12xf32, #tpu.memory_space<smem>>
      %412 = vector.extract_strided_slice %172 {offsets = [0, 0, 0], sizes = [2, 1, 20], strides = [1, 1, 1]} : vector<2x2x20xf32> to vector<2x1x20xf32>
      %413 = vector.shape_cast %412 : vector<2x1x20xf32> to vector<2x20xf32>
      %414 = vector.broadcast %411 : f32 to vector<2x20xf32>
      %415 = arith.mulf %414, %413 : vector<2x20xf32>
      %416 = arith.addf %410, %415 : vector<2x20xf32>
      %c2_109 = arith.constant 2 : index
      %c7_110 = arith.constant 7 : index
      %417 = memref.load %arg3[%c2_109, %c7_110] : memref<3x12xf32, #tpu.memory_space<smem>>
      %418 = vector.extract_strided_slice %175 {offsets = [0, 0, 0], sizes = [2, 1, 20], strides = [1, 1, 1]} : vector<2x2x20xf32> to vector<2x1x20xf32>
      %419 = vector.shape_cast %418 : vector<2x1x20xf32> to vector<2x20xf32>
      %420 = vector.broadcast %417 : f32 to vector<2x20xf32>
      %421 = arith.mulf %420, %419 : vector<2x20xf32>
      %422 = arith.addf %416, %421 : vector<2x20xf32>
      %c2_111 = arith.constant 2 : index
      %c8_112 = arith.constant 8 : index
      %423 = memref.load %arg3[%c2_111, %c8_112] : memref<3x12xf32, #tpu.memory_space<smem>>
      %424 = vector.extract_strided_slice %178 {offsets = [0, 0, 0], sizes = [2, 1, 20], strides = [1, 1, 1]} : vector<2x2x20xf32> to vector<2x1x20xf32>
      %425 = vector.shape_cast %424 : vector<2x1x20xf32> to vector<2x20xf32>
      %426 = vector.broadcast %423 : f32 to vector<2x20xf32>
      %427 = arith.mulf %426, %425 : vector<2x20xf32>
      %428 = arith.addf %422, %427 : vector<2x20xf32>
      %c2_113 = arith.constant 2 : index
      %c9_114 = arith.constant 9 : index
      %429 = memref.load %arg3[%c2_113, %c9_114] : memref<3x12xf32, #tpu.memory_space<smem>>
      %430 = vector.extract_strided_slice %172 {offsets = [0, 1, 0], sizes = [2, 1, 20], strides = [1, 1, 1]} : vector<2x2x20xf32> to vector<2x1x20xf32>
      %431 = vector.shape_cast %430 : vector<2x1x20xf32> to vector<2x20xf32>
      %432 = vector.broadcast %429 : f32 to vector<2x20xf32>
      %433 = arith.mulf %432, %431 : vector<2x20xf32>
      %434 = arith.addf %428, %433 : vector<2x20xf32>
      %c2_115 = arith.constant 2 : index
      %c10_116 = arith.constant 10 : index
      %435 = memref.load %arg3[%c2_115, %c10_116] : memref<3x12xf32, #tpu.memory_space<smem>>
      %436 = vector.extract_strided_slice %175 {offsets = [0, 1, 0], sizes = [2, 1, 20], strides = [1, 1, 1]} : vector<2x2x20xf32> to vector<2x1x20xf32>
      %437 = vector.shape_cast %436 : vector<2x1x20xf32> to vector<2x20xf32>
      %438 = vector.broadcast %435 : f32 to vector<2x20xf32>
      %439 = arith.mulf %438, %437 : vector<2x20xf32>
      %440 = arith.addf %434, %439 : vector<2x20xf32>
      %c2_117 = arith.constant 2 : index
      %c11_118 = arith.constant 11 : index
      %441 = memref.load %arg3[%c2_117, %c11_118] : memref<3x12xf32, #tpu.memory_space<smem>>
      %442 = vector.extract_strided_slice %178 {offsets = [0, 1, 0], sizes = [2, 1, 20], strides = [1, 1, 1]} : vector<2x2x20xf32> to vector<2x1x20xf32>
      %443 = vector.shape_cast %442 : vector<2x1x20xf32> to vector<2x20xf32>
      %444 = vector.broadcast %441 : f32 to vector<2x20xf32>
      %445 = arith.mulf %444, %443 : vector<2x20xf32>
      %446 = arith.addf %440, %445 : vector<2x20xf32>
      %c2_119 = arith.constant 2 : index
      %c1_120 = arith.constant 1 : index
      %447 = memref.load %arg4[%c2_119, %c1_120] : memref<3x2xf32, #tpu.memory_space<smem>>
      %448 = vector.broadcast %447 : f32 to vector<2x20xf32>
      %449 = arith.mulf %446, %448 : vector<2x20xf32>
      %c2_121 = arith.constant 2 : index
      %c1_122 = arith.constant 1 : index
      %450 = memref.load %arg5[%c2_121, %c1_122] : memref<3x2xf32, #tpu.memory_space<smem>>
      %451 = vector.broadcast %450 : f32 to vector<2x20xf32>
      %452 = arith.addf %449, %451 : vector<2x20xf32>
      %cst_123 = arith.constant 0.000000e+00 : f32
      %453 = vector.broadcast %cst_123 : f32 to vector<2x20xf32>
      %454 = arith.maximumf %452, %453 : vector<2x20xf32>
      %c0_124 = arith.constant 0 : index
      %c0_125 = arith.constant 0 : index
      %455 = memref.load %arg6[%c0_124, %c0_125] : memref<3x6xf32, #tpu.memory_space<smem>>
      %456 = vector.broadcast %455 : f32 to vector<2x20xf32>
      %457 = arith.mulf %456, %224 : vector<2x20xf32>
      %c0_126 = arith.constant 0 : index
      %c1_127 = arith.constant 1 : index
      %458 = memref.load %arg6[%c0_126, %c1_127] : memref<3x6xf32, #tpu.memory_space<smem>>
      %459 = vector.broadcast %458 : f32 to vector<2x20xf32>
      %460 = arith.mulf %459, %270 : vector<2x20xf32>
      %461 = arith.addf %457, %460 : vector<2x20xf32>
      %c0_128 = arith.constant 0 : index
      %c2_129 = arith.constant 2 : index
      %462 = memref.load %arg6[%c0_128, %c2_129] : memref<3x6xf32, #tpu.memory_space<smem>>
      %463 = vector.broadcast %462 : f32 to vector<2x20xf32>
      %464 = arith.mulf %463, %316 : vector<2x20xf32>
      %465 = arith.addf %461, %464 : vector<2x20xf32>
      %c0_130 = arith.constant 0 : index
      %c3_131 = arith.constant 3 : index
      %466 = memref.load %arg6[%c0_130, %c3_131] : memref<3x6xf32, #tpu.memory_space<smem>>
      %467 = vector.broadcast %466 : f32 to vector<2x20xf32>
      %468 = arith.mulf %467, %362 : vector<2x20xf32>
      %469 = arith.addf %465, %468 : vector<2x20xf32>
      %c0_132 = arith.constant 0 : index
      %c4_133 = arith.constant 4 : index
      %470 = memref.load %arg6[%c0_132, %c4_133] : memref<3x6xf32, #tpu.memory_space<smem>>
      %471 = vector.broadcast %470 : f32 to vector<2x20xf32>
      %472 = arith.mulf %471, %408 : vector<2x20xf32>
      %473 = arith.addf %469, %472 : vector<2x20xf32>
      %c0_134 = arith.constant 0 : index
      %c5_135 = arith.constant 5 : index
      %474 = memref.load %arg6[%c0_134, %c5_135] : memref<3x6xf32, #tpu.memory_space<smem>>
      %475 = vector.broadcast %474 : f32 to vector<2x20xf32>
      %476 = arith.mulf %475, %454 : vector<2x20xf32>
      %477 = arith.addf %473, %476 : vector<2x20xf32>
      %c0_136 = arith.constant 0 : index
      %478 = memref.load %arg7[%c0_136] : memref<3xf32, #tpu.memory_space<smem>>
      %479 = vector.broadcast %478 : f32 to vector<2x20xf32>
      %480 = arith.addf %477, %479 : vector<2x20xf32>
      %cst_137 = arith.constant 0.000000e+00 : f32
      %481 = vector.broadcast %cst_137 : f32 to vector<2x20xf32>
      %482 = arith.maximumf %480, %481 : vector<2x20xf32>
      %c1_138 = arith.constant 1 : index
      %c0_139 = arith.constant 0 : index
      %483 = memref.load %arg6[%c1_138, %c0_139] : memref<3x6xf32, #tpu.memory_space<smem>>
      %484 = vector.broadcast %483 : f32 to vector<2x20xf32>
      %485 = arith.mulf %484, %224 : vector<2x20xf32>
      %c1_140 = arith.constant 1 : index
      %c1_141 = arith.constant 1 : index
      %486 = memref.load %arg6[%c1_140, %c1_141] : memref<3x6xf32, #tpu.memory_space<smem>>
      %487 = vector.broadcast %486 : f32 to vector<2x20xf32>
      %488 = arith.mulf %487, %270 : vector<2x20xf32>
      %489 = arith.addf %485, %488 : vector<2x20xf32>
      %c1_142 = arith.constant 1 : index
      %c2_143 = arith.constant 2 : index
      %490 = memref.load %arg6[%c1_142, %c2_143] : memref<3x6xf32, #tpu.memory_space<smem>>
      %491 = vector.broadcast %490 : f32 to vector<2x20xf32>
      %492 = arith.mulf %491, %316 : vector<2x20xf32>
      %493 = arith.addf %489, %492 : vector<2x20xf32>
      %c1_144 = arith.constant 1 : index
      %c3_145 = arith.constant 3 : index
      %494 = memref.load %arg6[%c1_144, %c3_145] : memref<3x6xf32, #tpu.memory_space<smem>>
      %495 = vector.broadcast %494 : f32 to vector<2x20xf32>
      %496 = arith.mulf %495, %362 : vector<2x20xf32>
      %497 = arith.addf %493, %496 : vector<2x20xf32>
      %c1_146 = arith.constant 1 : index
      %c4_147 = arith.constant 4 : index
      %498 = memref.load %arg6[%c1_146, %c4_147] : memref<3x6xf32, #tpu.memory_space<smem>>
      %499 = vector.broadcast %498 : f32 to vector<2x20xf32>
      %500 = arith.mulf %499, %408 : vector<2x20xf32>
      %501 = arith.addf %497, %500 : vector<2x20xf32>
      %c1_148 = arith.constant 1 : index
      %c5_149 = arith.constant 5 : index
      %502 = memref.load %arg6[%c1_148, %c5_149] : memref<3x6xf32, #tpu.memory_space<smem>>
      %503 = vector.broadcast %502 : f32 to vector<2x20xf32>
      %504 = arith.mulf %503, %454 : vector<2x20xf32>
      %505 = arith.addf %501, %504 : vector<2x20xf32>
      %c1_150 = arith.constant 1 : index
      %506 = memref.load %arg7[%c1_150] : memref<3xf32, #tpu.memory_space<smem>>
      %507 = vector.broadcast %506 : f32 to vector<2x20xf32>
      %508 = arith.addf %505, %507 : vector<2x20xf32>
      %cst_151 = arith.constant 0.000000e+00 : f32
      %509 = vector.broadcast %cst_151 : f32 to vector<2x20xf32>
      %510 = arith.maximumf %508, %509 : vector<2x20xf32>
      %c2_152 = arith.constant 2 : index
      %c0_153 = arith.constant 0 : index
      %511 = memref.load %arg6[%c2_152, %c0_153] : memref<3x6xf32, #tpu.memory_space<smem>>
      %512 = vector.broadcast %511 : f32 to vector<2x20xf32>
      %513 = arith.mulf %512, %224 : vector<2x20xf32>
      %c2_154 = arith.constant 2 : index
      %c1_155 = arith.constant 1 : index
      %514 = memref.load %arg6[%c2_154, %c1_155] : memref<3x6xf32, #tpu.memory_space<smem>>
      %515 = vector.broadcast %514 : f32 to vector<2x20xf32>
      %516 = arith.mulf %515, %270 : vector<2x20xf32>
      %517 = arith.addf %513, %516 : vector<2x20xf32>
      %c2_156 = arith.constant 2 : index
      %c2_157 = arith.constant 2 : index
      %518 = memref.load %arg6[%c2_156, %c2_157] : memref<3x6xf32, #tpu.memory_space<smem>>
      %519 = vector.broadcast %518 : f32 to vector<2x20xf32>
      %520 = arith.mulf %519, %316 : vector<2x20xf32>
      %521 = arith.addf %517, %520 : vector<2x20xf32>
      %c2_158 = arith.constant 2 : index
      %c3_159 = arith.constant 3 : index
      %522 = memref.load %arg6[%c2_158, %c3_159] : memref<3x6xf32, #tpu.memory_space<smem>>
      %523 = vector.broadcast %522 : f32 to vector<2x20xf32>
      %524 = arith.mulf %523, %362 : vector<2x20xf32>
      %525 = arith.addf %521, %524 : vector<2x20xf32>
      %c2_160 = arith.constant 2 : index
      %c4_161 = arith.constant 4 : index
      %526 = memref.load %arg6[%c2_160, %c4_161] : memref<3x6xf32, #tpu.memory_space<smem>>
      %527 = vector.broadcast %526 : f32 to vector<2x20xf32>
      %528 = arith.mulf %527, %408 : vector<2x20xf32>
      %529 = arith.addf %525, %528 : vector<2x20xf32>
      %c2_162 = arith.constant 2 : index
      %c5_163 = arith.constant 5 : index
      %530 = memref.load %arg6[%c2_162, %c5_163] : memref<3x6xf32, #tpu.memory_space<smem>>
      %531 = vector.broadcast %530 : f32 to vector<2x20xf32>
      %532 = arith.mulf %531, %454 : vector<2x20xf32>
      %533 = arith.addf %529, %532 : vector<2x20xf32>
      %c2_164 = arith.constant 2 : index
      %534 = memref.load %arg7[%c2_164] : memref<3xf32, #tpu.memory_space<smem>>
      %535 = vector.broadcast %534 : f32 to vector<2x20xf32>
      %536 = arith.addf %533, %535 : vector<2x20xf32>
      %cst_165 = arith.constant 0.000000e+00 : f32
      %537 = vector.broadcast %cst_165 : f32 to vector<2x20xf32>
      %538 = arith.maximumf %536, %537 : vector<2x20xf32>
      %539 = vector.shape_cast %482 : vector<2x20xf32> to vector<2x1x20xf32>
      %540 = vector.shape_cast %510 : vector<2x20xf32> to vector<2x1x20xf32>
      %541 = vector.shape_cast %538 : vector<2x20xf32> to vector<2x1x20xf32>
      %542 = tpu.concatenate %539, %540, %541 in 1 : vector<2x1x20xf32>, vector<2x1x20xf32>, vector<2x1x20xf32> -> vector<2x3x20xf32>
      %c0_166 = arith.constant 0 : index
      %c0_167 = arith.constant 0 : index
      %c0_168 = arith.constant 0 : index
      %543 = vector.load %arg8[%c0_166, %c0_167, %c0_168] : memref<2x3x20xf32, #tpu.memory_space<vmem>>, vector<2x3x20xf32>
      tpu.vector_store %arg8[%c0_166, %c0_167, %c0_168], %542 {strides = array<i32>} : memref<2x3x20xf32, #tpu.memory_space<vmem>>, vector<2x3x20xf32>,
    } else {
    }
    return
  }
  func.func @transform_0(%arg0: i32, %arg1: i32) -> (i32, i32, i32, i32) {
    %c0_i32 = arith.constant 0 : i32
    %c0_i32_0 = arith.constant 0 : i32
    %c0_i32_1 = arith.constant 0 : i32
    return %arg0, %c0_i32, %arg1, %c0_i32_0 : i32, i32, i32, i32
  }
  func.func @transform_1(%arg0: i32, %arg1: i32) -> (i32, i32) {
    %c0_i32 = arith.constant 0 : i32
    %c0_i32_0 = arith.constant 0 : i32
    %c0_i32_1 = arith.constant 0 : i32
    return %c0_i32, %c0_i32_0 : i32, i32
  }
  func.func @transform_2(%arg0: i32, %arg1: i32) -> (i32, i32) {
    %c0_i32 = arith.constant 0 : i32
    %c0_i32_0 = arith.constant 0 : i32
    %c0_i32_1 = arith.constant 0 : i32
    return %c0_i32, %c0_i32_0 : i32, i32
  }
  func.func @transform_3(%arg0: i32, %arg1: i32) -> (i32, i32) {
    %c0_i32 = arith.constant 0 : i32
    %c0_i32_0 = arith.constant 0 : i32
    %c0_i32_1 = arith.constant 0 : i32
    return %c0_i32, %c0_i32_0 : i32, i32
  }
  func.func @transform_4(%arg0: i32, %arg1: i32) -> (i32, i32) {
    %c0_i32 = arith.constant 0 : i32
    %c0_i32_0 = arith.constant 0 : i32
    %c0_i32_1 = arith.constant 0 : i32
    return %c0_i32, %c0_i32_0 : i32, i32
  }
  func.func @transform_5(%arg0: i32, %arg1: i32) -> i32 {
    %c0_i32 = arith.constant 0 : i32
    %c0_i32_0 = arith.constant 0 : i32
    return %c0_i32 : i32
  }
  func.func @transform_6(%arg0: i32, %arg1: i32) -> (i32, i32, i32) {
    %c0_i32 = arith.constant 0 : i32
    %c0_i32_0 = arith.constant 0 : i32
    %c0_i32_1 = arith.constant 0 : i32
    return %arg0, %c0_i32, %c0_i32_0 : i32, i32, i32
  }
}

</mosaic_0001>

<llo_original>
// kernel: tpu_custom_call.1
$region0: #{tpu_custom_call.1}
  #allocation0 [shape = 'u32[]', space=smem, size = 0x4, offset = 0x4, fixed_abs, tag = 'smem constant byte address 0x4 - core index']
  #allocation1 [shape = 'u32[144,128]{1,0:T(1,128)}', space=vmem, size = 0x12000, scoped, tag = 'internal scratch']
  #allocation2 [shape = 'f32[2,2,1,1920]{3,2,1,0:T(1,128)}', space=vmem, size = 0x7800, scoped, tag = 'scratch operand']
  %s0 = inlined_call_operand.hbm [shape: f32[4,2,1,1920], index: 0, kind: input, shape index: {}]
  %s1 = inlined_call_operand.vmem [shape: f32[3,12], index: 1, kind: input, shape index: {}]
  %s2 = inlined_call_operand.vmem [shape: f32[3,2], index: 2, kind: input, shape index: {}]
  %s3 = inlined_call_operand.vmem [shape: f32[3,2], index: 3, kind: input, shape index: {}]
  %s4 = inlined_call_operand.vmem [shape: f32[3,6], index: 4, kind: input, shape index: {}]
  %s5 = inlined_call_operand.vmem [shape: f32[3], index: 5, kind: input, shape index: {}]
  %s6 = inlined_call_operand.vmem [shape: f32[4,3,20], index: 6, kind: output, shape index: {}]
  %s7 = sld [smem:[#allocation0]]
  $region93: #{tpu_custom_call.1} parent=0
    _
  %s9 = ssub.s32 1, %s7
  %s10 = scalar_select 0, %s9, %s7
  $region1: #{tpu_custom_call.1} parent=0
    #allocation3 [shape = 'u8[61440]{0}', space=vmem, size = 0xf000, scoped, tag = 'input window, operand 0']
    #allocation4 [shape = 's32[2]{0}', space=sflag, size = 0x8, scoped, tag = 'scoped memory for tpu_custom_call.1']
    #allocation5 [shape = 's32[2]{0}', space=sflag, size = 0x8, scoped, tag = 'scoped memory for tpu_custom_call.1']
    #allocation6 [shape = 'u8[2048]{0}', space=smem, size = 0x800, scoped, tag = 'input window, operand 1, single buffered']
    #allocation7 [shape = 'u8[2048]{0}', space=smem, size = 0x800, scoped, tag = 'input window, operand 2, single buffered']
    #allocation8 [shape = 's32[1]{0}', space=sflag, size = 0x4, scoped, tag = 'scoped memory for tpu_custom_call.1']
    #allocation9 [shape = 'u8[2048]{0}', space=smem, size = 0x800, scoped, tag = 'input window, operand 3, single buffered']
    #allocation10 [shape = 'u8[2048]{0}', space=smem, size = 0x800, scoped, tag = 'input window, operand 4, single buffered']
    #allocation11 [shape = 's32[1]{0}', space=sflag, size = 0x4, scoped, tag = 'scoped memory for tpu_custom_call.1']
    #allocation12 [shape = 'u8[512]{0}', space=smem, size = 0x200, scoped, tag = 'input window, operand 5, single buffered']
    %11 = vsyncpa [#allocation4], 0
    %s12 = scalar_lea.sflag [#allocation4], 1
    %13 = vsyncpa %s12, 0
    %14 = vsyncpa [#allocation5], 0
    %15 = vsyncpa [#allocation8], 0
    %16 = vsyncpa [#allocation11], 0
    loop: start=0, step=1, limit=4
    $region2: #{tpu_custom_call.1} parent=1 // loop_pre_header
      _
    $region3: #{tpu_custom_call.1} parent=1 // loop_header
      %s18 = sphi 0, %s22
      %p19 = scmp.ge.s32.totalorder %s18, 4
      %s25 = sphi 0, %s37
      %s26 = sphi 0, %s33
      %s27 = sphi 0, %s25
      %s28 = sphi 0, %s26
      %s29 = sphi 0, %s27
      %s30 = sphi 0, %s28
      %s42 = sphi 0, %s44
      %s45 = sphi 0, %s42
      %s46 = sphi 0, %s45
      %s62 = sphi 0, %s46
      %s66 = sphi 0, %s66
      %s68 = sphi 0, %s66
      %s69 = sphi 0, %s68
      %s83 = sphi 0, %s69
      %s87 = sphi 0, %s87
      %s89 = sphi 0, %s87
      %s90 = sphi 0, %s89
      %s104 = sphi 0, %s90
      %s108 = sphi 0, %s108
      %s110 = sphi 0, %s108
      %s111 = sphi 0, %s110
      %s125 = sphi 0, %s111
      %s129 = sphi 0, %s129
      %s131 = sphi 0, %s129
      %s132 = sphi 0, %s131
      %s146 = sphi 0, %s132
      %s150 = sphi 0, %s150
      %s152 = sphi 0, %s150
      %s153 = sphi 0, %s152
      %s167 = sphi 0, %s153
      %s173 = sphi 0, %s175
      %s176 = sphi 0, %s173
      %s177 = sphi 0, %s176
      %s193 = sphi 0, %s177
    $region4: #{tpu_custom_call.1} parent=1 // loop_header_branch
      %21 = sbr.rel (%p19) target = $region8
    $region5: #{tpu_custom_call.1} parent=1 // loop_body
      %s23 = ssub.s32 %s18, 1
      %s24 = ssub.s32 %s18, 2
      %s31 = sadd.s32 1, %s26
      %p32 = scmp.ge.s32.totalorder %s31, 1
      %s33 = scalar_select %p32, 0, %s31
      %s34 = sadd.s32 1, %s25
      %s35 = scalar_select %p32, %s34, %s25
      %p36 = scmp.ge.s32.totalorder %s35, 2
      %s37 = scalar_select %p36, 0, %s35
      %s38 = ssub.s32 %s25, %s37
      %s39 = ssub.s32 %s26, %s33
      %s40 = sor.u32 %s38, %s39
      %p41 = scmp.eq.s32.totalorder %s40, 0
      %s43 = sadd.s32 %s42, 1
      %s44 = scalar_select %p41, %s42, %s43
      %p47 = pneg %p41
      %p48 = scmp.eq.s32.totalorder %s18, 1
      %p49 = por %p47, %p48
      %p50 = scmp.ne.s32.totalorder %s42, %s45
      %p51 = scmp.eq.s32.totalorder %s18, 0
      %p52 = por %p50, %p51
      %p53 = scmp.ne.s32.totalorder %s42, %s45
      %p54 = scmp.eq.s32.totalorder %s23, 1
      %p55 = por %p53, %p54
      %p56 = scmp.ne.s32.totalorder %s45, %s46
      %p57 = scmp.eq.s32.totalorder %s23, 0
      %p58 = por %p56, %p57
      %p59 = scmp.ne.s32.totalorder %s45, %s46
      %p60 = scmp.eq.s32.totalorder %s24, 1
      %p61 = por %p59, %p60
      %p63 = scmp.ne.s32.totalorder %s46, %s62
      %p64 = scmp.eq.s32.totalorder %s24, 0
      %p65 = por %p63, %p64
      %s67 = sadd.s32 %s66, 1
      %p70 = scmp.eq.s32.totalorder %s18, 1
      %p71 = scmp.ne.s32.totalorder %s66, %s68
      %p72 = scmp.eq.s32.totalorder %s18, 0
      %p73 = por %p71, %p72
      %p74 = scmp.ne.s32.totalorder %s66, %s68
      %p75 = scmp.eq.s32.totalorder %s23, 1
      %p76 = por %p74, %p75
      %p77 = scmp.ne.s32.totalorder %s68, %s69
      %p78 = scmp.eq.s32.totalorder %s23, 0
      %p79 = por %p77, %p78
      %p80 = scmp.ne.s32.totalorder %s68, %s69
      %p81 = scmp.eq.s32.totalorder %s24, 1
      %p82 = por %p80, %p81
      %p84 = scmp.ne.s32.totalorder %s69, %s83
      %p85 = scmp.eq.s32.totalorder %s24, 0
      %p86 = por %p84, %p85
      %s88 = sadd.s32 %s87, 1
      %p91 = scmp.eq.s32.totalorder %s18, 1
      %p92 = scmp.ne.s32.totalorder %s87, %s89
      %p93 = scmp.eq.s32.totalorder %s18, 0
      %p94 = por %p92, %p93
      %p95 = scmp.ne.s32.totalorder %s87, %s89
      %p96 = scmp.eq.s32.totalorder %s23, 1
      %p97 = por %p95, %p96
      %p98 = scmp.ne.s32.totalorder %s89, %s90
      %p99 = scmp.eq.s32.totalorder %s23, 0
      %p100 = por %p98, %p99
      %p101 = scmp.ne.s32.totalorder %s89, %s90
      %p102 = scmp.eq.s32.totalorder %s24, 1
      %p103 = por %p101, %p102
      %p105 = scmp.ne.s32.totalorder %s90, %s104
      %p106 = scmp.eq.s32.totalorder %s24, 0
      %p107 = por %p105, %p106
      %s109 = sadd.s32 %s108, 1
      %p112 = scmp.eq.s32.totalorder %s18, 1
      %p113 = scmp.ne.s32.totalorder %s108, %s110
      %p114 = scmp.eq.s32.totalorder %s18, 0
      %p115 = por %p113, %p114
      %p116 = scmp.ne.s32.totalorder %s108, %s110
      %p117 = scmp.eq.s32.totalorder %s23, 1
      %p118 = por %p116, %p117
      %p119 = scmp.ne.s32.totalorder %s110, %s111
      %p120 = scmp.eq.s32.totalorder %s23, 0
      %p121 = por %p119, %p120
      %p122 = scmp.ne.s32.totalorder %s110, %s111
      %p123 = scmp.eq.s32.totalorder %s24, 1
      %p124 = por %p122, %p123
      %p126 = scmp.ne.s32.totalorder %s111, %s125
      %p127 = scmp.eq.s32.totalorder %s24, 0
      %p128 = por %p126, %p127
      %s130 = sadd.s32 %s129, 1
      %p133 = scmp.eq.s32.totalorder %s18, 1
      %p134 = scmp.ne.s32.totalorder %s129, %s131
      %p135 = scmp.eq.s32.totalorder %s18, 0
      %p136 = por %p134, %p135
      %p137 = scmp.ne.s32.totalorder %s129, %s131
      %p138 = scmp.eq.s32.totalorder %s23, 1
      %p139 = por %p137, %p138
      %p140 = scmp.ne.s32.totalorder %s131, %s132
      %p141 = scmp.eq.s32.totalorder %s23, 0
      %p142 = por %p140, %p141
      %p143 = scmp.ne.s32.totalorder %s131, %s132
      %p144 = scmp.eq.s32.totalorder %s24, 1
      %p145 = por %p143, %p144
      %p147 = scmp.ne.s32.totalorder %s132, %s146
      %p148 = scmp.eq.s32.totalorder %s24, 0
      %p149 = por %p147, %p148
      %s151 = sadd.s32 %s150, 1
      %p154 = scmp.eq.s32.totalorder %s18, 1
      %p155 = scmp.ne.s32.totalorder %s150, %s152
      %p156 = scmp.eq.s32.totalorder %s18, 0
      %p157 = por %p155, %p156
      %p158 = scmp.ne.s32.totalorder %s150, %s152
      %p159 = scmp.eq.s32.totalorder %s23, 1
      %p160 = por %p158, %p159
      %p161 = scmp.ne.s32.totalorder %s152, %s153
      %p162 = scmp.eq.s32.totalorder %s23, 0
      %p163 = por %p161, %p162
      %p164 = scmp.ne.s32.totalorder %s152, %s153
      %p165 = scmp.eq.s32.totalorder %s24, 1
      %p166 = por %p164, %p165
      %p168 = scmp.ne.s32.totalorder %s153, %s167
      %p169 = scmp.eq.s32.totalorder %s24, 0
      %p170 = por %p168, %p169
      %s171 = ssub.s32 %s25, %s37
      %p172 = scmp.eq.s32.totalorder %s171, 0
      %s174 = sadd.s32 %s173, 1
      %s175 = scalar_select %p172, %s173, %s174
      %p178 = pneg %p172
      %p179 = scmp.eq.s32.totalorder %s18, 1
      %p180 = por %p178, %p179
      %p181 = scmp.ne.s32.totalorder %s173, %s176
      %p182 = scmp.eq.s32.totalorder %s18, 0
      %p183 = por %p181, %p182
      %p184 = scmp.ne.s32.totalorder %s173, %s176
      %p185 = scmp.eq.s32.totalorder %s23, 1
      %p186 = por %p184, %p185
      %p187 = scmp.ne.s32.totalorder %s176, %s177
      %p188 = scmp.eq.s32.totalorder %s23, 0
      %p189 = por %p187, %p188
      %p190 = scmp.ne.s32.totalorder %s176, %s177
      %p191 = scmp.eq.s32.totalorder %s24, 1
      %p192 = por %p190, %p191
      %p194 = scmp.ne.s32.totalorder %s177, %s193
      %p195 = scmp.eq.s32.totalorder %s24, 0
      %p196 = por %p194, %p195
      %p197 = scmp.le.s32.totalorder 1, %s18
      %p198 = scmp.lt.s32.totalorder %s18, 3
      %p199 = pnand %p197, %p198
      %p200 = pneg %p199
      // Predicated region
      $region9: #{tpu_custom_call.1} parent=5 // pred_check
        _
      $region10: #{tpu_custom_call.1} parent=5 // pred_check_branch
        %202 = sbr.rel (%p199) target = $region12
      $region11: #{tpu_custom_call.1} parent=5 // pred_region
        %s203 = ssub.s32 %s18, 1
        // Predicated region
        $region13: #{tpu_custom_call.1} parent=11 // pred_check
          %p204 = pneg %p79
        $region14: #{tpu_custom_call.1} parent=11 // pred_check_branch
          %206 = sbr.rel (%p204) target = $region16
        $region15: #{tpu_custom_call.1} parent=11 // pred_region
          %s208 = ssub.s32 64, 64
          %209 = vsyncadd [#allocation5], %s208
          %s211 = sshll.u32 %s1, 4
          %s212 = int_to_ptr.vmem [resolvable:$true] %s211
          %214 = dma.vmem_to_smem %s212, 64, [#allocation6], [#allocation5]
        $region16: #{tpu_custom_call.1} parent=11 // pred_fallthru
          _
        // Predicated region
        $region17: #{tpu_custom_call.1} parent=11 // pred_check
          %p215 = pneg %p100
        $region18: #{tpu_custom_call.1} parent=11 // pred_check_branch
          %217 = sbr.rel (%p215) target = $region20
        $region19: #{tpu_custom_call.1} parent=11 // pred_region
          %s219 = ssub.s32 64, 64
          %220 = vsyncadd [#allocation8], %s219
          %s222 = sshll.u32 %s2, 4
          %s223 = int_to_ptr.vmem [resolvable:$true] %s222
          %225 = dma.vmem_to_smem %s223, 64, [#allocation7], [#allocation8]
        $region20: #{tpu_custom_call.1} parent=11 // pred_fallthru
          _
        // Predicated region
        $region21: #{tpu_custom_call.1} parent=11 // pred_check
          %p226 = pneg %p121
        $region22: #{tpu_custom_call.1} parent=11 // pred_check_branch
          %228 = sbr.rel (%p226) target = $region24
        $region23: #{tpu_custom_call.1} parent=11 // pred_region
          %s230 = ssub.s32 64, 64
          %231 = vsyncadd [#allocation8], %s230
          %s233 = sshll.u32 %s3, 4
          %s234 = int_to_ptr.vmem [resolvable:$true] %s233
          %236 = dma.vmem_to_smem %s234, 64, [#allocation9], [#allocation8]
        $region24: #{tpu_custom_call.1} parent=11 // pred_fallthru
          _
        // Predicated region
        $region25: #{tpu_custom_call.1} parent=11 // pred_check
          %p237 = pneg %p142
        $region26: #{tpu_custom_call.1} parent=11 // pred_check_branch
          %239 = sbr.rel (%p237) target = $region28
        $region27: #{tpu_custom_call.1} parent=11 // pred_region
          %s241 = ssub.s32 64, 64
          %242 = vsyncadd [#allocation11], %s241
          %s244 = sshll.u32 %s4, 4
          %s245 = int_to_ptr.vmem [resolvable:$true] %s244
          %247 = dma.vmem_to_smem %s245, 64, [#allocation10], [#allocation11]
        $region28: #{tpu_custom_call.1} parent=11 // pred_fallthru
          _
        // Predicated region
        $region29: #{tpu_custom_call.1} parent=11 // pred_check
          %p248 = pneg %p163
        $region30: #{tpu_custom_call.1} parent=11 // pred_check_branch
          %250 = sbr.rel (%p248) target = $region32
        $region31: #{tpu_custom_call.1} parent=11 // pred_region
          %s252 = ssub.s32 16, 16
          %253 = vsyncadd [#allocation11], %s252
          %s255 = sshll.u32 %s5, 4
          %s256 = int_to_ptr.vmem [resolvable:$true] %s255
          %258 = dma.vmem_to_smem %s256, 16, [#allocation12], [#allocation11]
        $region32: #{tpu_custom_call.1} parent=11 // pred_fallthru
          _
      $region12: #{tpu_custom_call.1} parent=5 // pred_fallthru
        _
      %p259 = scmp.lt.s32.totalorder %s18, 2
      // Predicated region
      $region33: #{tpu_custom_call.1} parent=5 // pred_check
        %p260 = pneg %p259
      $region34: #{tpu_custom_call.1} parent=5 // pred_check_branch
        %262 = sbr.rel (%p260) target = $region36
      $region35: #{tpu_custom_call.1} parent=5 // pred_region
        // Predicated region
        $region37: #{tpu_custom_call.1} parent=35 // pred_check
          %p263 = pneg %p52
        $region38: #{tpu_custom_call.1} parent=35 // pred_check_branch
          %265 = sbr.rel (%p263) target = $region40
        $region39: #{tpu_custom_call.1} parent=35 // pred_region
          %s266 = sand.u32 %s42, 1
          %s267 = scalar_lea.sflag [#allocation4], %s266
          %s268 = sand.u32 %s42, 1
          %s269 = smul.addr %s268, 60
          %s270 = scalar_lea.vmem [#allocation3], %s269
          %s271 = smul.u32 2, %s25
          %s273 = ssub.s32 960, 960
          %274 = vsyncadd %s267, %s273
          %s275 = smul.addr %s26, 15
          %s276 = smul.addr %s271, 30
          %s277 = sadd.s32 %s275, %s276
          %s278 = smul.addr %s277, 16
          %s279 = scalar_lea.hbm %s0, %s278
          %s280 = sshll.u32 %s270, 4
          %s281 = int_to_ptr.vmem [resolvable:$true] %s280
          %286 = dma.hbm_to_vmem [thread:$0]  %s279, 960, %s281, %s267, 240, 240, 15
        $region40: #{tpu_custom_call.1} parent=35 // pred_fallthru
          _
      $region36: #{tpu_custom_call.1} parent=5 // pred_fallthru
        _
      %p287 = scmp.le.s32.totalorder 1, %s18
      %p288 = scmp.lt.s32.totalorder %s18, 3
      %p289 = pnand %p287, %p288
      %p290 = pneg %p289
      // Predicated region
      $region41: #{tpu_custom_call.1} parent=5 // pred_check
        _
      $region42: #{tpu_custom_call.1} parent=5 // pred_check_branch
        %292 = sbr.rel (%p289) target = $region44
      $region43: #{tpu_custom_call.1} parent=5 // pred_region
        %s293 = ssub.s32 %s18, 1
        %s294 = sand.u32 %s45, 1
        %s295 = scalar_lea.sflag [#allocation4], %s294
        %s296 = sand.u32 %s45, 1
        %s297 = smul.addr %s296, 60
        %s298 = scalar_lea.vmem [#allocation3], %s297
        // Predicated region
        $region45: #{tpu_custom_call.1} parent=43 // pred_check
          %p299 = pneg %p58
        $region46: #{tpu_custom_call.1} parent=43 // pred_check_branch
          %301 = sbr.rel (%p299) target = $region48
        $region47: #{tpu_custom_call.1} parent=43 // pred_region
          %302 = dma.done %s295, 960
        $region48: #{tpu_custom_call.1} parent=43 // pred_fallthru
          _
        // Predicated region
        $region49: #{tpu_custom_call.1} parent=43 // pred_check
          %p303 = pneg %p79
        $region50: #{tpu_custom_call.1} parent=43 // pred_check_branch
          %305 = sbr.rel (%p303) target = $region52
        $region51: #{tpu_custom_call.1} parent=43 // pred_region
          %306 = dma.done [#allocation5], 64
        $region52: #{tpu_custom_call.1} parent=43 // pred_fallthru
          _
        // Predicated region
        $region53: #{tpu_custom_call.1} parent=43 // pred_check
          %p307 = pneg %p100
        $region54: #{tpu_custom_call.1} parent=43 // pred_check_branch
          %309 = sbr.rel (%p307) target = $region56
        $region55: #{tpu_custom_call.1} parent=43 // pred_region
          %310 = dma.done [#allocation8], 64
        $region56: #{tpu_custom_call.1} parent=43 // pred_fallthru
          _
        // Predicated region
        $region57: #{tpu_custom_call.1} parent=43 // pred_check
          %p311 = pneg %p121
        $region58: #{tpu_custom_call.1} parent=43 // pred_check_branch
          %313 = sbr.rel (%p311) target = $region60
        $region59: #{tpu_custom_call.1} parent=43 // pred_region
          %314 = dma.done [#allocation8], 64
        $region60: #{tpu_custom_call.1} parent=43 // pred_fallthru
          _
        // Predicated region
        $region61: #{tpu_custom_call.1} parent=43 // pred_check
          %p315 = pneg %p142
        $region62: #{tpu_custom_call.1} parent=43 // pred_check_branch
          %317 = sbr.rel (%p315) target = $region64
        $region63: #{tpu_custom_call.1} parent=43 // pred_region
          %318 = dma.done [#allocation11], 64
        $region64: #{tpu_custom_call.1} parent=43 // pred_fallthru
          _
        // Predicated region
        $region65: #{tpu_custom_call.1} parent=43 // pred_check
          %p319 = pneg %p163
        $region66: #{tpu_custom_call.1} parent=43 // pred_check_branch
          %321 = sbr.rel (%p319) target = $region68
        $region67: #{tpu_custom_call.1} parent=43 // pred_region
          %322 = dma.done [#allocation11], 16
        $region68: #{tpu_custom_call.1} parent=43 // pred_fallthru
          _
        %323 = sfence
        %s324 = sand.u32 %s45, 1
        %s325 = scalar_lea.sflag [#allocation4], %s324
        %s326 = sand.u32 %s45, 1
        %s327 = smul.addr %s326, 60
        %s328 = scalar_lea.vmem [#allocation3], %s327
        %p329 = pneg %p58
        %p330 = pneg %p55
        %p331 = pneg %p79
        %p332 = pneg %p76
        %p333 = pneg %p100
        %p334 = pneg %p97
        %p335 = pneg %p121
        %p336 = pneg %p118
        %p337 = pneg %p142
        %p338 = pneg %p139
        %p339 = pneg %p163
        %p340 = pneg %p160
        %p341 = pneg %p189
        %p342 = pneg %p186
        %s343 = smul.u32 2, %s27
        %p344 = scmp.lt.s32.totalorder %s343, 3
        %s345 = scalar_select %p344, %s343, 3
        %s346 = smul.addr %s345, 4
        %s347 = scalar_lea.vmem %s6, %s346
        %s348 = smul.u32 2, %s27
        %s349 = smul.u32 2, %s27
        %p350 = scmp.lt.s32.totalorder %s349, 3
        %s351 = scalar_select %p350, %s349, 3
        %s352 = smul.addr %s351, 4
        %s353 = scalar_lea.vmem %s6, %s352
        %s354 = smul.u32 2, %s27
        %v355 = vld [vmem:[%s298] sm:$0xff]
        %v356 = vld [vmem:[%s298 + $0x8] sm:$0xff]
        %v357 = vld [vmem:[%s298 + $0xf] sm:$0xff]
        %v358 = vld [vmem:[%s298 + $0x17] sm:$0xff]
        %v359 = vld [vmem:[%s298 + $0x1e] sm:$0xff]
        %v360 = vld [vmem:[%s298 + $0x26] sm:$0xff]
        %v361 = vld [vmem:[%s298 + $0x2d] sm:$0xff]
        %v362 = vld [vmem:[%s298 + $0x35] sm:$0xff]
        %p363 = scmp.eq.s32.totalorder %s28, 0
        // Predicated region
        $region69: #{tpu_custom_call.1} parent=43 // pred_check
          %p364 = pneg %p363
        $region70: #{tpu_custom_call.1} parent=43 // pred_check_branch
          %366 = sbr.rel (%p364) target = $region72
        $region71: #{tpu_custom_call.1} parent=43 // pred_region
          %367 = vst [vmem:[#allocation2] sm:$0xff] %v355
          %v368 = vlaneseq
          %vm369 = vcmp.ge.s32.totalorder %v368, 0
          %vm370 = vcmp.lt.s32.totalorder %v368, 896
          %vm371 = vmand %vm369, %vm370
          %372 = vst.msk [vmem:[#allocation2 + $0x8] sm:$0x7f] %vm371, %v356
          %373 = vst [vmem:[#allocation2 + $0xf] sm:$0xff] %v357
          %374 = vst.msk [vmem:[#allocation2 + $0x17] sm:$0x7f] %vm371, %v358
          %375 = vst [vmem:[#allocation2 + $0x1e] sm:$0xff] %v359
          %376 = vst.msk [vmem:[#allocation2 + $0x26] sm:$0x7f] %vm371, %v360
          %377 = vst [vmem:[#allocation2 + $0x2d] sm:$0xff] %v361
          %378 = vst.msk [vmem:[#allocation2 + $0x35] sm:$0x7f] %vm371, %v362
        $region72: #{tpu_custom_call.1} parent=43 // pred_fallthru
          _
        %p379 = scmp.gt.s32.totalorder %s28, 0
        // Predicated region
        $region73: #{tpu_custom_call.1} parent=43 // pred_check
          %p380 = pneg %p379
        $region74: #{tpu_custom_call.1} parent=43 // pred_check_branch
          %382 = sbr.rel (%p380) target = $region76
        $region75: #{tpu_custom_call.1} parent=43 // pred_region
          %v383 = vld [vmem:[#allocation2] sm:$0xff]
          %v384 = vld [vmem:[#allocation2 + $0x8] sm:$0xff]
          %v385 = vld [vmem:[#allocation2 + $0xf] sm:$0xff]
          %v386 = vld [vmem:[#allocation2 + $0x17] sm:$0xff]
          %v387 = vld [vmem:[#allocation2 + $0x1e] sm:$0xff]
          %v388 = vld [vmem:[#allocation2 + $0x26] sm:$0xff]
          %v389 = vld [vmem:[#allocation2 + $0x2d] sm:$0xff]
          %v390 = vld [vmem:[#allocation2 + $0x35] sm:$0xff]
          %v391 = vmax.f32 %v383, %v355
          %v392 = vmax.f32 %v384, %v356
          %v393 = vmax.f32 %v385, %v357
          %v394 = vmax.f32 %v386, %v358
          %v395 = vmax.f32 %v387, %v359
          %v396 = vmax.f32 %v388, %v360
          %v397 = vmax.f32 %v389, %v361
          %v398 = vmax.f32 %v390, %v362
          %399 = vst [vmem:[#allocation2] sm:$0xff] %v391
          %v400 = vlaneseq
          %vm401 = vcmp.ge.s32.totalorder %v400, 0
          %vm402 = vcmp.lt.s32.totalorder %v400, 896
          %vm403 = vmand %vm401, %vm402
          %404 = vst.msk [vmem:[#allocation2 + $0x8] sm:$0x7f] %vm403, %v392
          %405 = vst [vmem:[#allocation2 + $0xf] sm:$0xff] %v393
          %406 = vst.msk [vmem:[#allocation2 + $0x17] sm:$0x7f] %vm403, %v394
          %407 = vst [vmem:[#allocation2 + $0x1e] sm:$0xff] %v395
          %408 = vst.msk [vmem:[#allocation2 + $0x26] sm:$0x7f] %vm403, %v396
          %409 = vst [vmem:[#allocation2 + $0x2d] sm:$0xff] %v397
          %410 = vst.msk [vmem:[#allocation2 + $0x35] sm:$0x7f] %vm403, %v398
        $region76: #{tpu_custom_call.1} parent=43 // pred_fallthru
          _
        // Predicated region
        $region77: #{tpu_custom_call.1} parent=43 // pred_check
          %p411 = pneg %p363
        $region78: #{tpu_custom_call.1} parent=43 // pred_check_branch
          %413 = sbr.rel (%p411) target = $region80
        $region79: #{tpu_custom_call.1} parent=43 // pred_region
          %v414 = vld [vmem:[#allocation2] sm:$0xff]
          %v415 = vld [vmem:[#allocation2 + $0x8] sm:$0xff]
          %v416 = vld [vmem:[#allocation2 + $0xf] sm:$0xff]
          %v417 = vld [vmem:[#allocation2 + $0x17] sm:$0xff]
          %v418 = vld [vmem:[#allocation2 + $0x1e] sm:$0xff]
          %v419 = vld [vmem:[#allocation2 + $0x26] sm:$0xff]
          %v420 = vld [vmem:[#allocation2 + $0x2d] sm:$0xff]
          %v421 = vld [vmem:[#allocation2 + $0x35] sm:$0xff]
          %426 = vrot.lane.b32.xlu0 %v414, 88
          %v427 = vpop.permute.xlu0 %426
          %428 = vrot.lane.b32.xlu0 %v416, 88
          %v429 = vpop.permute.xlu0 %428
          %430 = vrot.lane.b32.xlu0 %v418, 88
          %v431 = vpop.permute.xlu0 %430
          %432 = vrot.lane.b32.xlu0 %v420, 88
          %v433 = vpop.permute.xlu0 %432
          %v438 = vmax.f32 %v414, %v427
          %v439 = vmax.f32 %v416, %v429
          %v440 = vmax.f32 %v418, %v431
          %v441 = vmax.f32 %v420, %v433
          %442 = vrot.lane.b32.xlu0 %v414, 48
          %v443 = vpop.permute.xlu0 %442
          %444 = vrot.lane.b32.xlu0 %v416, 48
          %v445 = vpop.permute.xlu0 %444
          %446 = vrot.lane.b32.xlu0 %v418, 48
          %v447 = vpop.permute.xlu0 %446
          %448 = vrot.lane.b32.xlu0 %v420, 48
          %v449 = vpop.permute.xlu0 %448
          %v454 = vmax.f32 %v438, %v443
          %v455 = vmax.f32 %v439, %v445
          %v456 = vmax.f32 %v440, %v447
          %v457 = vmax.f32 %v441, %v449
          %458 = vrot.lane.b32.xlu0 %v414, 8
          %v459 = vpop.permute.xlu0 %458
          %460 = vrot.lane.b32.xlu0 %v416, 8
          %v461 = vpop.permute.xlu0 %460
          %462 = vrot.lane.b32.xlu0 %v418, 8
          %v463 = vpop.permute.xlu0 %462
          %464 = vrot.lane.b32.xlu0 %v420, 8
          %v465 = vpop.permute.xlu0 %464
          %v466 = vrot.slane %v459, 1
          %v467 = vrot.slane %v461, 1
          %v468 = vrot.slane %v463, 1
          %v469 = vrot.slane %v465, 1
          %vm470 = vcmask 64512
          %v471 = vsel %vm470, %v459, %v466
          %v472 = vsel %vm470, %v461, %v467
          %v473 = vsel %vm470, %v463, %v468
          %v474 = vsel %vm470, %v465, %v469
          %v479 = vmax.f32 %v454, %v471
          %v480 = vmax.f32 %v455, %v472
          %v481 = vmax.f32 %v456, %v473
          %v482 = vmax.f32 %v457, %v474
          %483 = vrot.lane.b32.xlu0 %v414, 96
          %v484 = vpop.permute.xlu0 %483
          %485 = vrot.lane.b32.xlu0 %v416, 96
          %v486 = vpop.permute.xlu0 %485
          %487 = vrot.lane.b32.xlu0 %v418, 96
          %v488 = vpop.permute.xlu0 %487
          %489 = vrot.lane.b32.xlu0 %v420, 96
          %v490 = vpop.permute.xlu0 %489
          %v491 = vrot.slane %v484, 1
          %v492 = vrot.slane %v486, 1
          %v493 = vrot.slane %v488, 1
          %v494 = vrot.slane %v490, 1
          %v499 = vmax.f32 %v479, %v491
          %v500 = vmax.f32 %v480, %v492
          %v501 = vmax.f32 %v481, %v493
          %v502 = vmax.f32 %v482, %v494
          %503 = vrot.lane.b32.xlu0 %v414, 56
          %v504 = vpop.permute.xlu0 %503
          %505 = vrot.lane.b32.xlu0 %v416, 56
          %v506 = vpop.permute.xlu0 %505
          %507 = vrot.lane.b32.xlu0 %v418, 56
          %v508 = vpop.permute.xlu0 %507
          %509 = vrot.lane.b32.xlu0 %v420, 56
          %v510 = vpop.permute.xlu0 %509
          %v511 = vrot.slane %v504, 1
          %v512 = vrot.slane %v506, 1
          %v513 = vrot.slane %v508, 1
          %v514 = vrot.slane %v510, 1
          %v519 = vmax.f32 %v499, %v511
          %v520 = vmax.f32 %v500, %v512
          %v521 = vmax.f32 %v501, %v513
          %v522 = vmax.f32 %v502, %v514
          %523 = vrot.lane.b32.xlu0 %v414, 16
          %v524 = vpop.permute.xlu0 %523
          %525 = vrot.lane.b32.xlu0 %v416, 16
          %v526 = vpop.permute.xlu0 %525
          %527 = vrot.lane.b32.xlu0 %v418, 16
          %v528 = vpop.permute.xlu0 %527
          %529 = vrot.lane.b32.xlu0 %v420, 16
          %v530 = vpop.permute.xlu0 %529
          %v531 = vrot.slane %v524, 1
          %v532 = vrot.slane %v526, 1
          %v533 = vrot.slane %v528, 1
          %v534 = vrot.slane %v530, 1
          %v535 = vrot.slane %v524, 2
          %v536 = vrot.slane %v526, 2
          %v537 = vrot.slane %v528, 2
          %v538 = vrot.slane %v530, 2
          %vm539 = vcmask 130048
          %v540 = vsel %vm539, %v531, %v535
          %v541 = vsel %vm539, %v532, %v536
          %v542 = vsel %vm539, %v533, %v537
          %v543 = vsel %vm539, %v534, %v538
          %v548 = vmax.f32 %v519, %v540
          %v549 = vmax.f32 %v520, %v541
          %v550 = vmax.f32 %v521, %v542
          %v551 = vmax.f32 %v522, %v543
          %552 = vrot.lane.b32.xlu0 %v414, 104
          %v553 = vpop.permute.xlu0 %552
          %554 = vrot.lane.b32.xlu0 %v416, 104
          %v555 = vpop.permute.xlu0 %554
          %556 = vrot.lane.b32.xlu0 %v418, 104
          %v557 = vpop.permute.xlu0 %556
          %558 = vrot.lane.b32.xlu0 %v420, 104
          %v559 = vpop.permute.xlu0 %558
          %v560 = vrot.slane %v553, 2
          %v561 = vrot.slane %v555, 2
          %v562 = vrot.slane %v557, 2
          %v563 = vrot.slane %v559, 2
          %v568 = vmax.f32 %v548, %v560
          %v569 = vmax.f32 %v549, %v561
          %v570 = vmax.f32 %v550, %v562
          %v571 = vmax.f32 %v551, %v563
          %572 = vrot.lane.b32.xlu0 %v414, 64
          %v573 = vpop.permute.xlu0 %572
          %574 = vrot.lane.b32.xlu0 %v416, 64
          %v575 = vpop.permute.xlu0 %574
          %576 = vrot.lane.b32.xlu0 %v418, 64
          %v577 = vpop.permute.xlu0 %576
          %578 = vrot.lane.b32.xlu0 %v420, 64
          %v579 = vpop.permute.xlu0 %578
          %v580 = vrot.slane %v573, 2
          %v581 = vrot.slane %v575, 2
          %v582 = vrot.slane %v577, 2
          %v583 = vrot.slane %v579, 2
          %v588 = vmax.f32 %v568, %v580
          %v589 = vmax.f32 %v569, %v581
          %v590 = vmax.f32 %v570, %v582
          %v591 = vmax.f32 %v571, %v583
          %592 = vrot.lane.b32.xlu0 %v414, 24
          %v593 = vpop.permute.xlu0 %592
          %594 = vrot.lane.b32.xlu0 %v416, 24
          %v595 = vpop.permute.xlu0 %594
          %596 = vrot.lane.b32.xlu0 %v418, 24
          %v597 = vpop.permute.xlu0 %596
          %598 = vrot.lane.b32.xlu0 %v420, 24
          %v599 = vpop.permute.xlu0 %598
          %v600 = vrot.slane %v593, 2
          %v601 = vrot.slane %v595, 2
          %v602 = vrot.slane %v597, 2
          %v603 = vrot.slane %v599, 2
          %v604 = vrot.slane %v593, 3
          %v605 = vrot.slane %v595, 3
          %v606 = vrot.slane %v597, 3
          %v607 = vrot.slane %v599, 3
          %vm608 = vcmask 195584
          %v609 = vsel %vm608, %v600, %v604
          %v610 = vsel %vm608, %v601, %v605
          %v611 = vsel %vm608, %v602, %v606
          %v612 = vsel %vm608, %v603, %v607
          %v617 = vmax.f32 %v588, %v609
          %v618 = vmax.f32 %v589, %v610
          %v619 = vmax.f32 %v590, %v611
          %v620 = vmax.f32 %v591, %v612
          %621 = vrot.lane.b32.xlu0 %v414, 112
          %v622 = vpop.permute.xlu0 %621
          %623 = vrot.lane.b32.xlu0 %v416, 112
          %v624 = vpop.permute.xlu0 %623
          %625 = vrot.lane.b32.xlu0 %v418, 112
          %v626 = vpop.permute.xlu0 %625
          %627 = vrot.lane.b32.xlu0 %v420, 112
          %v628 = vpop.permute.xlu0 %627
          %v629 = vrot.slane %v622, 3
          %v630 = vrot.slane %v624, 3
          %v631 = vrot.slane %v626, 3
          %v632 = vrot.slane %v628, 3
          %v637 = vmax.f32 %v617, %v629
          %v638 = vmax.f32 %v618, %v630
          %v639 = vmax.f32 %v619, %v631
          %v640 = vmax.f32 %v620, %v632
          %641 = vrot.lane.b32.xlu0 %v414, 72
          %v642 = vpop.permute.xlu0 %641
          %643 = vrot.lane.b32.xlu0 %v416, 72
          %v644 = vpop.permute.xlu0 %643
          %645 = vrot.lane.b32.xlu0 %v418, 72
          %v646 = vpop.permute.xlu0 %645
          %647 = vrot.lane.b32.xlu0 %v420, 72
          %v648 = vpop.permute.xlu0 %647
          %v649 = vrot.slane %v642, 3
          %v650 = vrot.slane %v644, 3
          %v651 = vrot.slane %v646, 3
          %v652 = vrot.slane %v648, 3
          %v657 = vmax.f32 %v637, %v649
          %v658 = vmax.f32 %v638, %v650
          %v659 = vmax.f32 %v639, %v651
          %v660 = vmax.f32 %v640, %v652
          %661 = vrot.lane.b32.xlu0 %v414, 32
          %v662 = vpop.permute.xlu0 %661
          %663 = vrot.lane.b32.xlu0 %v416, 32
          %v664 = vpop.permute.xlu0 %663
          %665 = vrot.lane.b32.xlu0 %v418, 32
          %v666 = vpop.permute.xlu0 %665
          %667 = vrot.lane.b32.xlu0 %v420, 32
          %v668 = vpop.permute.xlu0 %667
          %v669 = vrot.slane %v662, 3
          %v670 = vrot.slane %v664, 3
          %v671 = vrot.slane %v666, 3
          %v672 = vrot.slane %v668, 3
          %v673 = vrot.slane %v662, 4
          %v674 = vrot.slane %v664, 4
          %v675 = vrot.slane %v666, 4
          %v676 = vrot.slane %v668, 4
          %vm677 = vcmask 261120
          %v678 = vsel %vm677, %v669, %v673
          %v679 = vsel %vm677, %v670, %v674
          %v680 = vsel %vm677, %v671, %v675
          %v681 = vsel %vm677, %v672, %v676
          %v686 = vmax.f32 %v657, %v678
          %v687 = vmax.f32 %v658, %v679
          %v688 = vmax.f32 %v659, %v680
          %v689 = vmax.f32 %v660, %v681
          %690 = vrot.lane.b32.xlu0 %v414, 120
          %v691 = vpop.permute.xlu0 %690
          %692 = vrot.lane.b32.xlu0 %v416, 120
          %v693 = vpop.permute.xlu0 %692
          %694 = vrot.lane.b32.xlu0 %v418, 120
          %v695 = vpop.permute.xlu0 %694
          %696 = vrot.lane.b32.xlu0 %v420, 120
          %v697 = vpop.permute.xlu0 %696
          %v698 = vrot.slane %v691, 4
          %v699 = vrot.slane %v693, 4
          %v700 = vrot.slane %v695, 4
          %v701 = vrot.slane %v697, 4
          %v706 = vmax.f32 %v686, %v698
          %v707 = vmax.f32 %v687, %v699
          %v708 = vmax.f32 %v688, %v700
          %v709 = vmax.f32 %v689, %v701
          %710 = vrot.lane.b32.xlu0 %v414, 80
          %v711 = vpop.permute.xlu0 %710
          %712 = vrot.lane.b32.xlu0 %v416, 80
          %v713 = vpop.permute.xlu0 %712
          %714 = vrot.lane.b32.xlu0 %v418, 80
          %v715 = vpop.permute.xlu0 %714
          %716 = vrot.lane.b32.xlu0 %v420, 80
          %v717 = vpop.permute.xlu0 %716
          %v718 = vrot.slane %v711, 4
          %v719 = vrot.slane %v713, 4
          %v720 = vrot.slane %v715, 4
          %v721 = vrot.slane %v717, 4
          %v726 = vmax.f32 %v706, %v718
          %v727 = vmax.f32 %v707, %v719
          %v728 = vmax.f32 %v708, %v720
          %v729 = vmax.f32 %v709, %v721
          %730 = vrot.lane.b32.xlu0 %v414, 40
          %v731 = vpop.permute.xlu0 %730
          %732 = vrot.lane.b32.xlu0 %v416, 40
          %v733 = vpop.permute.xlu0 %732
          %734 = vrot.lane.b32.xlu0 %v418, 40
          %v735 = vpop.permute.xlu0 %734
          %736 = vrot.lane.b32.xlu0 %v420, 40
          %v737 = vpop.permute.xlu0 %736
          %v738 = vrot.slane %v731, 4
          %v739 = vrot.slane %v733, 4
          %v740 = vrot.slane %v735, 4
          %v741 = vrot.slane %v737, 4
          %v746 = vmax.f32 %v726, %v738
          %v747 = vmax.f32 %v727, %v739
          %v748 = vmax.f32 %v728, %v740
          %v749 = vmax.f32 %v729, %v741
          %v750 = vrot.slane %v414, 5
          %v751 = vrot.slane %v416, 5
          %v752 = vrot.slane %v418, 5
          %v753 = vrot.slane %v420, 5
          %v758 = vmax.f32 %v746, %v750
          %v759 = vmax.f32 %v747, %v751
          %v760 = vmax.f32 %v748, %v752
          %v761 = vmax.f32 %v749, %v753
          %v762 = vrot.slane %v427, 5
          %v763 = vrot.slane %v429, 5
          %v764 = vrot.slane %v431, 5
          %v765 = vrot.slane %v433, 5
          %v770 = vmax.f32 %v758, %v762
          %v771 = vmax.f32 %v759, %v763
          %v772 = vmax.f32 %v760, %v764
          %v773 = vmax.f32 %v761, %v765
          %v774 = vrot.slane %v443, 5
          %v775 = vrot.slane %v445, 5
          %v776 = vrot.slane %v447, 5
          %v777 = vrot.slane %v449, 5
          %v782 = vmax.f32 %v770, %v774
          %v783 = vmax.f32 %v771, %v775
          %v784 = vmax.f32 %v772, %v776
          %v785 = vmax.f32 %v773, %v777
          %v786 = vrot.slane %v459, 5
          %v787 = vrot.slane %v461, 5
          %v788 = vrot.slane %v463, 5
          %v789 = vrot.slane %v465, 5
          %v790 = vrot.slane %v459, 6
          %v791 = vrot.slane %v461, 6
          %v792 = vrot.slane %v463, 6
          %v793 = vrot.slane %v465, 6
          %v794 = vsel %vm470, %v786, %v790
          %v795 = vsel %vm470, %v787, %v791
          %v796 = vsel %vm470, %v788, %v792
          %v797 = vsel %vm470, %v789, %v793
          %v802 = vmax.f32 %v782, %v794
          %v803 = vmax.f32 %v783, %v795
          %v804 = vmax.f32 %v784, %v796
          %v805 = vmax.f32 %v785, %v797
          %v806 = vrot.slane %v484, 6
          %v807 = vrot.slane %v486, 6
          %v808 = vrot.slane %v488, 6
          %v809 = vrot.slane %v490, 6
          %v814 = vmax.f32 %v802, %v806
          %v815 = vmax.f32 %v803, %v807
          %v816 = vmax.f32 %v804, %v808
          %v817 = vmax.f32 %v805, %v809
          %v818 = vrot.slane %v504, 6
          %v819 = vrot.slane %v506, 6
          %v820 = vrot.slane %v508, 6
          %v821 = vrot.slane %v510, 6
          %v826 = vmax.f32 %v814, %v818
          %v827 = vmax.f32 %v815, %v819
          %v828 = vmax.f32 %v816, %v820
          %v829 = vmax.f32 %v817, %v821
          %v830 = vrot.slane %v524, 6
          %v831 = vrot.slane %v526, 6
          %v832 = vrot.slane %v528, 6
          %v833 = vrot.slane %v530, 6
          %v834 = vrot.slane %v524, 7
          %v835 = vrot.slane %v526, 7
          %v836 = vrot.slane %v528, 7
          %v837 = vrot.slane %v530, 7
          %v838 = vsel %vm539, %v830, %v834
          %v839 = vsel %vm539, %v831, %v835
          %v840 = vsel %vm539, %v832, %v836
          %v841 = vsel %vm539, %v833, %v837
          %v846 = vmax.f32 %v826, %v838
          %v847 = vmax.f32 %v827, %v839
          %v848 = vmax.f32 %v828, %v840
          %v849 = vmax.f32 %v829, %v841
          %v850 = vrot.slane %v553, 7
          %v851 = vrot.slane %v555, 7
          %v852 = vrot.slane %v557, 7
          %v853 = vrot.slane %v559, 7
          %v858 = vmax.f32 %v846, %v850
          %v859 = vmax.f32 %v847, %v851
          %v860 = vmax.f32 %v848, %v852
          %v861 = vmax.f32 %v849, %v853
          %v862 = vrot.slane %v573, 7
          %v863 = vrot.slane %v575, 7
          %v864 = vrot.slane %v577, 7
          %v865 = vrot.slane %v579, 7
          %v870 = vmax.f32 %v858, %v862
          %v871 = vmax.f32 %v859, %v863
          %v872 = vmax.f32 %v860, %v864
          %v873 = vmax.f32 %v861, %v865
          %878 = vrot.lane.b32.xlu0 %v415, 24
          %v879 = vpop.permute.xlu0 %878
          %880 = vrot.lane.b32.xlu0 %v417, 24
          %v881 = vpop.permute.xlu0 %880
          %882 = vrot.lane.b32.xlu0 %v419, 24
          %v883 = vpop.permute.xlu0 %882
          %884 = vrot.lane.b32.xlu0 %v421, 24
          %v885 = vpop.permute.xlu0 %884
          %v886 = vrot.slane %v593, 7
          %v887 = vrot.slane %v595, 7
          %v888 = vrot.slane %v597, 7
          %v889 = vrot.slane %v599, 7
          %v890 = vsel %vm608, %v886, %v879
          %v891 = vsel %vm608, %v887, %v881
          %v892 = vsel %vm608, %v888, %v883
          %v893 = vsel %vm608, %v889, %v885
          %v898 = vmax.f32 %v870, %v890
          %v899 = vmax.f32 %v871, %v891
          %v900 = vmax.f32 %v872, %v892
          %v901 = vmax.f32 %v873, %v893
          %902 = vrot.lane.b32.xlu0 %v415, 112
          %v903 = vpop.permute.xlu0 %902
          %904 = vrot.lane.b32.xlu0 %v417, 112
          %v905 = vpop.permute.xlu0 %904
          %906 = vrot.lane.b32.xlu0 %v419, 112
          %v907 = vpop.permute.xlu0 %906
          %908 = vrot.lane.b32.xlu0 %v421, 112
          %v909 = vpop.permute.xlu0 %908
          %v914 = vmax.f32 %v898, %v903
          %v915 = vmax.f32 %v899, %v905
          %v916 = vmax.f32 %v900, %v907
          %v917 = vmax.f32 %v901, %v909
          %918 = vrot.lane.b32.xlu0 %v415, 72
          %v919 = vpop.permute.xlu0 %918
          %920 = vrot.lane.b32.xlu0 %v417, 72
          %v921 = vpop.permute.xlu0 %920
          %922 = vrot.lane.b32.xlu0 %v419, 72
          %v923 = vpop.permute.xlu0 %922
          %924 = vrot.lane.b32.xlu0 %v421, 72
          %v925 = vpop.permute.xlu0 %924
          %v930 = vmax.f32 %v914, %v919
          %v931 = vmax.f32 %v915, %v921
          %v932 = vmax.f32 %v916, %v923
          %v933 = vmax.f32 %v917, %v925
          %934 = vrot.lane.b32.xlu0 %v415, 32
          %v935 = vpop.permute.xlu0 %934
          %936 = vrot.lane.b32.xlu0 %v417, 32
          %v937 = vpop.permute.xlu0 %936
          %938 = vrot.lane.b32.xlu0 %v419, 32
          %v939 = vpop.permute.xlu0 %938
          %940 = vrot.lane.b32.xlu0 %v421, 32
          %v941 = vpop.permute.xlu0 %940
          %v942 = vrot.slane %v935, 1
          %v943 = vrot.slane %v937, 1
          %v944 = vrot.slane %v939, 1
          %v945 = vrot.slane %v941, 1
          %v946 = vsel %vm677, %v935, %v942
          %v947 = vsel %vm677, %v937, %v943
          %v948 = vsel %vm677, %v939, %v944
          %v949 = vsel %vm677, %v941, %v945
          %v954 = vmax.f32 %v930, %v946
          %v955 = vmax.f32 %v931, %v947
          %v956 = vmax.f32 %v932, %v948
          %v957 = vmax.f32 %v933, %v949
          %958 = vrot.lane.b32.xlu0 %v415, 120
          %v959 = vpop.permute.xlu0 %958
          %960 = vrot.lane.b32.xlu0 %v417, 120
          %v961 = vpop.permute.xlu0 %960
          %962 = vrot.lane.b32.xlu0 %v419, 120
          %v963 = vpop.permute.xlu0 %962
          %964 = vrot.lane.b32.xlu0 %v421, 120
          %v965 = vpop.permute.xlu0 %964
          %v966 = vrot.slane %v959, 1
          %v967 = vrot.slane %v961, 1
          %v968 = vrot.slane %v963, 1
          %v969 = vrot.slane %v965, 1
          %v974 = vmax.f32 %v954, %v966
          %v975 = vmax.f32 %v955, %v967
          %v976 = vmax.f32 %v956, %v968
          %v977 = vmax.f32 %v957, %v969
          %978 = vrot.lane.b32.xlu0 %v415, 80
          %v979 = vpop.permute.xlu0 %978
          %980 = vrot.lane.b32.xlu0 %v417, 80
          %v981 = vpop.permute.xlu0 %980
          %982 = vrot.lane.b32.xlu0 %v419, 80
          %v983 = vpop.permute.xlu0 %982
          %984 = vrot.lane.b32.xlu0 %v421, 80
          %v985 = vpop.permute.xlu0 %984
          %v986 = vrot.slane %v979, 1
          %v987 = vrot.slane %v981, 1
          %v988 = vrot.slane %v983, 1
          %v989 = vrot.slane %v985, 1
          %v994 = vmax.f32 %v974, %v986
          %v995 = vmax.f32 %v975, %v987
          %v996 = vmax.f32 %v976, %v988
          %v997 = vmax.f32 %v977, %v989
          %998 = vrot.lane.b32.xlu0 %v415, 40
          %v999 = vpop.permute.xlu0 %998
          %1000 = vrot.lane.b32.xlu0 %v417, 40
          %v1001 = vpop.permute.xlu0 %1000
          %1002 = vrot.lane.b32.xlu0 %v419, 40
          %v1003 = vpop.permute.xlu0 %1002
          %1004 = vrot.lane.b32.xlu0 %v421, 40
          %v1005 = vpop.permute.xlu0 %1004
          %v1006 = vrot.slane %v999, 1
          %v1007 = vrot.slane %v1001, 1
          %v1008 = vrot.slane %v1003, 1
          %v1009 = vrot.slane %v1005, 1
          %v1014 = vmax.f32 %v994, %v1006
          %v1015 = vmax.f32 %v995, %v1007
          %v1016 = vmax.f32 %v996, %v1008
          %v1017 = vmax.f32 %v997, %v1009
          %v1018 = vrot.slane %v415, 2
          %v1019 = vrot.slane %v417, 2
          %v1020 = vrot.slane %v419, 2
          %v1021 = vrot.slane %v421, 2
          %v1026 = vmax.f32 %v1014, %v1018
          %v1027 = vmax.f32 %v1015, %v1019
          %v1028 = vmax.f32 %v1016, %v1020
          %v1029 = vmax.f32 %v1017, %v1021
          %1030 = vrot.lane.b32.xlu0 %v415, 88
          %v1031 = vpop.permute.xlu0 %1030
          %1032 = vrot.lane.b32.xlu0 %v417, 88
          %v1033 = vpop.permute.xlu0 %1032
          %1034 = vrot.lane.b32.xlu0 %v419, 88
          %v1035 = vpop.permute.xlu0 %1034
          %1036 = vrot.lane.b32.xlu0 %v421, 88
          %v1037 = vpop.permute.xlu0 %1036
          %v1038 = vrot.slane %v1031, 2
          %v1039 = vrot.slane %v1033, 2
          %v1040 = vrot.slane %v1035, 2
          %v1041 = vrot.slane %v1037, 2
          %v1046 = vmax.f32 %v1026, %v1038
          %v1047 = vmax.f32 %v1027, %v1039
          %v1048 = vmax.f32 %v1028, %v1040
          %v1049 = vmax.f32 %v1029, %v1041
          %1050 = vrot.lane.b32.xlu0 %v415, 48
          %v1051 = vpop.permute.xlu0 %1050
          %1052 = vrot.lane.b32.xlu0 %v417, 48
          %v1053 = vpop.permute.xlu0 %1052
          %1054 = vrot.lane.b32.xlu0 %v419, 48
          %v1055 = vpop.permute.xlu0 %1054
          %1056 = vrot.lane.b32.xlu0 %v421, 48
          %v1057 = vpop.permute.xlu0 %1056
          %v1058 = vrot.slane %v1051, 2
          %v1059 = vrot.slane %v1053, 2
          %v1060 = vrot.slane %v1055, 2
          %v1061 = vrot.slane %v1057, 2
          %v1066 = vmax.f32 %v1046, %v1058
          %v1067 = vmax.f32 %v1047, %v1059
          %v1068 = vmax.f32 %v1048, %v1060
          %v1069 = vmax.f32 %v1049, %v1061
          %1070 = vrot.lane.b32.xlu0 %v415, 8
          %v1071 = vpop.permute.xlu0 %1070
          %1072 = vrot.lane.b32.xlu0 %v417, 8
          %v1073 = vpop.permute.xlu0 %1072
          %1074 = vrot.lane.b32.xlu0 %v419, 8
          %v1075 = vpop.permute.xlu0 %1074
          %1076 = vrot.lane.b32.xlu0 %v421, 8
          %v1077 = vpop.permute.xlu0 %1076
          %v1078 = vrot.slane %v1071, 2
          %v1079 = vrot.slane %v1073, 2
          %v1080 = vrot.slane %v1075, 2
          %v1081 = vrot.slane %v1077, 2
          %v1082 = vrot.slane %v1071, 3
          %v1083 = vrot.slane %v1073, 3
          %v1084 = vrot.slane %v1075, 3
          %v1085 = vrot.slane %v1077, 3
          %v1086 = vsel %vm470, %v1078, %v1082
          %v1087 = vsel %vm470, %v1079, %v1083
          %v1088 = vsel %vm470, %v1080, %v1084
          %v1089 = vsel %vm470, %v1081, %v1085
          %v1094 = vmax.f32 %v1066, %v1086
          %v1095 = vmax.f32 %v1067, %v1087
          %v1096 = vmax.f32 %v1068, %v1088
          %v1097 = vmax.f32 %v1069, %v1089
          %1098 = vrot.lane.b32.xlu0 %v415, 96
          %v1099 = vpop.permute.xlu0 %1098
          %1100 = vrot.lane.b32.xlu0 %v417, 96
          %v1101 = vpop.permute.xlu0 %1100
          %1102 = vrot.lane.b32.xlu0 %v419, 96
          %v1103 = vpop.permute.xlu0 %1102
          %1104 = vrot.lane.b32.xlu0 %v421, 96
          %v1105 = vpop.permute.xlu0 %1104
          %v1106 = vrot.slane %v1099, 3
          %v1107 = vrot.slane %v1101, 3
          %v1108 = vrot.slane %v1103, 3
          %v1109 = vrot.slane %v1105, 3
          %v1114 = vmax.f32 %v1094, %v1106
          %v1115 = vmax.f32 %v1095, %v1107
          %v1116 = vmax.f32 %v1096, %v1108
          %v1117 = vmax.f32 %v1097, %v1109
          %1118 = vrot.lane.b32.xlu0 %v415, 56
          %v1119 = vpop.permute.xlu0 %1118
          %1120 = vrot.lane.b32.xlu0 %v417, 56
          %v1121 = vpop.permute.xlu0 %1120
          %1122 = vrot.lane.b32.xlu0 %v419, 56
          %v1123 = vpop.permute.xlu0 %1122
          %1124 = vrot.lane.b32.xlu0 %v421, 56
          %v1125 = vpop.permute.xlu0 %1124
          %v1126 = vrot.slane %v1119, 3
          %v1127 = vrot.slane %v1121, 3
          %v1128 = vrot.slane %v1123, 3
          %v1129 = vrot.slane %v1125, 3
          %v1134 = vmax.f32 %v1114, %v1126
          %v1135 = vmax.f32 %v1115, %v1127
          %v1136 = vmax.f32 %v1116, %v1128
          %v1137 = vmax.f32 %v1117, %v1129
          %1138 = vrot.lane.b32.xlu0 %v415, 16
          %v1139 = vpop.permute.xlu0 %1138
          %1140 = vrot.lane.b32.xlu0 %v417, 16
          %v1141 = vpop.permute.xlu0 %1140
          %1142 = vrot.lane.b32.xlu0 %v419, 16
          %v1143 = vpop.permute.xlu0 %1142
          %1144 = vrot.lane.b32.xlu0 %v421, 16
          %v1145 = vpop.permute.xlu0 %1144
          %v1146 = vrot.slane %v1139, 3
          %v1147 = vrot.slane %v1141, 3
          %v1148 = vrot.slane %v1143, 3
          %v1149 = vrot.slane %v1145, 3
          %v1150 = vrot.slane %v1139, 4
          %v1151 = vrot.slane %v1141, 4
          %v1152 = vrot.slane %v1143, 4
          %v1153 = vrot.slane %v1145, 4
          %v1154 = vsel %vm539, %v1146, %v1150
          %v1155 = vsel %vm539, %v1147, %v1151
          %v1156 = vsel %vm539, %v1148, %v1152
          %v1157 = vsel %vm539, %v1149, %v1153
          %v1162 = vmax.f32 %v1134, %v1154
          %v1163 = vmax.f32 %v1135, %v1155
          %v1164 = vmax.f32 %v1136, %v1156
          %v1165 = vmax.f32 %v1137, %v1157
          %1166 = vrot.lane.b32.xlu0 %v415, 104
          %v1167 = vpop.permute.xlu0 %1166
          %1168 = vrot.lane.b32.xlu0 %v417, 104
          %v1169 = vpop.permute.xlu0 %1168
          %1170 = vrot.lane.b32.xlu0 %v419, 104
          %v1171 = vpop.permute.xlu0 %1170
          %1172 = vrot.lane.b32.xlu0 %v421, 104
          %v1173 = vpop.permute.xlu0 %1172
          %v1174 = vrot.slane %v1167, 4
          %v1175 = vrot.slane %v1169, 4
          %v1176 = vrot.slane %v1171, 4
          %v1177 = vrot.slane %v1173, 4
          %v1182 = vmax.f32 %v1162, %v1174
          %v1183 = vmax.f32 %v1163, %v1175
          %v1184 = vmax.f32 %v1164, %v1176
          %v1185 = vmax.f32 %v1165, %v1177
          %1186 = vrot.lane.b32.xlu0 %v415, 64
          %v1187 = vpop.permute.xlu0 %1186
          %1188 = vrot.lane.b32.xlu0 %v417, 64
          %v1189 = vpop.permute.xlu0 %1188
          %1190 = vrot.lane.b32.xlu0 %v419, 64
          %v1191 = vpop.permute.xlu0 %1190
          %1192 = vrot.lane.b32.xlu0 %v421, 64
          %v1193 = vpop.permute.xlu0 %1192
          %v1194 = vrot.slane %v1187, 4
          %v1195 = vrot.slane %v1189, 4
          %v1196 = vrot.slane %v1191, 4
          %v1197 = vrot.slane %v1193, 4
          %v1202 = vmax.f32 %v1182, %v1194
          %v1203 = vmax.f32 %v1183, %v1195
          %v1204 = vmax.f32 %v1184, %v1196
          %v1205 = vmax.f32 %v1185, %v1197
          %v1206 = vrot.slane %v879, 4
          %v1207 = vrot.slane %v881, 4
          %v1208 = vrot.slane %v883, 4
          %v1209 = vrot.slane %v885, 4
          %v1210 = vrot.slane %v879, 5
          %v1211 = vrot.slane %v881, 5
          %v1212 = vrot.slane %v883, 5
          %v1213 = vrot.slane %v885, 5
          %v1214 = vsel %vm608, %v1206, %v1210
          %v1215 = vsel %vm608, %v1207, %v1211
          %v1216 = vsel %vm608, %v1208, %v1212
          %v1217 = vsel %vm608, %v1209, %v1213
          %v1222 = vmax.f32 %v1202, %v1214
          %v1223 = vmax.f32 %v1203, %v1215
          %v1224 = vmax.f32 %v1204, %v1216
          %v1225 = vmax.f32 %v1205, %v1217
          %v1226 = vrot.slane %v903, 5
          %v1227 = vrot.slane %v905, 5
          %v1228 = vrot.slane %v907, 5
          %v1229 = vrot.slane %v909, 5
          %v1234 = vmax.f32 %v1222, %v1226
          %v1235 = vmax.f32 %v1223, %v1227
          %v1236 = vmax.f32 %v1224, %v1228
          %v1237 = vmax.f32 %v1225, %v1229
          %v1238 = vrot.slane %v919, 5
          %v1239 = vrot.slane %v921, 5
          %v1240 = vrot.slane %v923, 5
          %v1241 = vrot.slane %v925, 5
          %v1246 = vmax.f32 %v1234, %v1238
          %v1247 = vmax.f32 %v1235, %v1239
          %v1248 = vmax.f32 %v1236, %v1240
          %v1249 = vmax.f32 %v1237, %v1241
          %v1250 = vrot.slane %v935, 5
          %v1251 = vrot.slane %v937, 5
          %v1252 = vrot.slane %v939, 5
          %v1253 = vrot.slane %v941, 5
          %v1254 = vrot.slane %v935, 6
          %v1255 = vrot.slane %v937, 6
          %v1256 = vrot.slane %v939, 6
          %v1257 = vrot.slane %v941, 6
          %v1258 = vsel %vm677, %v1250, %v1254
          %v1259 = vsel %vm677, %v1251, %v1255
          %v1260 = vsel %vm677, %v1252, %v1256
          %v1261 = vsel %vm677, %v1253, %v1257
          %v1266 = vmax.f32 %v1246, %v1258
          %v1267 = vmax.f32 %v1247, %v1259
          %v1268 = vmax.f32 %v1248, %v1260
          %v1269 = vmax.f32 %v1249, %v1261
          %v1270 = vrot.slane %v959, 6
          %v1271 = vrot.slane %v961, 6
          %v1272 = vrot.slane %v963, 6
          %v1273 = vrot.slane %v965, 6
          %v1278 = vmax.f32 %v1266, %v1270
          %v1279 = vmax.f32 %v1267, %v1271
          %v1280 = vmax.f32 %v1268, %v1272
          %v1281 = vmax.f32 %v1269, %v1273
          %v1282 = vrot.slane %v979, 6
          %v1283 = vrot.slane %v981, 6
          %v1284 = vrot.slane %v983, 6
          %v1285 = vrot.slane %v985, 6
          %v1290 = vmax.f32 %v1278, %v1282
          %v1291 = vmax.f32 %v1279, %v1283
          %v1292 = vmax.f32 %v1280, %v1284
          %v1293 = vmax.f32 %v1281, %v1285
          %v1294 = vrot.slane %v999, 6
          %v1295 = vrot.slane %v1001, 6
          %v1296 = vrot.slane %v1003, 6
          %v1297 = vrot.slane %v1005, 6
          %v1302 = vmax.f32 %v1290, %v1294
          %v1303 = vmax.f32 %v1291, %v1295
          %v1304 = vmax.f32 %v1292, %v1296
          %v1305 = vmax.f32 %v1293, %v1297
          %v1310 = vcombine.low %v1302, %v1303
          %v1312 = vunpack.c.l.s4 1966171168
          %v1313 = vunpack.c.0.s8 %v1312
          %v1314 = vlaneseq
          %v1315 = vshrl.u32 %v1314, 7
          %v1316 = vsub.s32 %v1313, %v1315
          %v1317 = vrot.slane %v1310, %v1316
          %v1319 = vunpack.c.l.s4 1966171168
          %v1320 = vunpack.c.0.s8 %v1319
          %v1321 = vlaneseq
          %v1322 = vshrl.u32 %v1321, 7
          %v1323 = vsub.s32 %v1320, %v1322
          %v1324 = vrot.slane %v1317, %v1323
          %v1325 = vcombine.low %v1304, %v1305
          %v1327 = vunpack.c.l.s4 1966171168
          %v1328 = vunpack.c.0.s8 %v1327
          %v1329 = vlaneseq
          %v1330 = vshrl.u32 %v1329, 7
          %v1331 = vsub.s32 %v1328, %v1330
          %v1332 = vrot.slane %v1325, %v1331
          %v1334 = vunpack.c.l.s4 1966171168
          %v1335 = vunpack.c.0.s8 %v1334
          %v1336 = vlaneseq
          %v1337 = vshrl.u32 %v1336, 7
          %v1338 = vsub.s32 %v1335, %v1337
          %v1339 = vrot.slane %v1332, %v1338
          %vm1342 = vcmask 9216
          %v1343 = vsel %vm1342, %v1324, -inf
          %1344 = vmax.xlane.f32.xlu0 %v1343
          %v1345 = vpop.xlane.xlu0 %1344
          %v1346 = vsel %vm1342, %v1339, -inf
          %1347 = vmax.xlane.f32.xlu0 %v1346
          %v1348 = vpop.xlane.xlu0 %1347
          %vm1349 = vcmask 25616
          %v1350 = vsel %vm1349, %v1324, -inf
          %1351 = vmax.xlane.f32.xlu0 %v1350
          %v1352 = vpop.xlane.xlu0 %1351
          %v1353 = vsel %vm1349, %v1339, -inf
          %1354 = vmax.xlane.f32.xlu0 %v1353
          %v1355 = vpop.xlane.xlu0 %1354
          %vm1356 = vcmask 42016
          %v1357 = vsel %vm1356, %v1324, -inf
          %1358 = vmax.xlane.f32.xlu0 %v1357
          %v1359 = vpop.xlane.xlu0 %1358
          %v1360 = vsel %vm1356, %v1339, -inf
          %1361 = vmax.xlane.f32.xlu0 %v1360
          %v1362 = vpop.xlane.xlu0 %1361
          %vm1363 = vcmask 58416
          %v1364 = vsel %vm1363, %v1324, -inf
          %1365 = vmax.xlane.f32.xlu0 %v1364
          %v1366 = vpop.xlane.xlu0 %1365
          %v1367 = vsel %vm1363, %v1339, -inf
          %1368 = vmax.xlane.f32.xlu0 %v1367
          %v1369 = vpop.xlane.xlu0 %1368
          %vm1370 = vcmask 74816
          %v1371 = vsel %vm1370, %v1324, -inf
          %1372 = vmax.xlane.f32.xlu0 %v1371
          %v1373 = vpop.xlane.xlu0 %1372
          %v1374 = vsel %vm1370, %v1339, -inf
          %1375 = vmax.xlane.f32.xlu0 %v1374
          %v1376 = vpop.xlane.xlu0 %1375
          %vm1377 = vcmask 91216
          %v1378 = vsel %vm1377, %v1324, -inf
          %1379 = vmax.xlane.f32.xlu0 %v1378
          %v1380 = vpop.xlane.xlu0 %1379
          %v1381 = vsel %vm1377, %v1339, -inf
          %1382 = vmax.xlane.f32.xlu0 %v1381
          %v1383 = vpop.xlane.xlu0 %1382
          %vm1384 = vcmask 107616
          %v1385 = vsel %vm1384, %v1324, -inf
          %1386 = vmax.xlane.f32.xlu0 %v1385
          %v1387 = vpop.xlane.xlu0 %1386
          %v1388 = vsel %vm1384, %v1339, -inf
          %1389 = vmax.xlane.f32.xlu0 %v1388
          %v1390 = vpop.xlane.xlu0 %1389
          %vm1391 = vcmask 124016
          %v1392 = vsel %vm1391, %v1324, -inf
          %1393 = vmax.xlane.f32.xlu0 %v1392
          %v1394 = vpop.xlane.xlu0 %1393
          %v1395 = vsel %vm1391, %v1339, -inf
          %1396 = vmax.xlane.f32.xlu0 %v1395
          %v1397 = vpop.xlane.xlu0 %1396
          %vm1398 = vcmask 140416
          %v1399 = vsel %vm1398, %v1324, -inf
          %1400 = vmax.xlane.f32.xlu0 %v1399
          %v1401 = vpop.xlane.xlu0 %1400
          %v1402 = vsel %vm1398, %v1339, -inf
          %1403 = vmax.xlane.f32.xlu0 %v1402
          %v1404 = vpop.xlane.xlu0 %1403
          %vm1405 = vcmask 156816
          %v1406 = vsel %vm1405, %v1324, -inf
          %1407 = vmax.xlane.f32.xlu0 %v1406
          %v1408 = vpop.xlane.xlu0 %1407
          %v1409 = vsel %vm1405, %v1339, -inf
          %1410 = vmax.xlane.f32.xlu0 %v1409
          %v1411 = vpop.xlane.xlu0 %1410
          %vm1412 = vcmask 173216
          %v1413 = vsel %vm1412, %v1324, -inf
          %1414 = vmax.xlane.f32.xlu0 %v1413
          %v1415 = vpop.xlane.xlu0 %1414
          %v1416 = vsel %vm1412, %v1339, -inf
          %1417 = vmax.xlane.f32.xlu0 %v1416
          %v1418 = vpop.xlane.xlu0 %1417
          %vm1419 = vcmask 189616
          %v1420 = vsel %vm1419, %v1324, -inf
          %1421 = vmax.xlane.f32.xlu0 %v1420
          %v1422 = vpop.xlane.xlu0 %1421
          %v1423 = vsel %vm1419, %v1339, -inf
          %1424 = vmax.xlane.f32.xlu0 %v1423
          %v1425 = vpop.xlane.xlu0 %1424
          %vm1426 = vcmask 206016
          %v1427 = vsel %vm1426, %v1324, -inf
          %1428 = vmax.xlane.f32.xlu0 %v1427
          %v1429 = vpop.xlane.xlu0 %1428
          %v1430 = vsel %vm1426, %v1339, -inf
          %1431 = vmax.xlane.f32.xlu0 %v1430
          %v1432 = vpop.xlane.xlu0 %1431
          %vm1433 = vcmask 222416
          %v1434 = vsel %vm1433, %v1324, -inf
          %1435 = vmax.xlane.f32.xlu0 %v1434
          %v1436 = vpop.xlane.xlu0 %1435
          %v1437 = vsel %vm1433, %v1339, -inf
          %1438 = vmax.xlane.f32.xlu0 %v1437
          %v1439 = vpop.xlane.xlu0 %1438
          %vm1440 = vcmask 238816
          %v1441 = vsel %vm1440, %v1324, -inf
          %1442 = vmax.xlane.f32.xlu0 %v1441
          %v1443 = vpop.xlane.xlu0 %1442
          %v1444 = vsel %vm1440, %v1339, -inf
          %1445 = vmax.xlane.f32.xlu0 %v1444
          %v1446 = vpop.xlane.xlu0 %1445
          %vm1447 = vcmask 255216
          %v1448 = vsel %vm1447, %v1324, -inf
          %1449 = vmax.xlane.f32.xlu0 %v1448
          %v1450 = vpop.xlane.xlu0 %1449
          %v1451 = vsel %vm1447, %v1339, -inf
          %1452 = vmax.xlane.f32.xlu0 %v1451
          %v1453 = vpop.xlane.xlu0 %1452
          %vm1454 = vcmask 271616
          %v1455 = vsel %vm1454, %v1324, -inf
          %1456 = vmax.xlane.f32.xlu0 %v1455
          %v1457 = vpop.xlane.xlu0 %1456
          %v1458 = vsel %vm1454, %v1339, -inf
          %1459 = vmax.xlane.f32.xlu0 %v1458
          %v1460 = vpop.xlane.xlu0 %1459
          %vm1461 = vcmask 288016
          %v1462 = vsel %vm1461, %v1324, -inf
          %1463 = vmax.xlane.f32.xlu0 %v1462
          %v1464 = vpop.xlane.xlu0 %1463
          %v1465 = vsel %vm1461, %v1339, -inf
          %1466 = vmax.xlane.f32.xlu0 %v1465
          %v1467 = vpop.xlane.xlu0 %1466
          %vm1468 = vcmask 304416
          %v1469 = vsel %vm1468, %v1324, -inf
          %1470 = vmax.xlane.f32.xlu0 %v1469
          %v1471 = vpop.xlane.xlu0 %1470
          %v1472 = vsel %vm1468, %v1339, -inf
          %1473 = vmax.xlane.f32.xlu0 %v1472
          %v1474 = vpop.xlane.xlu0 %1473
          %vm1475 = vcmask 320816
          %v1476 = vsel %vm1475, %v1324, -inf
          %1477 = vmax.xlane.f32.xlu0 %v1476
          %v1478 = vpop.xlane.xlu0 %1477
          %v1479 = vsel %vm1475, %v1339, -inf
          %1480 = vmax.xlane.f32.xlu0 %v1479
          %v1481 = vpop.xlane.xlu0 %1480
          %vm1482 = vcmask 7168
          %v1483 = vsel %vm1482, %v1345, %v1352
          %v1484 = vsel %vm1482, %v1348, %v1355
          %vm1485 = vcmask 15360
          %v1486 = vsel %vm1485, %v1483, %v1359
          %v1487 = vsel %vm1485, %v1484, %v1362
          %vm1488 = vcmask 23552
          %v1489 = vsel %vm1488, %v1486, %v1366
          %v1490 = vsel %vm1488, %v1487, %v1369
          %vm1491 = vcmask 31744
          %v1492 = vsel %vm1491, %v1489, %v1373
          %v1493 = vsel %vm1491, %v1490, %v1376
          %vm1494 = vcmask 39936
          %v1495 = vsel %vm1494, %v1492, %v1380
          %v1496 = vsel %vm1494, %v1493, %v1383
          %vm1497 = vcmask 48128
          %v1498 = vsel %vm1497, %v1495, %v1387
          %v1499 = vsel %vm1497, %v1496, %v1390
          %vm1500 = vcmask 56320
          %v1501 = vsel %vm1500, %v1498, %v1394
          %v1502 = vsel %vm1500, %v1499, %v1397
          %v1503 = vsel %vm470, %v1501, %v1401
          %v1504 = vsel %vm470, %v1502, %v1404
          %vm1505 = vcmask 72704
          %v1506 = vsel %vm1505, %v1503, %v1408
          %v1507 = vsel %vm1505, %v1504, %v1411
          %vm1508 = vcmask 80896
          %v1509 = vsel %vm1508, %v1506, %v1415
          %v1510 = vsel %vm1508, %v1507, %v1418
          %vm1511 = vcmask 89088
          %v1512 = vsel %vm1511, %v1509, %v1422
          %v1513 = vsel %vm1511, %v1510, %v1425
          %vm1514 = vcmask 97280
          %v1515 = vsel %vm1514, %v1512, %v1429
          %v1516 = vsel %vm1514, %v1513, %v1432
          %vm1517 = vcmask 105472
          %v1518 = vsel %vm1517, %v1515, %v1436
          %v1519 = vsel %vm1517, %v1516, %v1439
          %vm1520 = vcmask 113664
          %v1521 = vsel %vm1520, %v1518, %v1443
          %v1522 = vsel %vm1520, %v1519, %v1446
          %vm1523 = vcmask 121856
          %v1524 = vsel %vm1523, %v1521, %v1450
          %v1525 = vsel %vm1523, %v1522, %v1453
          %v1526 = vsel %vm1482, %v1457, %v1464
          %v1527 = vsel %vm1482, %v1460, %v1467
          %v1528 = vsel %vm1485, %v1526, %v1471
          %v1529 = vsel %vm1485, %v1527, %v1474
          %v1530 = vsel %vm1488, %v1528, %v1478
          %v1531 = vsel %vm1488, %v1529, %v1481
          %1534 = vrot.lane.b32.xlu0 %v1530, 16
          %v1535 = vpop.permute.xlu0 %1534
          %1536 = vrot.lane.b32.xlu0 %v1531, 16
          %v1537 = vpop.permute.xlu0 %1536
          %v1540 = vsel %vm539, %v1524, %v1535
          %v1541 = vsel %vm539, %v1525, %v1537
          %1544 = vrot.lane.b32.xlu0 %v1540, 3
          %v1545 = vpop.permute.xlu0 %1544
          %1546 = vrot.lane.b32.xlu0 %v1541, 3
          %v1547 = vpop.permute.xlu0 %1546
          %v1550 = vsel %vm1488, 0.0, %v1545
          %v1551 = vsel %vm1488, 0.0, %v1547
          %vm1552 = vcmask 187392
          %v1553 = vsel %vm1552, %v1550, 0.0
          %v1554 = vsel %vm1552, %v1551, 0.0
          %s1555 = sld [smem:[#allocation6]]
          %v1556 = vstv %s1555
          %v1557 = vmul.f32 %v1556, %v1553
          %v1558 = vmul.f32 %v1556, %v1554
          %1561 = vrot.lane.b32.xlu0 %v1557, 126
          %v1562 = vpop.permute.xlu0 %1561
          %1563 = vrot.lane.b32.xlu0 %v1558, 126
          %v1564 = vpop.permute.xlu0 %1563
          %v1567 = vadd.f32 %v1540, %v1562
          %v1568 = vadd.f32 %v1541, %v1564
          %s1569 = sld [smem:[#allocation6 + $0x1]]
          %v1570 = vstv %s1569
          %v1571 = vmul.f32 %v1570, %v1553
          %v1572 = vmul.f32 %v1570, %v1554
          %1575 = vrot.lane.b32.xlu0 %v1571, 125
          %v1576 = vpop.permute.xlu0 %1575
          %1577 = vrot.lane.b32.xlu0 %v1572, 125
          %v1578 = vpop.permute.xlu0 %1577
          %v1581 = vadd.f32 %v1567, %v1576
          %v1582 = vadd.f32 %v1568, %v1578
          %s1583 = sld [smem:[#allocation6 + $0x2]]
          %v1584 = vstv %s1583
          %v1585 = vmul.f32 %v1584, %v1553
          %v1586 = vmul.f32 %v1584, %v1554
          %1589 = vrot.lane.b32.xlu0 %v1585, 124
          %v1590 = vpop.permute.xlu0 %1589
          %1591 = vrot.lane.b32.xlu0 %v1586, 124
          %v1592 = vpop.permute.xlu0 %1591
          %v1595 = vadd.f32 %v1581, %v1590
          %v1596 = vadd.f32 %v1582, %v1592
          %s1597 = sld [smem:[#allocation6 + $0x3]]
          %v1598 = vstv %s1597
          %v1599 = vmul.f32 %v1598, %v1553
          %v1600 = vmul.f32 %v1598, %v1554
          %v1603 = vrot.slane %v1599, 1
          %v1604 = vrot.slane %v1600, 1
          %1605 = vrot.lane.b32.xlu0 %v1603, 126
          %v1606 = vpop.permute.xlu0 %1605
          %1607 = vrot.lane.b32.xlu0 %v1604, 126
          %v1608 = vpop.permute.xlu0 %1607
          %v1611 = vadd.f32 %v1595, %v1606
          %v1612 = vadd.f32 %v1596, %v1608
          %s1613 = sld [smem:[#allocation6 + $0x4]]
          %v1614 = vstv %s1613
          %v1615 = vmul.f32 %v1614, %v1553
          %v1616 = vmul.f32 %v1614, %v1554
          %v1619 = vrot.slane %v1615, 1
          %v1620 = vrot.slane %v1616, 1
          %1621 = vrot.lane.b32.xlu0 %v1619, 125
          %v1622 = vpop.permute.xlu0 %1621
          %1623 = vrot.lane.b32.xlu0 %v1620, 125
          %v1624 = vpop.permute.xlu0 %1623
          %v1627 = vadd.f32 %v1611, %v1622
          %v1628 = vadd.f32 %v1612, %v1624
          %s1629 = sld [smem:[#allocation6 + $0x5]]
          %v1630 = vstv %s1629
          %v1631 = vmul.f32 %v1630, %v1553
          %v1632 = vmul.f32 %v1630, %v1554
          %v1635 = vrot.slane %v1631, 1
          %v1636 = vrot.slane %v1632, 1
          %1637 = vrot.lane.b32.xlu0 %v1635, 124
          %v1638 = vpop.permute.xlu0 %1637
          %1639 = vrot.lane.b32.xlu0 %v1636, 124
          %v1640 = vpop.permute.xlu0 %1639
          %v1643 = vadd.f32 %v1627, %v1638
          %v1644 = vadd.f32 %v1628, %v1640
          %s1645 = sld [smem:[#allocation7]]
          %v1646 = vstv %s1645
          %v1647 = vmul.f32 %v1643, %v1646
          %v1648 = vmul.f32 %v1644, %v1646
          %s1649 = sld [smem:[#allocation9]]
          %v1650 = vstv %s1649
          %v1651 = vadd.f32 %v1647, %v1650
          %v1652 = vadd.f32 %v1648, %v1650
          %v1653 = vmax.f32 %v1651, 0.0
          %v1654 = vmax.f32 %v1652, 0.0
          %s1655 = sld [smem:[#allocation6 + $0x6]]
          %v1656 = vstv %s1655
          %v1657 = vmul.f32 %v1656, %v1553
          %v1658 = vmul.f32 %v1656, %v1554
          %v1661 = vrot.slane %v1657, 7
          %v1662 = vrot.slane %v1658, 7
          %1663 = vrot.lane.b32.xlu0 %v1661, 126
          %v1664 = vpop.permute.xlu0 %1663
          %1665 = vrot.lane.b32.xlu0 %v1662, 126
          %v1666 = vpop.permute.xlu0 %1665
          %v1669 = vadd.f32 %v1540, %v1664
          %v1670 = vadd.f32 %v1541, %v1666
          %s1671 = sld [smem:[#allocation6 + $0x7]]
          %v1672 = vstv %s1671
          %v1673 = vmul.f32 %v1672, %v1553
          %v1674 = vmul.f32 %v1672, %v1554
          %v1677 = vrot.slane %v1673, 7
          %v1678 = vrot.slane %v1674, 7
          %1679 = vrot.lane.b32.xlu0 %v1677, 125
          %v1680 = vpop.permute.xlu0 %1679
          %1681 = vrot.lane.b32.xlu0 %v1678, 125
          %v1682 = vpop.permute.xlu0 %1681
          %v1685 = vadd.f32 %v1669, %v1680
          %v1686 = vadd.f32 %v1670, %v1682
          %s1687 = sld [smem:[#allocation6 + $0x8]]
          %v1688 = vstv %s1687
          %v1689 = vmul.f32 %v1688, %v1553
          %v1690 = vmul.f32 %v1688, %v1554
          %v1693 = vrot.slane %v1689, 7
          %v1694 = vrot.slane %v1690, 7
          %1695 = vrot.lane.b32.xlu0 %v1693, 124
          %v1696 = vpop.permute.xlu0 %1695
          %1697 = vrot.lane.b32.xlu0 %v1694, 124
          %v1698 = vpop.permute.xlu0 %1697
          %v1701 = vadd.f32 %v1685, %v1696
          %v1702 = vadd.f32 %v1686, %v1698
          %s1703 = sld [smem:[#allocation6 + $0x9]]
          %v1704 = vstv %s1703
          %v1705 = vmul.f32 %v1704, %v1553
          %v1706 = vmul.f32 %v1704, %v1554
          %1709 = vrot.lane.b32.xlu0 %v1705, 126
          %v1710 = vpop.permute.xlu0 %1709
          %1711 = vrot.lane.b32.xlu0 %v1706, 126
          %v1712 = vpop.permute.xlu0 %1711
          %v1715 = vadd.f32 %v1701, %v1710
          %v1716 = vadd.f32 %v1702, %v1712
          %s1717 = sld [smem:[#allocation6 + $0xa]]
          %v1718 = vstv %s1717
          %v1719 = vmul.f32 %v1718, %v1553
          %v1720 = vmul.f32 %v1718, %v1554
          %1723 = vrot.lane.b32.xlu0 %v1719, 125
          %v1724 = vpop.permute.xlu0 %1723
          %1725 = vrot.lane.b32.xlu0 %v1720, 125
          %v1726 = vpop.permute.xlu0 %1725
          %v1729 = vadd.f32 %v1715, %v1724
          %v1730 = vadd.f32 %v1716, %v1726
          %s1731 = sld [smem:[#allocation6 + $0xb]]
          %v1732 = vstv %s1731
          %v1733 = vmul.f32 %v1732, %v1553
          %v1734 = vmul.f32 %v1732, %v1554
          %1737 = vrot.lane.b32.xlu0 %v1733, 124
          %v1738 = vpop.permute.xlu0 %1737
          %1739 = vrot.lane.b32.xlu0 %v1734, 124
          %v1740 = vpop.permute.xlu0 %1739
          %v1743 = vadd.f32 %v1729, %v1738
          %v1744 = vadd.f32 %v1730, %v1740
          %s1745 = sld [smem:[#allocation7 + $0x1]]
          %v1746 = vstv %s1745
          %v1747 = vmul.f32 %v1743, %v1746
          %v1748 = vmul.f32 %v1744, %v1746
          %s1749 = sld [smem:[#allocation9 + $0x1]]
          %v1750 = vstv %s1749
          %v1751 = vadd.f32 %v1747, %v1750
          %v1752 = vadd.f32 %v1748, %v1750
          %v1753 = vmax.f32 %v1751, 0.0
          %v1754 = vmax.f32 %v1752, 0.0
          %s1755 = sld [smem:[#allocation6 + $0x80]]
          %v1756 = vstv %s1755
          %v1757 = vmul.f32 %v1756, %v1553
          %v1758 = vmul.f32 %v1756, %v1554
          %1761 = vrot.lane.b32.xlu0 %v1757, 127
          %v1762 = vpop.permute.xlu0 %1761
          %1763 = vrot.lane.b32.xlu0 %v1758, 127
          %v1764 = vpop.permute.xlu0 %1763
          %v1767 = vadd.f32 %v1540, %v1762
          %v1768 = vadd.f32 %v1541, %v1764
          %s1769 = sld [smem:[#allocation6 + $0x81]]
          %v1770 = vstv %s1769
          %v1771 = vmul.f32 %v1770, %v1553
          %v1772 = vmul.f32 %v1770, %v1554
          %1775 = vrot.lane.b32.xlu0 %v1771, 125
          %v1776 = vpop.permute.xlu0 %1775
          %1777 = vrot.lane.b32.xlu0 %v1772, 125
          %v1778 = vpop.permute.xlu0 %1777
          %v1781 = vadd.f32 %v1767, %v1776
          %v1782 = vadd.f32 %v1768, %v1778
          %s1783 = sld [smem:[#allocation6 + $0x82]]
          %v1784 = vstv %s1783
          %v1785 = vmul.f32 %v1784, %v1553
          %v1786 = vmul.f32 %v1784, %v1554
          %1789 = vrot.lane.b32.xlu0 %v1785, 123
          %v1790 = vpop.permute.xlu0 %1789
          %1791 = vrot.lane.b32.xlu0 %v1786, 123
          %v1792 = vpop.permute.xlu0 %1791
          %v1795 = vadd.f32 %v1781, %v1790
          %v1796 = vadd.f32 %v1782, %v1792
          %s1797 = sld [smem:[#allocation6 + $0x83]]
          %v1798 = vstv %s1797
          %v1799 = vmul.f32 %v1798, %v1553
          %v1800 = vmul.f32 %v1798, %v1554
          %v1803 = vrot.slane %v1799, 1
          %v1804 = vrot.slane %v1800, 1
          %1805 = vrot.lane.b32.xlu0 %v1803, 127
          %v1806 = vpop.permute.xlu0 %1805
          %1807 = vrot.lane.b32.xlu0 %v1804, 127
          %v1808 = vpop.permute.xlu0 %1807
          %v1811 = vadd.f32 %v1795, %v1806
          %v1812 = vadd.f32 %v1796, %v1808
          %s1813 = sld [smem:[#allocation6 + $0x84]]
          %v1814 = vstv %s1813
          %v1815 = vmul.f32 %v1814, %v1553
          %v1816 = vmul.f32 %v1814, %v1554
          %v1819 = vrot.slane %v1815, 1
          %v1820 = vrot.slane %v1816, 1
          %1821 = vrot.lane.b32.xlu0 %v1819, 125
          %v1822 = vpop.permute.xlu0 %1821
          %1823 = vrot.lane.b32.xlu0 %v1820, 125
          %v1824 = vpop.permute.xlu0 %1823
          %v1827 = vadd.f32 %v1811, %v1822
          %v1828 = vadd.f32 %v1812, %v1824
          %s1829 = sld [smem:[#allocation6 + $0x85]]
          %v1830 = vstv %s1829
          %v1831 = vmul.f32 %v1830, %v1553
          %v1832 = vmul.f32 %v1830, %v1554
          %v1835 = vrot.slane %v1831, 1
          %v1836 = vrot.slane %v1832, 1
          %1837 = vrot.lane.b32.xlu0 %v1835, 123
          %v1838 = vpop.permute.xlu0 %1837
          %1839 = vrot.lane.b32.xlu0 %v1836, 123
          %v1840 = vpop.permute.xlu0 %1839
          %v1843 = vadd.f32 %v1827, %v1838
          %v1844 = vadd.f32 %v1828, %v1840
          %s1845 = sld [smem:[#allocation7 + $0x80]]
          %v1846 = vstv %s1845
          %v1847 = vmul.f32 %v1843, %v1846
          %v1848 = vmul.f32 %v1844, %v1846
          %s1849 = sld [smem:[#allocation9 + $0x80]]
          %v1850 = vstv %s1849
          %v1851 = vadd.f32 %v1847, %v1850
          %v1852 = vadd.f32 %v1848, %v1850
          %v1853 = vmax.f32 %v1851, 0.0
          %v1854 = vmax.f32 %v1852, 0.0
          %s1855 = sld [smem:[#allocation6 + $0x86]]
          %v1856 = vstv %s1855
          %v1857 = vmul.f32 %v1856, %v1553
          %v1858 = vmul.f32 %v1856, %v1554
          %v1861 = vrot.slane %v1857, 7
          %v1862 = vrot.slane %v1858, 7
          %1863 = vrot.lane.b32.xlu0 %v1861, 127
          %v1864 = vpop.permute.xlu0 %1863
          %1865 = vrot.lane.b32.xlu0 %v1862, 127
          %v1866 = vpop.permute.xlu0 %1865
          %v1869 = vadd.f32 %v1540, %v1864
          %v1870 = vadd.f32 %v1541, %v1866
          %s1871 = sld [smem:[#allocation6 + $0x87]]
          %v1872 = vstv %s1871
          %v1873 = vmul.f32 %v1872, %v1553
          %v1874 = vmul.f32 %v1872, %v1554
          %v1877 = vrot.slane %v1873, 7
          %v1878 = vrot.slane %v1874, 7
          %1879 = vrot.lane.b32.xlu0 %v1877, 125
          %v1880 = vpop.permute.xlu0 %1879
          %1881 = vrot.lane.b32.xlu0 %v1878, 125
          %v1882 = vpop.permute.xlu0 %1881
          %v1885 = vadd.f32 %v1869, %v1880
          %v1886 = vadd.f32 %v1870, %v1882
          %s1887 = sld [smem:[#allocation6 + $0x88]]
          %v1888 = vstv %s1887
          %v1889 = vmul.f32 %v1888, %v1553
          %v1890 = vmul.f32 %v1888, %v1554
          %v1893 = vrot.slane %v1889, 7
          %v1894 = vrot.slane %v1890, 7
          %1895 = vrot.lane.b32.xlu0 %v1893, 123
          %v1896 = vpop.permute.xlu0 %1895
          %1897 = vrot.lane.b32.xlu0 %v1894, 123
          %v1898 = vpop.permute.xlu0 %1897
          %v1901 = vadd.f32 %v1885, %v1896
          %v1902 = vadd.f32 %v1886, %v1898
          %s1903 = sld [smem:[#allocation6 + $0x89]]
          %v1904 = vstv %s1903
          %v1905 = vmul.f32 %v1904, %v1553
          %v1906 = vmul.f32 %v1904, %v1554
          %1909 = vrot.lane.b32.xlu0 %v1905, 127
          %v1910 = vpop.permute.xlu0 %1909
          %1911 = vrot.lane.b32.xlu0 %v1906, 127
          %v1912 = vpop.permute.xlu0 %1911
          %v1915 = vadd.f32 %v1901, %v1910
          %v1916 = vadd.f32 %v1902, %v1912
          %s1917 = sld [smem:[#allocation6 + $0x8a]]
          %v1918 = vstv %s1917
          %v1919 = vmul.f32 %v1918, %v1553
          %v1920 = vmul.f32 %v1918, %v1554
          %1923 = vrot.lane.b32.xlu0 %v1919, 125
          %v1924 = vpop.permute.xlu0 %1923
          %1925 = vrot.lane.b32.xlu0 %v1920, 125
          %v1926 = vpop.permute.xlu0 %1925
          %v1929 = vadd.f32 %v1915, %v1924
          %v1930 = vadd.f32 %v1916, %v1926
          %s1931 = sld [smem:[#allocation6 + $0x8b]]
          %v1932 = vstv %s1931
          %v1933 = vmul.f32 %v1932, %v1553
          %v1934 = vmul.f32 %v1932, %v1554
          %1937 = vrot.lane.b32.xlu0 %v1933, 123
          %v1938 = vpop.permute.xlu0 %1937
          %1939 = vrot.lane.b32.xlu0 %v1934, 123
          %v1940 = vpop.permute.xlu0 %1939
          %v1943 = vadd.f32 %v1929, %v1938
          %v1944 = vadd.f32 %v1930, %v1940
          %s1945 = sld [smem:[#allocation7 + $0x81]]
          %v1946 = vstv %s1945
          %v1947 = vmul.f32 %v1943, %v1946
          %v1948 = vmul.f32 %v1944, %v1946
          %s1949 = sld [smem:[#allocation9 + $0x81]]
          %v1950 = vstv %s1949
          %v1951 = vadd.f32 %v1947, %v1950
          %v1952 = vadd.f32 %v1948, %v1950
          %v1953 = vmax.f32 %v1951, 0.0
          %v1954 = vmax.f32 %v1952, 0.0
          %s1955 = sld [smem:[#allocation6 + $0x100]]
          %v1956 = vstv %s1955
          %v1957 = vmul.f32 %v1956, %v1553
          %v1958 = vmul.f32 %v1956, %v1554
          %v1959 = vadd.f32 %v1540, %v1957
          %v1960 = vadd.f32 %v1541, %v1958
          %s1961 = sld [smem:[#allocation6 + $0x101]]
          %v1962 = vstv %s1961
          %v1963 = vmul.f32 %v1962, %v1553
          %v1964 = vmul.f32 %v1962, %v1554
          %1967 = vrot.lane.b32.xlu0 %v1963, 125
          %v1968 = vpop.permute.xlu0 %1967
          %1969 = vrot.lane.b32.xlu0 %v1964, 125
          %v1970 = vpop.permute.xlu0 %1969
          %v1973 = vadd.f32 %v1959, %v1968
          %v1974 = vadd.f32 %v1960, %v1970
          %s1975 = sld [smem:[#allocation6 + $0x102]]
          %v1976 = vstv %s1975
          %v1977 = vmul.f32 %v1976, %v1553
          %v1978 = vmul.f32 %v1976, %v1554
          %1981 = vrot.lane.b32.xlu0 %v1977, 122
          %v1982 = vpop.permute.xlu0 %1981
          %1983 = vrot.lane.b32.xlu0 %v1978, 122
          %v1984 = vpop.permute.xlu0 %1983
          %v1987 = vadd.f32 %v1973, %v1982
          %v1988 = vadd.f32 %v1974, %v1984
          %s1989 = sld [smem:[#allocation6 + $0x103]]
          %v1990 = vstv %s1989
          %v1991 = vmul.f32 %v1990, %v1553
          %v1992 = vmul.f32 %v1990, %v1554
          %v1995 = vrot.slane %v1991, 1
          %v1996 = vrot.slane %v1992, 1
          %v1999 = vadd.f32 %v1987, %v1995
          %v2000 = vadd.f32 %v1988, %v1996
          %s2001 = sld [smem:[#allocation6 + $0x104]]
          %v2002 = vstv %s2001
          %v2003 = vmul.f32 %v2002, %v1553
          %v2004 = vmul.f32 %v2002, %v1554
          %v2007 = vrot.slane %v2003, 1
          %v2008 = vrot.slane %v2004, 1
          %2009 = vrot.lane.b32.xlu0 %v2007, 125
          %v2010 = vpop.permute.xlu0 %2009
          %2011 = vrot.lane.b32.xlu0 %v2008, 125
          %v2012 = vpop.permute.xlu0 %2011
          %v2015 = vadd.f32 %v1999, %v2010
          %v2016 = vadd.f32 %v2000, %v2012
          %s2017 = sld [smem:[#allocation6 + $0x105]]
          %v2018 = vstv %s2017
          %v2019 = vmul.f32 %v2018, %v1553
          %v2020 = vmul.f32 %v2018, %v1554
          %v2023 = vrot.slane %v2019, 1
          %v2024 = vrot.slane %v2020, 1
          %2025 = vrot.lane.b32.xlu0 %v2023, 122
          %v2026 = vpop.permute.xlu0 %2025
          %2027 = vrot.lane.b32.xlu0 %v2024, 122
          %v2028 = vpop.permute.xlu0 %2027
          %v2031 = vadd.f32 %v2015, %v2026
          %v2032 = vadd.f32 %v2016, %v2028
          %s2033 = sld [smem:[#allocation7 + $0x100]]
          %v2034 = vstv %s2033
          %v2035 = vmul.f32 %v2031, %v2034
          %v2036 = vmul.f32 %v2032, %v2034
          %s2037 = sld [smem:[#allocation9 + $0x100]]
          %v2038 = vstv %s2037
          %v2039 = vadd.f32 %v2035, %v2038
          %v2040 = vadd.f32 %v2036, %v2038
          %v2041 = vmax.f32 %v2039, 0.0
          %v2042 = vmax.f32 %v2040, 0.0
          %s2043 = sld [smem:[#allocation6 + $0x106]]
          %v2044 = vstv %s2043
          %v2045 = vmul.f32 %v2044, %v1553
          %v2046 = vmul.f32 %v2044, %v1554
          %v2049 = vrot.slane %v2045, 7
          %v2050 = vrot.slane %v2046, 7
          %v2053 = vadd.f32 %v1540, %v2049
          %v2054 = vadd.f32 %v1541, %v2050
          %s2055 = sld [smem:[#allocation6 + $0x107]]
          %v2056 = vstv %s2055
          %v2057 = vmul.f32 %v2056, %v1553
          %v2058 = vmul.f32 %v2056, %v1554
          %v2061 = vrot.slane %v2057, 7
          %v2062 = vrot.slane %v2058, 7
          %2063 = vrot.lane.b32.xlu0 %v2061, 125
          %v2064 = vpop.permute.xlu0 %2063
          %2065 = vrot.lane.b32.xlu0 %v2062, 125
          %v2066 = vpop.permute.xlu0 %2065
          %v2069 = vadd.f32 %v2053, %v2064
          %v2070 = vadd.f32 %v2054, %v2066
          %s2071 = sld [smem:[#allocation6 + $0x108]]
          %v2072 = vstv %s2071
          %v2073 = vmul.f32 %v2072, %v1553
          %v2074 = vmul.f32 %v2072, %v1554
          %v2077 = vrot.slane %v2073, 7
          %v2078 = vrot.slane %v2074, 7
          %2079 = vrot.lane.b32.xlu0 %v2077, 122
          %v2080 = vpop.permute.xlu0 %2079
          %2081 = vrot.lane.b32.xlu0 %v2078, 122
          %v2082 = vpop.permute.xlu0 %2081
          %v2085 = vadd.f32 %v2069, %v2080
          %v2086 = vadd.f32 %v2070, %v2082
          %s2087 = sld [smem:[#allocation6 + $0x109]]
          %v2088 = vstv %s2087
          %v2089 = vmul.f32 %v2088, %v1553
          %v2090 = vmul.f32 %v2088, %v1554
          %v2091 = vadd.f32 %v2085, %v2089
          %v2092 = vadd.f32 %v2086, %v2090
          %s2093 = sld [smem:[#allocation6 + $0x10a]]
          %v2094 = vstv %s2093
          %v2095 = vmul.f32 %v2094, %v1553
          %v2096 = vmul.f32 %v2094, %v1554
          %2099 = vrot.lane.b32.xlu0 %v2095, 125
          %v2100 = vpop.permute.xlu0 %2099
          %2101 = vrot.lane.b32.xlu0 %v2096, 125
          %v2102 = vpop.permute.xlu0 %2101
          %v2105 = vadd.f32 %v2091, %v2100
          %v2106 = vadd.f32 %v2092, %v2102
          %s2107 = sld [smem:[#allocation6 + $0x10b]]
          %v2108 = vstv %s2107
          %v2109 = vmul.f32 %v2108, %v1553
          %v2110 = vmul.f32 %v2108, %v1554
          %2113 = vrot.lane.b32.xlu0 %v2109, 122
          %v2114 = vpop.permute.xlu0 %2113
          %2115 = vrot.lane.b32.xlu0 %v2110, 122
          %v2116 = vpop.permute.xlu0 %2115
          %v2119 = vadd.f32 %v2105, %v2114
          %v2120 = vadd.f32 %v2106, %v2116
          %s2121 = sld [smem:[#allocation7 + $0x101]]
          %v2122 = vstv %s2121
          %v2123 = vmul.f32 %v2119, %v2122
          %v2124 = vmul.f32 %v2120, %v2122
          %s2125 = sld [smem:[#allocation9 + $0x101]]
          %v2126 = vstv %s2125
          %v2127 = vadd.f32 %v2123, %v2126
          %v2128 = vadd.f32 %v2124, %v2126
          %v2129 = vmax.f32 %v2127, 0.0
          %v2130 = vmax.f32 %v2128, 0.0
          %s2131 = sld [smem:[#allocation10]]
          %v2132 = vstv %s2131
          %v2133 = vmul.f32 %v2132, %v1653
          %v2134 = vmul.f32 %v2132, %v1654
          %s2135 = sld [smem:[#allocation10 + $0x1]]
          %v2136 = vstv %s2135
          %v2137 = vmul.f32 %v2136, %v1753
          %v2138 = vmul.f32 %v2136, %v1754
          %v2141 = vrot.slane %v2137, 1
          %v2142 = vrot.slane %v2138, 1
          %v2145 = vadd.f32 %v2133, %v2141
          %v2146 = vadd.f32 %v2134, %v2142
          %s2147 = sld [smem:[#allocation10 + $0x2]]
          %v2148 = vstv %s2147
          %v2149 = vmul.f32 %v2148, %v1853
          %v2150 = vmul.f32 %v2148, %v1854
          %v2151 = vadd.f32 %v2145, %v2149
          %v2152 = vadd.f32 %v2146, %v2150
          %s2153 = sld [smem:[#allocation10 + $0x3]]
          %v2154 = vstv %s2153
          %v2155 = vmul.f32 %v2154, %v1953
          %v2156 = vmul.f32 %v2154, %v1954
          %v2159 = vrot.slane %v2155, 1
          %v2160 = vrot.slane %v2156, 1
          %v2163 = vadd.f32 %v2151, %v2159
          %v2164 = vadd.f32 %v2152, %v2160
          %s2165 = sld [smem:[#allocation10 + $0x4]]
          %v2166 = vstv %s2165
          %v2167 = vmul.f32 %v2166, %v2041
          %v2168 = vmul.f32 %v2166, %v2042
          %v2169 = vadd.f32 %v2163, %v2167
          %v2170 = vadd.f32 %v2164, %v2168
          %s2171 = sld [smem:[#allocation10 + $0x5]]
          %v2172 = vstv %s2171
          %v2173 = vmul.f32 %v2172, %v2129
          %v2174 = vmul.f32 %v2172, %v2130
          %v2177 = vrot.slane %v2173, 1
          %v2178 = vrot.slane %v2174, 1
          %v2181 = vadd.f32 %v2169, %v2177
          %v2182 = vadd.f32 %v2170, %v2178
          %s2183 = sld [smem:[#allocation12]]
          %v2184 = vstv %s2183
          %v2185 = vadd.f32 %v2181, %v2184
          %v2186 = vadd.f32 %v2182, %v2184
          %v2187 = vmax.f32 %v2185, 0.0
          %v2188 = vmax.f32 %v2186, 0.0
          %s2189 = sld [smem:[#allocation10 + $0x80]]
          %v2190 = vstv %s2189
          %v2191 = vmul.f32 %v2190, %v1653
          %v2192 = vmul.f32 %v2190, %v1654
          %s2193 = sld [smem:[#allocation10 + $0x81]]
          %v2194 = vstv %s2193
          %v2195 = vmul.f32 %v2194, %v1753
          %v2196 = vmul.f32 %v2194, %v1754
          %v2199 = vrot.slane %v2195, 1
          %v2200 = vrot.slane %v2196, 1
          %v2203 = vadd.f32 %v2191, %v2199
          %v2204 = vadd.f32 %v2192, %v2200
          %s2205 = sld [smem:[#allocation10 + $0x82]]
          %v2206 = vstv %s2205
          %v2207 = vmul.f32 %v2206, %v1853
          %v2208 = vmul.f32 %v2206, %v1854
          %v2209 = vadd.f32 %v2203, %v2207
          %v2210 = vadd.f32 %v2204, %v2208
          %s2211 = sld [smem:[#allocation10 + $0x83]]
          %v2212 = vstv %s2211
          %v2213 = vmul.f32 %v2212, %v1953
          %v2214 = vmul.f32 %v2212, %v1954
          %v2217 = vrot.slane %v2213, 1
          %v2218 = vrot.slane %v2214, 1
          %v2221 = vadd.f32 %v2209, %v2217
          %v2222 = vadd.f32 %v2210, %v2218
          %s2223 = sld [smem:[#allocation10 + $0x84]]
          %v2224 = vstv %s2223
          %v2225 = vmul.f32 %v2224, %v2041
          %v2226 = vmul.f32 %v2224, %v2042
          %v2227 = vadd.f32 %v2221, %v2225
          %v2228 = vadd.f32 %v2222, %v2226
          %s2229 = sld [smem:[#allocation10 + $0x85]]
          %v2230 = vstv %s2229
          %v2231 = vmul.f32 %v2230, %v2129
          %v2232 = vmul.f32 %v2230, %v2130
          %v2235 = vrot.slane %v2231, 1
          %v2236 = vrot.slane %v2232, 1
          %v2239 = vadd.f32 %v2227, %v2235
          %v2240 = vadd.f32 %v2228, %v2236
          %s2241 = sld [smem:[#allocation12 + $0x1]]
          %v2242 = vstv %s2241
          %v2243 = vadd.f32 %v2239, %v2242
          %v2244 = vadd.f32 %v2240, %v2242
          %v2245 = vmax.f32 %v2243, 0.0
          %v2246 = vmax.f32 %v2244, 0.0
          %s2247 = sld [smem:[#allocation10 + $0x100]]
          %v2248 = vstv %s2247
          %v2249 = vmul.f32 %v2248, %v1653
          %v2250 = vmul.f32 %v2248, %v1654
          %s2251 = sld [smem:[#allocation10 + $0x101]]
          %v2252 = vstv %s2251
          %v2253 = vmul.f32 %v2252, %v1753
          %v2254 = vmul.f32 %v2252, %v1754
          %v2257 = vrot.slane %v2253, 1
          %v2258 = vrot.slane %v2254, 1
          %v2261 = vadd.f32 %v2249, %v2257
          %v2262 = vadd.f32 %v2250, %v2258
          %s2263 = sld [smem:[#allocation10 + $0x102]]
          %v2264 = vstv %s2263
          %v2265 = vmul.f32 %v2264, %v1853
          %v2266 = vmul.f32 %v2264, %v1854
          %v2267 = vadd.f32 %v2261, %v2265
          %v2268 = vadd.f32 %v2262, %v2266
          %s2269 = sld [smem:[#allocation10 + $0x103]]
          %v2270 = vstv %s2269
          %v2271 = vmul.f32 %v2270, %v1953
          %v2272 = vmul.f32 %v2270, %v1954
          %v2275 = vrot.slane %v2271, 1
          %v2276 = vrot.slane %v2272, 1
          %v2279 = vadd.f32 %v2267, %v2275
          %v2280 = vadd.f32 %v2268, %v2276
          %s2281 = sld [smem:[#allocation10 + $0x104]]
          %v2282 = vstv %s2281
          %v2283 = vmul.f32 %v2282, %v2041
          %v2284 = vmul.f32 %v2282, %v2042
          %v2285 = vadd.f32 %v2279, %v2283
          %v2286 = vadd.f32 %v2280, %v2284
          %s2287 = sld [smem:[#allocation10 + $0x105]]
          %v2288 = vstv %s2287
          %v2289 = vmul.f32 %v2288, %v2129
          %v2290 = vmul.f32 %v2288, %v2130
          %v2293 = vrot.slane %v2289, 1
          %v2294 = vrot.slane %v2290, 1
          %v2297 = vadd.f32 %v2285, %v2293
          %v2298 = vadd.f32 %v2286, %v2294
          %s2299 = sld [smem:[#allocation12 + $0x2]]
          %v2300 = vstv %s2299
          %v2301 = vadd.f32 %v2297, %v2300
          %v2302 = vadd.f32 %v2298, %v2300
          %v2303 = vmax.f32 %v2301, 0.0
          %v2304 = vmax.f32 %v2302, 0.0
          %v2307 = vrot.slane %v2245, 7
          %v2308 = vrot.slane %v2246, 7
          %v2313 = vrot.slane %v2303, 6
          %v2314 = vrot.slane %v2304, 6
          %vm2317 = vcmask 1040384
          %v2318 = vsel %vm2317, %v2187, %v2307
          %v2319 = vsel %vm2317, %v2188, %v2308
          %vm2320 = vcmask 1041408
          %v2321 = vsel %vm2320, %v2318, %v2313
          %v2322 = vsel %vm2320, %v2319, %v2314
          %vm2323 = vcmask 157696
          %2324 = vst.msk [vmem:[%s353] sm:$0x7] %vm2323, %v2321
          %2325 = vst.msk [vmem:[%s353 + $0x4] sm:$0x7] %vm2323, %v2322
        $region80: #{tpu_custom_call.1} parent=43 // pred_fallthru
          _
        %s2326 = smul.u32 2, %s27
        %p2327 = scmp.lt.s32.totalorder %s2326, 3
        %s2328 = scalar_select %p2327, %s2326, 3
        %s2329 = smul.addr %s2328, 4
        %s2330 = scalar_lea.vmem %s6, %s2329
        // Predicated region
        $region81: #{tpu_custom_call.1} parent=43 // pred_check
          %p2331 = pneg %p186
        $region82: #{tpu_custom_call.1} parent=43 // pred_check_branch
          %2333 = sbr.rel (%p2331) target = $region84
        $region83: #{tpu_custom_call.1} parent=43 // pred_region
          %s2334 = smul.u32 2, %s27
        $region84: #{tpu_custom_call.1} parent=43 // pred_fallthru
          _
      $region44: #{tpu_custom_call.1} parent=5 // pred_fallthru
        _
      %p2335 = scmp.le.s32.totalorder 2, %s18
      // Predicated region
      $region85: #{tpu_custom_call.1} parent=5 // pred_check
        %p2336 = pneg %p2335
      $region86: #{tpu_custom_call.1} parent=5 // pred_check_branch
        %2338 = sbr.rel (%p2336) target = $region88
      $region87: #{tpu_custom_call.1} parent=5 // pred_region
        %s2339 = ssub.s32 %s18, 2
        // Predicated region
        $region89: #{tpu_custom_call.1} parent=87 // pred_check
          %p2340 = pneg %p192
        $region90: #{tpu_custom_call.1} parent=87 // pred_check_branch
          %2342 = sbr.rel (%p2340) target = $region92
        $region91: #{tpu_custom_call.1} parent=87 // pred_region
          %s2343 = smul.u32 2, %s29
          %p2344 = scmp.lt.s32.totalorder %s2343, 3
          %s2345 = scalar_select %p2344, %s2343, 3
          %s2346 = smul.addr %s2345, 4
          %s2347 = scalar_lea.vmem %s6, %s2346
        $region92: #{tpu_custom_call.1} parent=87 // pred_fallthru
          _
      $region88: #{tpu_custom_call.1} parent=5 // pred_fallthru
        _
    $region6: #{tpu_custom_call.1} parent=1 // loop_footer
      %s22 = sadd.s32 1, %s18
    $region7: #{tpu_custom_call.1} parent=1 // loop_footer_branch
      %17 = sbr.rel target = $region3
    $region8: #{tpu_custom_call.1} parent=1 // loop_exit
      _
    %2348 = vsyncpa [#allocation4], 1
    %s2349 = scalar_lea.sflag [#allocation4], 1
    %2350 = vsyncpa %s2349, 1
    %2351 = vsyncpa [#allocation5], 1
    %s2352 = scalar_lea.sflag [#allocation5], 1
    %2353 = vsyncpa %s2352, 1
    %2354 = vsyncpa [#allocation8], 1
    %2355 = vsyncpa [#allocation11], 1

</llo_original>
